<compile_context>
chip_gen: v6e
topology: v6e:2x2x1
jax: 0.10.0
libtpu: 0.0.40
codegen_flags: <defaults>
</compile_context>

<pallas_src>
import jax
import jax.numpy as jnp
from jax.experimental import pallas as pl
from jax.experimental.pallas import tpu as pltpu

LANE = 128
SUB = 16          # sublane multiple covering both f32 (8) and bf16 (16) blocks


# ----------------------------- glue helpers ------------------------------- #

def _round_up(x, m):
    return (x + m - 1) // m * m


def _cdiv(a, b):
    return -(-a // b)


def _pad_to(a, shape):
    return jnp.pad(a, [(0, s - d) for d, s in zip(a.shape, shape)])


def fold_bn(gamma, beta, mean, var, eps=1e-5):
    scale = gamma / jnp.sqrt(var + eps)
    return scale, beta - mean * scale


def _im2col_tap_padded(x_nlc, stride, cin_p):
    """k=3, pad=1 im2col with each tap padded to cin_p lanes.
    Returns (N, L_out, 3*cin_p); tap j occupies columns [j*cin_p, j*cin_p+C)."""
    N, L, C = x_nlc.shape
    xp = jnp.pad(x_nlc, ((0, 0), (1, 1), (0, 0)))
    L_out = (L - 1) // stride + 1
    starts = jnp.arange(L_out) * stride
    taps = jnp.stack([xp[:, starts + j, :] for j in range(3)], axis=2)  # (N,Lo,3,C)
    taps = jnp.pad(taps, ((0, 0), (0, 0), (0, 0), (0, cin_p - C)))
    return taps.reshape(N, L_out, 3 * cin_p)


# ----------------------------- fused Pallas kernel ------------------------- #

def _make_kernel(*, L1, L1p, cin_p, cp, stride_one, has_ds, compute_dtype):
    cdt = jnp.dtype(compute_dtype)
    edge_mask = (L1p == L1)     # no spare zero row after L1 -> mask rolled edges
    prec = (jax.lax.Precision.HIGHEST
            if cdt == jnp.dtype(jnp.float32) else None)

    def kernel(xin_ref, w1_ref, b1_ref, w2_ref, b2_ref, *rest):
        if has_ds:
            wd_ref, bd_ref, o_ref = rest
        else:
            (o_ref,) = rest

        nb = xin_ref.shape[0]
        m = nb * L1p
        row = jax.lax.broadcasted_iota(jnp.int32, (L1p, 1), 0)
        xin = xin_ref[...]                                    # (nb, L1p, Kin)

        # ---- conv1 (+ folded BN1) + relu ----
        if stride_one:
            # taps built in-kernel from x (XLU rolls), no im2col stream
            x32 = xin.astype(jnp.float32)
            xp = pltpu.roll(x32, shift=1, axis=1)             # prev tap
            xn = pltpu.roll(x32, shift=L1p - 1, axis=1)       # next tap (shift>=0)
            if edge_mask:
                xp = jnp.where(row == 0, 0.0, xp)
                xn = jnp.where(row == L1 - 1, 0.0, xn)
            x_cat = jnp.concatenate(
                [xp.astype(cdt), xin, xn.astype(cdt)], axis=-1
            ).reshape(m, 3 * cin_p)
        else:
            x_cat = xin.reshape(m, 3 * cin_p)
        h = jnp.dot(x_cat, w1_ref[...], preferred_element_type=jnp.float32,
                    precision=prec)
        h = jnp.maximum(h + b1_ref[...], 0.0).reshape(nb, L1p, cp)
        if not edge_mask:
            # zero relu(bias) garbage in pad rows so rolled halos are true zeros
            h = jnp.where(row < L1, h, 0.0)

        # ---- conv2 (+ folded BN2): taps via rolls of h, one K=3*Cp matmul ----
        h_prev = pltpu.roll(h, shift=1, axis=1)
        h_next = pltpu.roll(h, shift=L1p - 1, axis=1)
        if edge_mask:
            h_prev = jnp.where(row == 0, 0.0, h_prev)
            h_next = jnp.where(row == L1 - 1, 0.0, h_next)
        h_cat = jnp.concatenate(
            [h_prev.astype(cdt), h.astype(cdt), h_next.astype(cdt)], axis=-1
        ).reshape(m, 3 * cp)
        y = jnp.dot(h_cat, w2_ref[...], preferred_element_type=jnp.float32,
                    precision=prec)
        y = y + b2_ref[...]

        # ---- residual: centre tap of the streamed input (no extra stream) ----
        res = (xin if stride_one else xin[..., cin_p:2 * cin_p]).reshape(m, cin_p)
        if has_ds:
            idt = jnp.dot(res, wd_ref[...], preferred_element_type=jnp.float32,
                          precision=prec) + bd_ref[...]
        else:
            idt = res.astype(jnp.float32)

        out = jnp.maximum(y + idt, 0.0)
        o_ref[...] = out.reshape(nb, L1p, cp).astype(o_ref.dtype)

    return kernel


# ----------------------------- BasicBlock forward --------------------------- #

def basic_block_forward(x_ncl, params, stride, *, compute_dtype=jnp.bfloat16,
                        out_dtype=jnp.float32, nb=None):
    """x_ncl: (N, C_in, L) float32.  Returns (N, C_out, L_out) float32."""
    N, C_in, L = x_ncl.shape
    C_out = params["w1"].shape[0]
    L1 = (L - 1) // stride + 1                      # conv1 output length (k=3, pad=1)
    cdt = jnp.dtype(compute_dtype)
    stride_one = (stride == 1)
    has_ds = (stride != 1) or (C_in != C_out)

    Cp = _round_up(C_out, LANE)
    Cin_p = _round_up(C_in, LANE)
    L1p = _round_up(L1, SUB)
    Kin = Cin_p if stride_one else 3 * Cin_p

    x_nlc = jnp.transpose(x_ncl, (0, 2, 1))          # (N, L, C_in)

    # fold BN scales into the weights (inference BN); kernel does bias+relu only
    s1, b1 = fold_bn(params["g1"], params["be1"], params["m1"], params["v1"])
    w1t = jnp.transpose(params["w1"], (2, 1, 0)) * s1[None, None, :]   # (3,Cin,Cout)
    w1cat = _pad_to(w1t, (3, Cin_p, Cp)).reshape(3 * Cin_p, Cp)
    s2, b2 = fold_bn(params["g2"], params["be2"], params["m2"], params["v2"])
    w2t = jnp.transpose(params["w2"], (2, 1, 0)) * s2[None, None, :]   # (3,Cout,Cout)
    w2cat = _pad_to(w2t, (3, Cp, Cp)).reshape(3 * Cp, Cp)
    if has_ds:
        sd, bd = fold_bn(params["gd"], params["bed"], params["md"], params["vd"])
        wdm = jnp.transpose(params["wd"], (2, 1, 0)).reshape(C_in, C_out) * sd[None, :]

    # streamed input: plain x for stride 1, per-tap lane-aligned im2col otherwise
    xin = x_nlc if stride_one else _im2col_tap_padded(x_nlc, stride, Cin_p)

    # ---- block sizing / VMEM budget (generation aware, conservative fallback) --
    try:
        vmem_cap = int(pltpu.get_tpu_info().vmem_capacity_bytes)
    except Exception:
        vmem_cap = 64 << 20                          # v7x-safe fallback
    budget = int(0.70 * vmem_cap)

    bpe = cdt.itemsize
    out_bpe = jnp.dtype(out_dtype).itemsize
    weight_bytes = (3 * Cin_p * Cp + 3 * Cp * Cp
                    + (Cin_p * Cp if has_ds else 0)) * bpe + 3 * Cp * 4

    def _step_bytes(nb_):
        m = nb_ * L1p
        stream = 2 * m * Kin * bpe                   # double-buffered input block
        outblk = 2 * m * Cp * out_bpe                # double-buffered output block
        temps = 6 * m * Cp * 4 + m * 3 * Cp * bpe    # h / rolls / y / idt + concat
        if stride_one:
            temps += m * 3 * Cin_p * bpe + 2 * m * Cin_p * 4
        return weight_bytes + stream + outblk + temps

    if nb is None:
        nb = max(1, min(N, max(1, 1024 // L1p)))     # target MXU-sized M = nb*L1p
        while nb > 1 and _step_bytes(nb) > budget:
            nb -= 1
    ng = _cdiv(N, nb)
    Npad = ng * nb

    xin_p = _pad_to(xin, (Npad, L1p, Kin)).astype(cdt)
    b1_p = _pad_to(b1[None, :], (1, Cp)).astype(jnp.float32)
    b2_p = _pad_to(b2[None, :], (1, Cp)).astype(jnp.float32)

    inputs = [xin_p, w1cat.astype(cdt), b1_p, w2cat.astype(cdt), b2_p]
    in_specs = [
        pl.BlockSpec((nb, L1p, Kin), lambda g: (g, 0, 0)),       # streamed block
        pl.BlockSpec((3 * Cin_p, Cp), lambda g: (0, 0)),         # resident weights
        pl.BlockSpec((1, Cp), lambda g: (0, 0)),
        pl.BlockSpec((3 * Cp, Cp), lambda g: (0, 0)),
        pl.BlockSpec((1, Cp), lambda g: (0, 0)),
    ]
    if has_ds:
        inputs += [_pad_to(wdm, (Cin_p, Cp)).astype(cdt),
                   _pad_to(bd[None, :], (1, Cp)).astype(jnp.float32)]
        in_specs += [pl.BlockSpec((Cin_p, Cp), lambda g: (0, 0)),
                     pl.BlockSpec((1, Cp), lambda g: (0, 0))]

    kern = _make_kernel(L1=L1, L1p=L1p, cin_p=Cin_p, cp=Cp,
                        stride_one=stride_one, has_ds=has_ds, compute_dtype=cdt)

    out = pl.pallas_call(
        kern,
        out_shape=jax.ShapeDtypeStruct((Npad, L1p, Cp), out_dtype),
        grid=(ng,),
        in_specs=in_specs,
        out_specs=pl.BlockSpec((nb, L1p, Cp), lambda g: (g, 0, 0)),
        compiler_params=pltpu.CompilerParams(
            dimension_semantics=("parallel",),
            vmem_limit_bytes=int(budget)),
    )(*inputs)

    out = out[:N, :L1, :C_out]                        # strip padding
    return jnp.transpose(out, (0, 2, 1)).astype(jnp.float32)


# ----------------------------- reference (plain JAX) ------------------------ #

def _conv1d_ref(x_ncl, w_oik, stride, pad):
    return jax.lax.conv_general_dilated(
        x_ncl, w_oik, (stride,), [(pad, pad)],
        dimension_numbers=("NCH", "OIH", "NCH"),
        precision=jax.lax.Precision.HIGHEST)


def basic_block_ref(x_ncl, params, stride):
    C_in = x_ncl.shape[1]
    C_out = params["w1"].shape[0]

    def bn(y, g, be, m, v):
        s, b = fold_bn(g, be, m, v)
        return y * s[None, :, None] + b[None, :, None]

    h = _conv1d_ref(x_ncl, params["w1"], stride, 1)
    h = jnp.maximum(bn(h, params["g1"], params["be1"], params["m1"], params["v1"]), 0.0)
    r = _conv1d_ref(h, params["w2"], 1, 1)
    r = bn(r, params["g2"], params["be2"], params["m2"], params["v2"])
    if stride != 1 or C_in != C_out:
        idt = _conv1d_ref(x_ncl, params["wd"], stride, 0)
        idt = bn(idt, params["gd"], params["bed"], params["md"], params["vd"])
    else:
        idt = x_ncl
    return jnp.maximum(r + idt, 0.0)


# ----------------------------- main ----------------------------------------- #

def _make_params(key, C_in, C_out, has_ds):
    ks = jax.random.split(key, 16)
    p = {
        "w1": 0.1 * jax.random.normal(ks[0], (C_out, C_in, 3), jnp.float32),
        "g1": 1.0 + 0.1 * jax.random.normal(ks[1], (C_out,), jnp.float32),
        "be1": 0.1 * jax.random.normal(ks[2], (C_out,), jnp.float32),
        "m1": 0.05 * jax.random.normal(ks[3], (C_out,), jnp.float32),
        "v1": 0.5 + jnp.abs(jax.random.normal(ks[4], (C_out,), jnp.float32)),
        "w2": 0.1 * jax.random.normal(ks[5], (C_out, C_out, 3), jnp.float32),
        "g2": 1.0 + 0.1 * jax.random.normal(ks[6], (C_out,), jnp.float32),
        "be2": 0.1 * jax.random.normal(ks[7], (C_out,), jnp.float32),
        "m2": 0.05 * jax.random.normal(ks[8], (C_out,), jnp.float32),
        "v2": 0.5 + jnp.abs(jax.random.normal(ks[9], (C_out,), jnp.float32)),
    }
    if has_ds:
        p.update({
            "wd": 0.1 * jax.random.normal(ks[10], (C_out, C_in, 1), jnp.float32),
            "gd": 1.0 + 0.1 * jax.random.normal(ks[11], (C_out,), jnp.float32),
            "bed": 0.1 * jax.random.normal(ks[12], (C_out,), jnp.float32),
            "md": 0.05 * jax.random.normal(ks[13], (C_out,), jnp.float32),
            "vd": 0.5 + jnp.abs(jax.random.normal(ks[14], (C_out,), jnp.float32)),
        })
    return p


if __name__ == "__main__":
    key = jax.random.PRNGKey(0)
    k1, k2, kx1, kx2 = jax.random.split(key, 4)

    # --- test 1: stride=2, C_in != C_out (downsample, im2col path), f32 ---
    N, C_in, L, C_out, stride = 2, 4, 16, 8, 2
    params = _make_params(k1, C_in, C_out, True)
    x = jax.random.normal(kx1, (N, C_in, L), jnp.float32)
    out = jax.block_until_ready(
        basic_block_forward(x, params, stride, compute_dtype=jnp.float32))
    ref = jax.block_until_ready(basic_block_ref(x, params, stride))
    assert out.shape == (N, C_out, L // stride), out.shape
    assert jnp.allclose(out, ref, atol=1e-3, rtol=1e-3), \
        float(jnp.max(jnp.abs(out - ref)))

    # --- test 2: stride=1, C_in == C_out (identity add, in-kernel conv1 taps) ---
    params2 = _make_params(k2, C_out, C_out, False)
    x2 = jax.random.normal(kx2, (N, C_out, L), jnp.float32)
    out2 = jax.block_until_ready(
        basic_block_forward(x2, params2, 1, compute_dtype=jnp.float32))
    ref2 = jax.block_until_ready(basic_block_ref(x2, params2, 1))
    assert out2.shape == (N, C_out, L), out2.shape
    assert jnp.allclose(out2, ref2, atol=1e-3, rtol=1e-3), \
        float(jnp.max(jnp.abs(out2 - ref2)))

    # --- test 3: stride=1 with channel-expanding downsample, f32 ---
    out3 = jax.block_until_ready(
        basic_block_forward(x, params, 1, compute_dtype=jnp.float32))
    ref3 = jax.block_until_ready(basic_block_ref(x, params, 1))
    assert out3.shape == (N, C_out, L), out3.shape
    assert jnp.allclose(out3, ref3, atol=1e-3, rtol=1e-3), \
        float(jnp.max(jnp.abs(out3 - ref3)))

    # --- test 4: default bf16 matmul inputs (v6e/v7x MXU), f32 accumulation ---
    out4 = jax.block_until_ready(basic_block_forward(x, params, stride))
    assert jnp.allclose(out4, ref, atol=5e-2, rtol=5e-2), \
        float(jnp.max(jnp.abs(out4 - ref)))

    print("KERNEL_OK")
</pallas_src>

<mosaic_0001>
module attributes {stable_mosaic.version = 11 : i64} {
  func.func @kernel(%arg0: i32, %arg1: memref<2x16x384xf32, #tpu.memory_space<vmem>>, %arg2: memref<384x128xf32, #tpu.memory_space<vmem>>, %arg3: memref<1x128xf32, #tpu.memory_space<vmem>>, %arg4: memref<384x128xf32, #tpu.memory_space<vmem>>, %arg5: memref<1x128xf32, #tpu.memory_space<vmem>>, %arg6: memref<128x128xf32, #tpu.memory_space<vmem>>, %arg7: memref<1x128xf32, #tpu.memory_space<vmem>>, %arg8: memref<2x16x128xf32, #tpu.memory_space<vmem>>) attributes {dimension_semantics = [#tpu.dimension_semantics<parallel>], iteration_bounds = array<i64: 1>, scalar_prefetch = 0 : i64, scratch_operands = 0 : i64, tpu.core_type = #tpu.core_type<tc>, window_params = [{transform_indices = @transform_0, window_bounds = array<i64: 2, 16, 384>}, {pipeline_mode = #tpu.pipeline_mode<synchronous>, transform_indices = @transform_1, window_bounds = array<i64: 384, 128>}, {pipeline_mode = #tpu.pipeline_mode<synchronous>, transform_indices = @transform_2, window_bounds = array<i64: 1, 128>}, {pipeline_mode = #tpu.pipeline_mode<synchronous>, transform_indices = @transform_3, window_bounds = array<i64: 384, 128>}, {pipeline_mode = #tpu.pipeline_mode<synchronous>, transform_indices = @transform_4, window_bounds = array<i64: 1, 128>}, {pipeline_mode = #tpu.pipeline_mode<synchronous>, transform_indices = @transform_5, window_bounds = array<i64: 128, 128>}, {pipeline_mode = #tpu.pipeline_mode<synchronous>, transform_indices = @transform_6, window_bounds = array<i64: 1, 128>}, {transform_indices = @transform_7, window_bounds = array<i64: 2, 16, 128>}]} {
    %0 = tpu.iota {dimensions = array<i32: 0>} : vector<16x1xi32>
    %c0 = arith.constant 0 : index
    %c0_0 = arith.constant 0 : index
    %c0_1 = arith.constant 0 : index
    %1 = vector.load %arg1[%c0, %c0_0, %c0_1] : memref<2x16x384xf32, #tpu.memory_space<vmem>>, vector<2x16x384xf32>
    %2 = vector.shape_cast %1 : vector<2x16x384xf32> to vector<32x384xf32>
    %c0_2 = arith.constant 0 : index
    %c0_3 = arith.constant 0 : index
    %3 = vector.load %arg2[%c0_2, %c0_3] : memref<384x128xf32, #tpu.memory_space<vmem>>, vector<384x128xf32>
    %cst = arith.constant dense<0.000000e+00> : vector<32x128xf32>
    %4 = tpu.matmul %2, %3, %cst {dimension_numbers = #tpu.dot_dimension_numbers<[1], [0], [0], [1], [0, 0, 1, 1], [], []>, precision = #tpu.contract_precision<fp32>} : vector<32x384xf32>, vector<384x128xf32>, vector<32x128xf32> -> vector<32x128xf32>
    %c0_4 = arith.constant 0 : index
    %c0_5 = arith.constant 0 : index
    %5 = vector.load %arg3[%c0_4, %c0_5] : memref<1x128xf32, #tpu.memory_space<vmem>>, vector<1x128xf32>
    %6 = vector.broadcast %5 : vector<1x128xf32> to vector<32x128xf32>
    %7 = arith.addf %4, %6 : vector<32x128xf32>
    %cst_6 = arith.constant 0.000000e+00 : f32
    %8 = vector.broadcast %cst_6 : f32 to vector<32x128xf32>
    %9 = arith.maximumf %7, %8 : vector<32x128xf32>
    %10 = vector.shape_cast %9 : vector<32x128xf32> to vector<2x16x128xf32>
    %c8_i32 = arith.constant 8 : i32
    %11 = vector.broadcast %c8_i32 : i32 to vector<16x1xi32>
    %12 = arith.cmpi slt, %0, %11 : vector<16x1xi32>
    %cst_7 = arith.constant 0.000000e+00 : f32
    %13 = vector.shape_cast %12 : vector<16x1xi1> to vector<1x16x1xi1>
    %14 = vector.broadcast %13 : vector<1x16x1xi1> to vector<2x16x128xi1>
    %15 = vector.broadcast %cst_7 : f32 to vector<2x16x128xf32>
    %16 = arith.select %14, %10, %15 : vector<2x16x128xi1>, vector<2x16x128xf32>
    %c1_i32 = arith.constant 1 : i32
    %17 = tpu.dynamic_rotate %16 by %c1_i32 dim 1 : vector<2x16x128xf32>, i32 -> vector<2x16x128xf32>
    %c15_i32 = arith.constant 15 : i32
    %18 = tpu.dynamic_rotate %16 by %c15_i32 dim 1 : vector<2x16x128xf32>, i32 -> vector<2x16x128xf32>
    %19 = tpu.concatenate %17, %16, %18 in 2 : vector<2x16x128xf32>, vector<2x16x128xf32>, vector<2x16x128xf32> -> vector<2x16x384xf32>
    %20 = vector.shape_cast %19 : vector<2x16x384xf32> to vector<32x384xf32>
    %c0_8 = arith.constant 0 : index
    %c0_9 = arith.constant 0 : index
    %21 = vector.load %arg4[%c0_8, %c0_9] : memref<384x128xf32, #tpu.memory_space<vmem>>, vector<384x128xf32>
    %cst_10 = arith.constant dense<0.000000e+00> : vector<32x128xf32>
    %22 = tpu.matmul %20, %21, %cst_10 {dimension_numbers = #tpu.dot_dimension_numbers<[1], [0], [0], [1], [0, 0, 1, 1], [], []>, precision = #tpu.contract_precision<fp32>} : vector<32x384xf32>, vector<384x128xf32>, vector<32x128xf32> -> vector<32x128xf32>
    %c0_11 = arith.constant 0 : index
    %c0_12 = arith.constant 0 : index
    %23 = vector.load %arg5[%c0_11, %c0_12] : memref<1x128xf32, #tpu.memory_space<vmem>>, vector<1x128xf32>
    %24 = vector.broadcast %23 : vector<1x128xf32> to vector<32x128xf32>
    %25 = arith.addf %22, %24 : vector<32x128xf32>
    %26 = vector.extract_strided_slice %1 {offsets = [0, 0, 128], sizes = [2, 16, 128], strides = [1, 1, 1]} : vector<2x16x384xf32> to vector<2x16x128xf32>
    %27 = vector.shape_cast %26 : vector<2x16x128xf32> to vector<32x128xf32>
    %c0_13 = arith.constant 0 : index
    %c0_14 = arith.constant 0 : index
    %28 = vector.load %arg6[%c0_13, %c0_14] : memref<128x128xf32, #tpu.memory_space<vmem>>, vector<128x128xf32>
    %cst_15 = arith.constant dense<0.000000e+00> : vector<32x128xf32>
    %29 = tpu.matmul %27, %28, %cst_15 {dimension_numbers = #tpu.dot_dimension_numbers<[1], [0], [0], [1], [0, 0, 1, 1], [], []>, precision = #tpu.contract_precision<fp32>} : vector<32x128xf32>, vector<128x128xf32>, vector<32x128xf32> -> vector<32x128xf32>
    %c0_16 = arith.constant 0 : index
    %c0_17 = arith.constant 0 : index
    %30 = vector.load %arg7[%c0_16, %c0_17] : memref<1x128xf32, #tpu.memory_space<vmem>>, vector<1x128xf32>
    %31 = vector.broadcast %30 : vector<1x128xf32> to vector<32x128xf32>
    %32 = arith.addf %29, %31 : vector<32x128xf32>
    %33 = arith.addf %25, %32 : vector<32x128xf32>
    %cst_18 = arith.constant 0.000000e+00 : f32
    %34 = vector.broadcast %cst_18 : f32 to vector<32x128xf32>
    %35 = arith.maximumf %33, %34 : vector<32x128xf32>
    %36 = vector.shape_cast %35 : vector<32x128xf32> to vector<2x16x128xf32>
    %c0_19 = arith.constant 0 : index
    %c0_20 = arith.constant 0 : index
    %c0_21 = arith.constant 0 : index
    %37 = vector.load %arg8[%c0_19, %c0_20, %c0_21] : memref<2x16x128xf32, #tpu.memory_space<vmem>>, vector<2x16x128xf32>
    tpu.vector_store %arg8[%c0_19, %c0_20, %c0_21], %36 {strides = array<i32>} : memref<2x16x128xf32, #tpu.memory_space<vmem>>, vector<2x16x128xf32>,
    return
  }
  func.func @transform_0(%arg0: i32) -> (i32, i32, i32) {
    %c0_i32 = arith.constant 0 : i32
    %c0_i32_0 = arith.constant 0 : i32
    %c0_i32_1 = arith.constant 0 : i32
    return %arg0, %c0_i32, %c0_i32_0 : i32, i32, i32
  }
  func.func @transform_1(%arg0: i32) -> (i32, i32) {
    %c0_i32 = arith.constant 0 : i32
    %c0_i32_0 = arith.constant 0 : i32
    %c0_i32_1 = arith.constant 0 : i32
    return %c0_i32, %c0_i32_0 : i32, i32
  }
  func.func @transform_2(%arg0: i32) -> (i32, i32) {
    %c0_i32 = arith.constant 0 : i32
    %c0_i32_0 = arith.constant 0 : i32
    %c0_i32_1 = arith.constant 0 : i32
    return %c0_i32, %c0_i32_0 : i32, i32
  }
  func.func @transform_3(%arg0: i32) -> (i32, i32) {
    %c0_i32 = arith.constant 0 : i32
    %c0_i32_0 = arith.constant 0 : i32
    %c0_i32_1 = arith.constant 0 : i32
    return %c0_i32, %c0_i32_0 : i32, i32
  }
  func.func @transform_4(%arg0: i32) -> (i32, i32) {
    %c0_i32 = arith.constant 0 : i32
    %c0_i32_0 = arith.constant 0 : i32
    %c0_i32_1 = arith.constant 0 : i32
    return %c0_i32, %c0_i32_0 : i32, i32
  }
  func.func @transform_5(%arg0: i32) -> (i32, i32) {
    %c0_i32 = arith.constant 0 : i32
    %c0_i32_0 = arith.constant 0 : i32
    %c0_i32_1 = arith.constant 0 : i32
    return %c0_i32, %c0_i32_0 : i32, i32
  }
  func.func @transform_6(%arg0: i32) -> (i32, i32) {
    %c0_i32 = arith.constant 0 : i32
    %c0_i32_0 = arith.constant 0 : i32
    %c0_i32_1 = arith.constant 0 : i32
    return %c0_i32, %c0_i32_0 : i32, i32
  }
  func.func @transform_7(%arg0: i32) -> (i32, i32, i32) {
    %c0_i32 = arith.constant 0 : i32
    %c0_i32_0 = arith.constant 0 : i32
    %c0_i32_1 = arith.constant 0 : i32
    return %arg0, %c0_i32, %c0_i32_0 : i32, i32, i32
  }
}

</mosaic_0001>

<llo_original>
// kernel: tpu_custom_call.1
$region0: #{tpu_custom_call.1}
  #allocation0 [shape = 'u32[]', space=smem, size = 0x4, offset = 0x4, fixed_abs, tag = 'smem constant byte address 0x4 - core index']
  #allocation1 [shape = 'u32[144,128]{1,0:T(1,128)}', space=vmem, size = 0x12000, scoped, tag = 'internal scratch']
  %s0 = inlined_call_operand.hbm [shape: f32[2,16,384], index: 0, kind: input, shape index: {}]
  %s1 = inlined_call_operand.hbm [shape: f32[384,128], index: 1, kind: input, shape index: {}]
  %s2 = inlined_call_operand.vmem [shape: f32[1,128], index: 2, kind: input, shape index: {}]
  %s3 = inlined_call_operand.hbm [shape: f32[384,128], index: 3, kind: input, shape index: {}]
  %s4 = inlined_call_operand.vmem [shape: f32[1,128], index: 4, kind: input, shape index: {}]
  %s5 = inlined_call_operand.hbm [shape: f32[128,128], index: 5, kind: input, shape index: {}]
  %s6 = inlined_call_operand.vmem [shape: f32[1,128], index: 6, kind: input, shape index: {}]
  %s7 = inlined_call_operand.hbm [shape: f32[2,16,128], index: 7, kind: output, shape index: {}]
  %s8 = sld [smem:[#allocation0]]
  $region54: #{tpu_custom_call.1} parent=0
    _
  %s10 = ssub.s32 1, %s8
  %s11 = scalar_select 0, %s10, %s8
  $region1: #{tpu_custom_call.1} parent=0
    #allocation2 [shape = 'u8[49152]{0}', space=vmem, size = 0xc000, scoped, tag = 'input window, operand 0, single buffered']
    #allocation3 [shape = 's32[1]{0}', space=sflag, size = 0x4, scoped, tag = 'scoped memory for tpu_custom_call.1']
    #allocation4 [shape = 's32[1]{0}', space=sflag, size = 0x4, scoped, tag = 'scoped memory for tpu_custom_call.1']
    #allocation5 [shape = 'u8[196608]{0}', space=vmem, size = 0x30000, scoped, tag = 'input window, operand 1, single buffered']
    #allocation6 [shape = 's32[1]{0}', space=sflag, size = 0x4, scoped, tag = 'scoped memory for tpu_custom_call.1']
    #allocation7 [shape = 'u8[196608]{0}', space=vmem, size = 0x30000, scoped, tag = 'input window, operand 3, single buffered']
    #allocation8 [shape = 'u8[65536]{0}', space=vmem, size = 0x10000, scoped, tag = 'input window, operand 5, single buffered']
    #allocation9 [shape = 's32[1]{0}', space=sflag, size = 0x4, scoped, tag = 'scoped memory for tpu_custom_call.1']
    #allocation10 [shape = 'u8[16384]{0}', space=vmem, size = 0x4000, scoped, tag = 'output window, operand 0, single buffered']
    %12 = vsyncpa [#allocation3], 0
    %13 = vsyncpa [#allocation6], 0
    %14 = vsyncpa [#allocation9], 0
    %15 = vsyncpa [#allocation4], 0
    // Predicated region
    $region2: #{tpu_custom_call.1} parent=1 // pred_check
      _
    $region3: #{tpu_custom_call.1} parent=1 // pred_check_branch
      %17 = sbr.rel (0) target = $region5
    $region4: #{tpu_custom_call.1} parent=1 // pred_region
      %s19 = ssub.s32 1536, 1536
      %20 = vsyncadd [#allocation3], %s19
      %s21 = sshll.u32 [#allocation2], 4
      %s22 = int_to_ptr.vmem [resolvable:$true] %s21
      %27 = dma.hbm_to_vmem [thread:$0]  %s0, 1536, %s22, [#allocation3], 384, 384, 24
    $region5: #{tpu_custom_call.1} parent=1 // pred_fallthru
      _
    // Predicated region
    $region6: #{tpu_custom_call.1} parent=1 // pred_check
      _
    $region7: #{tpu_custom_call.1} parent=1 // pred_check_branch
      %29 = sbr.rel (0) target = $region9
    $region8: #{tpu_custom_call.1} parent=1 // pred_region
      %s31 = ssub.s32 6144, 6144
      %32 = vsyncadd [#allocation6], %s31
      %s33 = sshll.u32 [#allocation5], 4
      %s34 = int_to_ptr.vmem [resolvable:$true] %s33
      %39 = dma.hbm_to_vmem [thread:$0]  %s1, 6144, %s34, [#allocation6], 128, 128, 8
    $region9: #{tpu_custom_call.1} parent=1 // pred_fallthru
      _
    // Predicated region
    $region10: #{tpu_custom_call.1} parent=1 // pred_check
      _
    $region11: #{tpu_custom_call.1} parent=1 // pred_check_branch
      %41 = sbr.rel (0) target = $region13
    $region12: #{tpu_custom_call.1} parent=1 // pred_region
      _
    $region13: #{tpu_custom_call.1} parent=1 // pred_fallthru
      _
    // Predicated region
    $region14: #{tpu_custom_call.1} parent=1 // pred_check
      _
    $region15: #{tpu_custom_call.1} parent=1 // pred_check_branch
      %43 = sbr.rel (0) target = $region17
    $region16: #{tpu_custom_call.1} parent=1 // pred_region
      %s45 = ssub.s32 6144, 6144
      %46 = vsyncadd [#allocation6], %s45
      %s47 = sshll.u32 [#allocation7], 4
      %s48 = int_to_ptr.vmem [resolvable:$true] %s47
      %53 = dma.hbm_to_vmem [thread:$0]  %s3, 6144, %s48, [#allocation6], 128, 128, 8
    $region17: #{tpu_custom_call.1} parent=1 // pred_fallthru
      _
    // Predicated region
    $region18: #{tpu_custom_call.1} parent=1 // pred_check
      _
    $region19: #{tpu_custom_call.1} parent=1 // pred_check_branch
      %55 = sbr.rel (0) target = $region21
    $region20: #{tpu_custom_call.1} parent=1 // pred_region
      _
    $region21: #{tpu_custom_call.1} parent=1 // pred_fallthru
      _
    // Predicated region
    $region22: #{tpu_custom_call.1} parent=1 // pred_check
      _
    $region23: #{tpu_custom_call.1} parent=1 // pred_check_branch
      %57 = sbr.rel (0) target = $region25
    $region24: #{tpu_custom_call.1} parent=1 // pred_region
      %s59 = ssub.s32 2048, 2048
      %60 = vsyncadd [#allocation9], %s59
      %s61 = sshll.u32 [#allocation8], 4
      %s62 = int_to_ptr.vmem [resolvable:$true] %s61
      %67 = dma.hbm_to_vmem [thread:$0]  %s5, 2048, %s62, [#allocation9], 128, 128, 8
    $region25: #{tpu_custom_call.1} parent=1 // pred_fallthru
      _
    // Predicated region
    $region26: #{tpu_custom_call.1} parent=1 // pred_check
      _
    $region27: #{tpu_custom_call.1} parent=1 // pred_check_branch
      %69 = sbr.rel (0) target = $region29
    $region28: #{tpu_custom_call.1} parent=1 // pred_region
      _
    $region29: #{tpu_custom_call.1} parent=1 // pred_fallthru
      _
    // Predicated region
    $region30: #{tpu_custom_call.1} parent=1 // pred_check
      _
    $region31: #{tpu_custom_call.1} parent=1 // pred_check_branch
      %71 = sbr.rel (0) target = $region33
    $region32: #{tpu_custom_call.1} parent=1 // pred_region
      %72 = dma.done [#allocation3], 1536
    $region33: #{tpu_custom_call.1} parent=1 // pred_fallthru
      _
    // Predicated region
    $region34: #{tpu_custom_call.1} parent=1 // pred_check
      _
    $region35: #{tpu_custom_call.1} parent=1 // pred_check_branch
      %74 = sbr.rel (0) target = $region37
    $region36: #{tpu_custom_call.1} parent=1 // pred_region
      %75 = dma.done [#allocation6], 6144
    $region37: #{tpu_custom_call.1} parent=1 // pred_fallthru
      _
    // Predicated region
    $region38: #{tpu_custom_call.1} parent=1 // pred_check
      _
    $region39: #{tpu_custom_call.1} parent=1 // pred_check_branch
      %77 = sbr.rel (0) target = $region41
    $region40: #{tpu_custom_call.1} parent=1 // pred_region
      %78 = dma.done [#allocation6], 6144
    $region41: #{tpu_custom_call.1} parent=1 // pred_fallthru
      _
    // Predicated region
    $region42: #{tpu_custom_call.1} parent=1 // pred_check
      _
    $region43: #{tpu_custom_call.1} parent=1 // pred_check_branch
      %80 = sbr.rel (0) target = $region45
    $region44: #{tpu_custom_call.1} parent=1 // pred_region
      %81 = dma.done [#allocation9], 2048
    $region45: #{tpu_custom_call.1} parent=1 // pred_fallthru
      _
    %v82 = vlaneseq
    %v83 = vshrl.u32 %v82, 7
    %v84 = vadd.s32 %v83, 8
    %v85 = vld [vmem:[#allocation2] sm:$0xff]
    %v86 = vld [vmem:[#allocation2 + $0x8] sm:$0xff]
    %v87 = vld [vmem:[#allocation2 + $0x10] sm:$0xff]
    %v88 = vld [vmem:[#allocation2 + $0x18] sm:$0xff]
    %v89 = vld [vmem:[#allocation2 + $0x20] sm:$0xff]
    %v90 = vld [vmem:[#allocation2 + $0x28] sm:$0xff]
    %v91 = vld [vmem:[#allocation2 + $0x30] sm:$0xff]
    %v92 = vld [vmem:[#allocation2 + $0x38] sm:$0xff]
    %v93 = vld [vmem:[#allocation2 + $0x40] sm:$0xff]
    %v94 = vld [vmem:[#allocation2 + $0x48] sm:$0xff]
    %v95 = vld [vmem:[#allocation2 + $0x50] sm:$0xff]
    %v96 = vld [vmem:[#allocation2 + $0x58] sm:$0xff]
    %v97 = vld [vmem:[#allocation5] sm:$0xff]
    %v98 = vld [vmem:[#allocation5 + $0x8] sm:$0xff]
    %v99 = vld [vmem:[#allocation5 + $0x10] sm:$0xff]
    %v100 = vld [vmem:[#allocation5 + $0x18] sm:$0xff]
    %v101 = vld [vmem:[#allocation5 + $0x20] sm:$0xff]
    %v102 = vld [vmem:[#allocation5 + $0x28] sm:$0xff]
    %v103 = vld [vmem:[#allocation5 + $0x30] sm:$0xff]
    %v104 = vld [vmem:[#allocation5 + $0x38] sm:$0xff]
    %v105 = vld [vmem:[#allocation5 + $0x40] sm:$0xff]
    %v106 = vld [vmem:[#allocation5 + $0x48] sm:$0xff]
    %v107 = vld [vmem:[#allocation5 + $0x50] sm:$0xff]
    %v108 = vld [vmem:[#allocation5 + $0x58] sm:$0xff]
    %v109 = vld [vmem:[#allocation5 + $0x60] sm:$0xff]
    %v110 = vld [vmem:[#allocation5 + $0x68] sm:$0xff]
    %v111 = vld [vmem:[#allocation5 + $0x70] sm:$0xff]
    %v112 = vld [vmem:[#allocation5 + $0x78] sm:$0xff]
    %v113 = vld [vmem:[#allocation5 + $0x80] sm:$0xff]
    %v114 = vld [vmem:[#allocation5 + $0x88] sm:$0xff]
    %v115 = vld [vmem:[#allocation5 + $0x90] sm:$0xff]
    %v116 = vld [vmem:[#allocation5 + $0x98] sm:$0xff]
    %v117 = vld [vmem:[#allocation5 + $0xa0] sm:$0xff]
    %v118 = vld [vmem:[#allocation5 + $0xa8] sm:$0xff]
    %v119 = vld [vmem:[#allocation5 + $0xb0] sm:$0xff]
    %v120 = vld [vmem:[#allocation5 + $0xb8] sm:$0xff]
    %v121 = vld [vmem:[#allocation5 + $0xc0] sm:$0xff]
    %v122 = vld [vmem:[#allocation5 + $0xc8] sm:$0xff]
    %v123 = vld [vmem:[#allocation5 + $0xd0] sm:$0xff]
    %v124 = vld [vmem:[#allocation5 + $0xd8] sm:$0xff]
    %v125 = vld [vmem:[#allocation5 + $0xe0] sm:$0xff]
    %v126 = vld [vmem:[#allocation5 + $0xe8] sm:$0xff]
    %v127 = vld [vmem:[#allocation5 + $0xf0] sm:$0xff]
    %v128 = vld [vmem:[#allocation5 + $0xf8] sm:$0xff]
    %v129 = vld [vmem:[#allocation5 + $0x100] sm:$0xff]
    %v130 = vld [vmem:[#allocation5 + $0x108] sm:$0xff]
    %v131 = vld [vmem:[#allocation5 + $0x110] sm:$0xff]
    %v132 = vld [vmem:[#allocation5 + $0x118] sm:$0xff]
    %v133 = vld [vmem:[#allocation5 + $0x120] sm:$0xff]
    %v134 = vld [vmem:[#allocation5 + $0x128] sm:$0xff]
    %v135 = vld [vmem:[#allocation5 + $0x130] sm:$0xff]
    %v136 = vld [vmem:[#allocation5 + $0x138] sm:$0xff]
    %v137 = vld [vmem:[#allocation5 + $0x140] sm:$0xff]
    %v138 = vld [vmem:[#allocation5 + $0x148] sm:$0xff]
    %v139 = vld [vmem:[#allocation5 + $0x150] sm:$0xff]
    %v140 = vld [vmem:[#allocation5 + $0x158] sm:$0xff]
    %v141 = vld [vmem:[#allocation5 + $0x160] sm:$0xff]
    %v142 = vld [vmem:[#allocation5 + $0x168] sm:$0xff]
    %v143 = vld [vmem:[#allocation5 + $0x170] sm:$0xff]
    %v144 = vld [vmem:[#allocation5 + $0x178] sm:$0xff]
    %v145 = vld [vmem:[%s2] sm:$0x1]
    %v147 = vlaneseq
    %v148 = vshrl.u32 %v147, 7
    %v149 = vsub.s32 0, %v148
    %v150 = vrot.slane %v145, %v149
    %152 = vmatprep.subr.mxu0 0.0
    %v153 = vand.u32 %v112, 4294901760
    %154 = vmatpush1.msra.mxu0 %v153
    %155 = vmatprep.subr.mxu0 0.0
    %v156 = vand.u32 %v111, 4294901760
    %157 = vmatpush1.msra.mxu0 %v156
    %158 = vmatprep.subr.mxu0 0.0
    %v159 = vand.u32 %v110, 4294901760
    %160 = vmatpush1.msra.mxu0 %v159
    %161 = vmatprep.subr.mxu0 0.0
    %v162 = vand.u32 %v109, 4294901760
    %163 = vmatpush1.msra.mxu0 %v162
    %164 = vmatprep.subr.mxu0 0.0
    %v165 = vand.u32 %v108, 4294901760
    %166 = vmatpush1.msra.mxu0 %v165
    %167 = vmatprep.subr.mxu0 0.0
    %v168 = vand.u32 %v107, 4294901760
    %169 = vmatpush1.msra.mxu0 %v168
    %170 = vmatprep.subr.mxu0 0.0
    %v171 = vand.u32 %v106, 4294901760
    %172 = vmatpush1.msra.mxu0 %v171
    %173 = vmatprep.subr.mxu0 0.0
    %v174 = vand.u32 %v105, 4294901760
    %175 = vmatpush1.msra.mxu0 %v174
    %176 = vmatprep.subr.mxu0 0.0
    %v177 = vand.u32 %v104, 4294901760
    %178 = vmatpush1.msra.mxu0 %v177
    %179 = vmatprep.subr.mxu0 0.0
    %v180 = vand.u32 %v103, 4294901760
    %181 = vmatpush1.msra.mxu0 %v180
    %182 = vmatprep.subr.mxu0 0.0
    %v183 = vand.u32 %v102, 4294901760
    %184 = vmatpush1.msra.mxu0 %v183
    %185 = vmatprep.subr.mxu0 0.0
    %v186 = vand.u32 %v101, 4294901760
    %187 = vmatpush1.msra.mxu0 %v186
    %188 = vmatprep.subr.mxu0 0.0
    %v189 = vand.u32 %v100, 4294901760
    %190 = vmatpush1.msra.mxu0 %v189
    %191 = vmatprep.subr.mxu0 0.0
    %v192 = vand.u32 %v99, 4294901760
    %193 = vmatpush1.msra.mxu0 %v192
    %194 = vmatprep.subr.mxu0 0.0
    %v195 = vand.u32 %v98, 4294901760
    %196 = vmatpush1.msra.mxu0 %v195
    %197 = vmatprep.subr.mxu0 0.0
    %v198 = vand.u32 %v97, 4294901760
    %199 = vmatpush1.msra.mxu0 %v198
    %200 = vmatprep.subr.mxu0 0.0
    %v201 = vand.u32 %v128, 4294901760
    %202 = vmatpush2.msra.mxu0 %v201
    %203 = vmatprep.subr.mxu0 0.0
    %v204 = vand.u32 %v127, 4294901760
    %205 = vmatpush2.msra.mxu0 %v204
    %206 = vmatprep.subr.mxu0 0.0
    %v207 = vand.u32 %v126, 4294901760
    %208 = vmatpush2.msra.mxu0 %v207
    %209 = vmatprep.subr.mxu0 0.0
    %v210 = vand.u32 %v125, 4294901760
    %211 = vmatpush2.msra.mxu0 %v210
    %212 = vmatprep.subr.mxu0 0.0
    %v213 = vand.u32 %v124, 4294901760
    %214 = vmatpush2.msra.mxu0 %v213
    %215 = vmatprep.subr.mxu0 0.0
    %v216 = vand.u32 %v123, 4294901760
    %217 = vmatpush2.msra.mxu0 %v216
    %218 = vmatprep.subr.mxu0 0.0
    %v219 = vand.u32 %v122, 4294901760
    %220 = vmatpush2.msra.mxu0 %v219
    %221 = vmatprep.subr.mxu0 0.0
    %v222 = vand.u32 %v121, 4294901760
    %223 = vmatpush2.msra.mxu0 %v222
    %224 = vmatprep.subr.mxu0 0.0
    %v225 = vand.u32 %v120, 4294901760
    %226 = vmatpush2.msra.mxu0 %v225
    %227 = vmatprep.subr.mxu0 0.0
    %v228 = vand.u32 %v119, 4294901760
    %229 = vmatpush2.msra.mxu0 %v228
    %230 = vmatprep.subr.mxu0 0.0
    %v231 = vand.u32 %v118, 4294901760
    %232 = vmatpush2.msra.mxu0 %v231
    %233 = vmatprep.subr.mxu0 0.0
    %v234 = vand.u32 %v117, 4294901760
    %235 = vmatpush2.msra.mxu0 %v234
    %236 = vmatprep.subr.mxu0 0.0
    %v237 = vand.u32 %v116, 4294901760
    %238 = vmatpush2.msra.mxu0 %v237
    %239 = vmatprep.subr.mxu0 0.0
    %v240 = vand.u32 %v115, 4294901760
    %241 = vmatpush2.msra.mxu0 %v240
    %242 = vmatprep.subr.mxu0 0.0
    %v243 = vand.u32 %v114, 4294901760
    %244 = vmatpush2.msra.mxu0 %v243
    %245 = vmatprep.subr.mxu0 0.0
    %v246 = vand.u32 %v113, 4294901760
    %247 = vmatpush2.msra.mxu0 %v246
    %v248 = vand.u32 %v86, 4294901760
    %v249 = vsub.f32 %v86, %v248
    %v250 = vand.u32 %v249, 4294901760
    %v251 = vsub.f32 %v249, %v250
    %v252 = vand.u32 %v251, 4294901760
    %253 = vmatprep.mubr.f32.mxu0 %v252
    %v254 = vand.u32 %v85, 4294901760
    %v255 = vsub.f32 %v85, %v254
    %v256 = vand.u32 %v255, 4294901760
    %v257 = vsub.f32 %v255, %v256
    %v258 = vand.u32 %v257, 4294901760
    %259 = vmatmul.mubr.f32.gmra.mxu0 %v258
    %v260 = vpop.f32.mrf.mxu0
    %v261 = vadd.f32 %v150, %v260
    %v262 = vpop.f32.mrf.mxu0
    %v263 = vand.u32 %v89, 4294901760
    %v264 = vsub.f32 %v89, %v263
    %v265 = vand.u32 %v264, 4294901760
    %v266 = vsub.f32 %v264, %v265
    %v267 = vand.u32 %v266, 4294901760
    %268 = vmatprep.mubr.f32.mxu0 %v267
    %v269 = vand.u32 %v88, 4294901760
    %v270 = vsub.f32 %v88, %v269
    %v271 = vand.u32 %v270, 4294901760
    %v272 = vsub.f32 %v270, %v271
    %v273 = vand.u32 %v272, 4294901760
    %274 = vmatmul.mubr.f32.gmra.mxu0 %v273
    %v275 = vpop.f32.mrf.mxu0
    %v276 = vadd.f32 %v150, %v275
    %v277 = vpop.f32.mrf.mxu0
    %v278 = vand.u32 %v92, 4294901760
    %v279 = vsub.f32 %v92, %v278
    %v280 = vand.u32 %v279, 4294901760
    %v281 = vsub.f32 %v279, %v280
    %v282 = vand.u32 %v281, 4294901760
    %283 = vmatprep.mubr.f32.mxu0 %v282
    %v284 = vand.u32 %v91, 4294901760
    %v285 = vsub.f32 %v91, %v284
    %v286 = vand.u32 %v285, 4294901760
    %v287 = vsub.f32 %v285, %v286
    %v288 = vand.u32 %v287, 4294901760
    %289 = vmatmul.mubr.f32.gmra.mxu0 %v288
    %v290 = vpop.f32.mrf.mxu0
    %v291 = vadd.f32 %v150, %v290
    %v292 = vpop.f32.mrf.mxu0
    %v293 = vand.u32 %v95, 4294901760
    %v294 = vsub.f32 %v95, %v293
    %v295 = vand.u32 %v294, 4294901760
    %v296 = vsub.f32 %v294, %v295
    %v297 = vand.u32 %v296, 4294901760
    %298 = vmatprep.mubr.f32.mxu0 %v297
    %v299 = vand.u32 %v94, 4294901760
    %v300 = vsub.f32 %v94, %v299
    %v301 = vand.u32 %v300, 4294901760
    %v302 = vsub.f32 %v300, %v301
    %v303 = vand.u32 %v302, 4294901760
    %304 = vmatmul.mubr.f32.gmra.mxu0 %v303
    %v305 = vpop.f32.mrf.mxu0
    %v306 = vadd.f32 %v150, %v305
    %v307 = vpop.f32.mrf.mxu0
    %308 = vdwg.mxu0
    %309 = vmatprep.subr.mxu0 0.0
    %v310 = vand.u32 %v112, 4294901760
    %v311 = vsub.f32 %v112, %v310
    %v312 = vand.u32 %v311, 4294901760
    %v313 = vsub.f32 %v311, %v312
    %v314 = vand.u32 %v313, 4294901760
    %315 = vmatpush1.msra.mxu0 %v314
    %316 = vmatprep.subr.mxu0 0.0
    %v317 = vand.u32 %v111, 4294901760
    %v318 = vsub.f32 %v111, %v317
    %v319 = vand.u32 %v318, 4294901760
    %v320 = vsub.f32 %v318, %v319
    %v321 = vand.u32 %v320, 4294901760
    %322 = vmatpush1.msra.mxu0 %v321
    %323 = vmatprep.subr.mxu0 0.0
    %v324 = vand.u32 %v110, 4294901760
    %v325 = vsub.f32 %v110, %v324
    %v326 = vand.u32 %v325, 4294901760
    %v327 = vsub.f32 %v325, %v326
    %v328 = vand.u32 %v327, 4294901760
    %329 = vmatpush1.msra.mxu0 %v328
    %330 = vmatprep.subr.mxu0 0.0
    %v331 = vand.u32 %v109, 4294901760
    %v332 = vsub.f32 %v109, %v331
    %v333 = vand.u32 %v332, 4294901760
    %v334 = vsub.f32 %v332, %v333
    %v335 = vand.u32 %v334, 4294901760
    %336 = vmatpush1.msra.mxu0 %v335
    %337 = vmatprep.subr.mxu0 0.0
    %v338 = vand.u32 %v108, 4294901760
    %v339 = vsub.f32 %v108, %v338
    %v340 = vand.u32 %v339, 4294901760
    %v341 = vsub.f32 %v339, %v340
    %v342 = vand.u32 %v341, 4294901760
    %343 = vmatpush1.msra.mxu0 %v342
    %344 = vmatprep.subr.mxu0 0.0
    %v345 = vand.u32 %v107, 4294901760
    %v346 = vsub.f32 %v107, %v345
    %v347 = vand.u32 %v346, 4294901760
    %v348 = vsub.f32 %v346, %v347
    %v349 = vand.u32 %v348, 4294901760
    %350 = vmatpush1.msra.mxu0 %v349
    %351 = vmatprep.subr.mxu0 0.0
    %v352 = vand.u32 %v106, 4294901760
    %v353 = vsub.f32 %v106, %v352
    %v354 = vand.u32 %v353, 4294901760
    %v355 = vsub.f32 %v353, %v354
    %v356 = vand.u32 %v355, 4294901760
    %357 = vmatpush1.msra.mxu0 %v356
    %358 = vmatprep.subr.mxu0 0.0
    %v359 = vand.u32 %v105, 4294901760
    %v360 = vsub.f32 %v105, %v359
    %v361 = vand.u32 %v360, 4294901760
    %v362 = vsub.f32 %v360, %v361
    %v363 = vand.u32 %v362, 4294901760
    %364 = vmatpush1.msra.mxu0 %v363
    %365 = vmatprep.subr.mxu0 0.0
    %v366 = vand.u32 %v104, 4294901760
    %v367 = vsub.f32 %v104, %v366
    %v368 = vand.u32 %v367, 4294901760
    %v369 = vsub.f32 %v367, %v368
    %v370 = vand.u32 %v369, 4294901760
    %371 = vmatpush1.msra.mxu0 %v370
    %372 = vmatprep.subr.mxu0 0.0
    %v373 = vand.u32 %v103, 4294901760
    %v374 = vsub.f32 %v103, %v373
    %v375 = vand.u32 %v374, 4294901760
    %v376 = vsub.f32 %v374, %v375
    %v377 = vand.u32 %v376, 4294901760
    %378 = vmatpush1.msra.mxu0 %v377
    %379 = vmatprep.subr.mxu0 0.0
    %v380 = vand.u32 %v102, 4294901760
    %v381 = vsub.f32 %v102, %v380
    %v382 = vand.u32 %v381, 4294901760
    %v383 = vsub.f32 %v381, %v382
    %v384 = vand.u32 %v383, 4294901760
    %385 = vmatpush1.msra.mxu0 %v384
    %386 = vmatprep.subr.mxu0 0.0
    %v387 = vand.u32 %v101, 4294901760
    %v388 = vsub.f32 %v101, %v387
    %v389 = vand.u32 %v388, 4294901760
    %v390 = vsub.f32 %v388, %v389
    %v391 = vand.u32 %v390, 4294901760
    %392 = vmatpush1.msra.mxu0 %v391
    %393 = vmatprep.subr.mxu0 0.0
    %v394 = vand.u32 %v100, 4294901760
    %v395 = vsub.f32 %v100, %v394
    %v396 = vand.u32 %v395, 4294901760
    %v397 = vsub.f32 %v395, %v396
    %v398 = vand.u32 %v397, 4294901760
    %399 = vmatpush1.msra.mxu0 %v398
    %400 = vmatprep.subr.mxu0 0.0
    %v401 = vand.u32 %v99, 4294901760
    %v402 = vsub.f32 %v99, %v401
    %v403 = vand.u32 %v402, 4294901760
    %v404 = vsub.f32 %v402, %v403
    %v405 = vand.u32 %v404, 4294901760
    %406 = vmatpush1.msra.mxu0 %v405
    %407 = vmatprep.subr.mxu0 0.0
    %v408 = vand.u32 %v98, 4294901760
    %v409 = vsub.f32 %v98, %v408
    %v410 = vand.u32 %v409, 4294901760
    %v411 = vsub.f32 %v409, %v410
    %v412 = vand.u32 %v411, 4294901760
    %413 = vmatpush1.msra.mxu0 %v412
    %414 = vmatprep.subr.mxu0 0.0
    %v415 = vand.u32 %v97, 4294901760
    %v416 = vsub.f32 %v97, %v415
    %v417 = vand.u32 %v416, 4294901760
    %v418 = vsub.f32 %v416, %v417
    %v419 = vand.u32 %v418, 4294901760
    %420 = vmatpush1.msra.mxu0 %v419
    %421 = vmatprep.subr.mxu0 0.0
    %v422 = vand.u32 %v128, 4294901760
    %v423 = vsub.f32 %v128, %v422
    %v424 = vand.u32 %v423, 4294901760
    %v425 = vsub.f32 %v423, %v424
    %v426 = vand.u32 %v425, 4294901760
    %427 = vmatpush2.msra.mxu0 %v426
    %428 = vmatprep.subr.mxu0 0.0
    %v429 = vand.u32 %v127, 4294901760
    %v430 = vsub.f32 %v127, %v429
    %v431 = vand.u32 %v430, 4294901760
    %v432 = vsub.f32 %v430, %v431
    %v433 = vand.u32 %v432, 4294901760
    %434 = vmatpush2.msra.mxu0 %v433
    %435 = vmatprep.subr.mxu0 0.0
    %v436 = vand.u32 %v126, 4294901760
    %v437 = vsub.f32 %v126, %v436
    %v438 = vand.u32 %v437, 4294901760
    %v439 = vsub.f32 %v437, %v438
    %v440 = vand.u32 %v439, 4294901760
    %441 = vmatpush2.msra.mxu0 %v440
    %442 = vmatprep.subr.mxu0 0.0
    %v443 = vand.u32 %v125, 4294901760
    %v444 = vsub.f32 %v125, %v443
    %v445 = vand.u32 %v444, 4294901760
    %v446 = vsub.f32 %v444, %v445
    %v447 = vand.u32 %v446, 4294901760
    %448 = vmatpush2.msra.mxu0 %v447
    %449 = vmatprep.subr.mxu0 0.0
    %v450 = vand.u32 %v124, 4294901760
    %v451 = vsub.f32 %v124, %v450
    %v452 = vand.u32 %v451, 4294901760
    %v453 = vsub.f32 %v451, %v452
    %v454 = vand.u32 %v453, 4294901760
    %455 = vmatpush2.msra.mxu0 %v454
    %456 = vmatprep.subr.mxu0 0.0
    %v457 = vand.u32 %v123, 4294901760
    %v458 = vsub.f32 %v123, %v457
    %v459 = vand.u32 %v458, 4294901760
    %v460 = vsub.f32 %v458, %v459
    %v461 = vand.u32 %v460, 4294901760
    %462 = vmatpush2.msra.mxu0 %v461
    %463 = vmatprep.subr.mxu0 0.0
    %v464 = vand.u32 %v122, 4294901760
    %v465 = vsub.f32 %v122, %v464
    %v466 = vand.u32 %v465, 4294901760
    %v467 = vsub.f32 %v465, %v466
    %v468 = vand.u32 %v467, 4294901760
    %469 = vmatpush2.msra.mxu0 %v468
    %470 = vmatprep.subr.mxu0 0.0
    %v471 = vand.u32 %v121, 4294901760
    %v472 = vsub.f32 %v121, %v471
    %v473 = vand.u32 %v472, 4294901760
    %v474 = vsub.f32 %v472, %v473
    %v475 = vand.u32 %v474, 4294901760
    %476 = vmatpush2.msra.mxu0 %v475
    %477 = vmatprep.subr.mxu0 0.0
    %v478 = vand.u32 %v120, 4294901760
    %v479 = vsub.f32 %v120, %v478
    %v480 = vand.u32 %v479, 4294901760
    %v481 = vsub.f32 %v479, %v480
    %v482 = vand.u32 %v481, 4294901760
    %483 = vmatpush2.msra.mxu0 %v482
    %484 = vmatprep.subr.mxu0 0.0
    %v485 = vand.u32 %v119, 4294901760
    %v486 = vsub.f32 %v119, %v485
    %v487 = vand.u32 %v486, 4294901760
    %v488 = vsub.f32 %v486, %v487
    %v489 = vand.u32 %v488, 4294901760
    %490 = vmatpush2.msra.mxu0 %v489
    %491 = vmatprep.subr.mxu0 0.0
    %v492 = vand.u32 %v118, 4294901760
    %v493 = vsub.f32 %v118, %v492
    %v494 = vand.u32 %v493, 4294901760
    %v495 = vsub.f32 %v493, %v494
    %v496 = vand.u32 %v495, 4294901760
    %497 = vmatpush2.msra.mxu0 %v496
    %498 = vmatprep.subr.mxu0 0.0
    %v499 = vand.u32 %v117, 4294901760
    %v500 = vsub.f32 %v117, %v499
    %v501 = vand.u32 %v500, 4294901760
    %v502 = vsub.f32 %v500, %v501
    %v503 = vand.u32 %v502, 4294901760
    %504 = vmatpush2.msra.mxu0 %v503
    %505 = vmatprep.subr.mxu0 0.0
    %v506 = vand.u32 %v116, 4294901760
    %v507 = vsub.f32 %v116, %v506
    %v508 = vand.u32 %v507, 4294901760
    %v509 = vsub.f32 %v507, %v508
    %v510 = vand.u32 %v509, 4294901760
    %511 = vmatpush2.msra.mxu0 %v510
    %512 = vmatprep.subr.mxu0 0.0
    %v513 = vand.u32 %v115, 4294901760
    %v514 = vsub.f32 %v115, %v513
    %v515 = vand.u32 %v514, 4294901760
    %v516 = vsub.f32 %v514, %v515
    %v517 = vand.u32 %v516, 4294901760
    %518 = vmatpush2.msra.mxu0 %v517
    %519 = vmatprep.subr.mxu0 0.0
    %v520 = vand.u32 %v114, 4294901760
    %v521 = vsub.f32 %v114, %v520
    %v522 = vand.u32 %v521, 4294901760
    %v523 = vsub.f32 %v521, %v522
    %v524 = vand.u32 %v523, 4294901760
    %525 = vmatpush2.msra.mxu0 %v524
    %526 = vmatprep.subr.mxu0 0.0
    %v527 = vand.u32 %v113, 4294901760
    %v528 = vsub.f32 %v113, %v527
    %v529 = vand.u32 %v528, 4294901760
    %v530 = vsub.f32 %v528, %v529
    %v531 = vand.u32 %v530, 4294901760
    %532 = vmatpush2.msra.mxu0 %v531
    %v533 = vand.u32 %v86, 4294901760
    %534 = vmatprep.mubr.f32.mxu0 %v533
    %v535 = vand.u32 %v85, 4294901760
    %536 = vmatmul.mubr.f32.gmra.mxu0 %v535
    %v537 = vpop.f32.mrf.mxu0
    %v538 = vadd.f32 %v261, %v537
    %v539 = vpop.f32.mrf.mxu0
    %v540 = vand.u32 %v89, 4294901760
    %541 = vmatprep.mubr.f32.mxu0 %v540
    %v542 = vand.u32 %v88, 4294901760
    %543 = vmatmul.mubr.f32.gmra.mxu0 %v542
    %v544 = vpop.f32.mrf.mxu0
    %v545 = vadd.f32 %v276, %v544
    %v546 = vpop.f32.mrf.mxu0
    %v547 = vand.u32 %v92, 4294901760
    %548 = vmatprep.mubr.f32.mxu0 %v547
    %v549 = vand.u32 %v91, 4294901760
    %550 = vmatmul.mubr.f32.gmra.mxu0 %v549
    %v551 = vpop.f32.mrf.mxu0
    %v552 = vadd.f32 %v291, %v551
    %v553 = vpop.f32.mrf.mxu0
    %v554 = vand.u32 %v95, 4294901760
    %555 = vmatprep.mubr.f32.mxu0 %v554
    %v556 = vand.u32 %v94, 4294901760
    %557 = vmatmul.mubr.f32.gmra.mxu0 %v556
    %v558 = vpop.f32.mrf.mxu0
    %v559 = vadd.f32 %v306, %v558
    %v560 = vpop.f32.mrf.mxu0
    %561 = vdwg.mxu0
    %562 = vmatprep.subr.mxu0 0.0
    %v563 = vand.u32 %v112, 4294901760
    %v564 = vsub.f32 %v112, %v563
    %565 = vmatpush1.msra.mxu0 %v564
    %566 = vmatprep.subr.mxu0 0.0
    %v567 = vand.u32 %v111, 4294901760
    %v568 = vsub.f32 %v111, %v567
    %569 = vmatpush1.msra.mxu0 %v568
    %570 = vmatprep.subr.mxu0 0.0
    %v571 = vand.u32 %v110, 4294901760
    %v572 = vsub.f32 %v110, %v571
    %573 = vmatpush1.msra.mxu0 %v572
    %574 = vmatprep.subr.mxu0 0.0
    %v575 = vand.u32 %v109, 4294901760
    %v576 = vsub.f32 %v109, %v575
    %577 = vmatpush1.msra.mxu0 %v576
    %578 = vmatprep.subr.mxu0 0.0
    %v579 = vand.u32 %v108, 4294901760
    %v580 = vsub.f32 %v108, %v579
    %581 = vmatpush1.msra.mxu0 %v580
    %582 = vmatprep.subr.mxu0 0.0
    %v583 = vand.u32 %v107, 4294901760
    %v584 = vsub.f32 %v107, %v583
    %585 = vmatpush1.msra.mxu0 %v584
    %586 = vmatprep.subr.mxu0 0.0
    %v587 = vand.u32 %v106, 4294901760
    %v588 = vsub.f32 %v106, %v587
    %589 = vmatpush1.msra.mxu0 %v588
    %590 = vmatprep.subr.mxu0 0.0
    %v591 = vand.u32 %v105, 4294901760
    %v592 = vsub.f32 %v105, %v591
    %593 = vmatpush1.msra.mxu0 %v592
    %594 = vmatprep.subr.mxu0 0.0
    %v595 = vand.u32 %v104, 4294901760
    %v596 = vsub.f32 %v104, %v595
    %597 = vmatpush1.msra.mxu0 %v596
    %598 = vmatprep.subr.mxu0 0.0
    %v599 = vand.u32 %v103, 4294901760
    %v600 = vsub.f32 %v103, %v599
    %601 = vmatpush1.msra.mxu0 %v600
    %602 = vmatprep.subr.mxu0 0.0
    %v603 = vand.u32 %v102, 4294901760
    %v604 = vsub.f32 %v102, %v603
    %605 = vmatpush1.msra.mxu0 %v604
    %606 = vmatprep.subr.mxu0 0.0
    %v607 = vand.u32 %v101, 4294901760
    %v608 = vsub.f32 %v101, %v607
    %609 = vmatpush1.msra.mxu0 %v608
    %610 = vmatprep.subr.mxu0 0.0
    %v611 = vand.u32 %v100, 4294901760
    %v612 = vsub.f32 %v100, %v611
    %613 = vmatpush1.msra.mxu0 %v612
    %614 = vmatprep.subr.mxu0 0.0
    %v615 = vand.u32 %v99, 4294901760
    %v616 = vsub.f32 %v99, %v615
    %617 = vmatpush1.msra.mxu0 %v616
    %618 = vmatprep.subr.mxu0 0.0
    %v619 = vand.u32 %v98, 4294901760
    %v620 = vsub.f32 %v98, %v619
    %621 = vmatpush1.msra.mxu0 %v620
    %622 = vmatprep.subr.mxu0 0.0
    %v623 = vand.u32 %v97, 4294901760
    %v624 = vsub.f32 %v97, %v623
    %625 = vmatpush1.msra.mxu0 %v624
    %626 = vmatprep.subr.mxu0 0.0
    %v627 = vand.u32 %v128, 4294901760
    %v628 = vsub.f32 %v128, %v627
    %629 = vmatpush2.msra.mxu0 %v628
    %630 = vmatprep.subr.mxu0 0.0
    %v631 = vand.u32 %v127, 4294901760
    %v632 = vsub.f32 %v127, %v631
    %633 = vmatpush2.msra.mxu0 %v632
    %634 = vmatprep.subr.mxu0 0.0
    %v635 = vand.u32 %v126, 4294901760
    %v636 = vsub.f32 %v126, %v635
    %637 = vmatpush2.msra.mxu0 %v636
    %638 = vmatprep.subr.mxu0 0.0
    %v639 = vand.u32 %v125, 4294901760
    %v640 = vsub.f32 %v125, %v639
    %641 = vmatpush2.msra.mxu0 %v640
    %642 = vmatprep.subr.mxu0 0.0
    %v643 = vand.u32 %v124, 4294901760
    %v644 = vsub.f32 %v124, %v643
    %645 = vmatpush2.msra.mxu0 %v644
    %646 = vmatprep.subr.mxu0 0.0
    %v647 = vand.u32 %v123, 4294901760
    %v648 = vsub.f32 %v123, %v647
    %649 = vmatpush2.msra.mxu0 %v648
    %650 = vmatprep.subr.mxu0 0.0
    %v651 = vand.u32 %v122, 4294901760
    %v652 = vsub.f32 %v122, %v651
    %653 = vmatpush2.msra.mxu0 %v652
    %654 = vmatprep.subr.mxu0 0.0
    %v655 = vand.u32 %v121, 4294901760
    %v656 = vsub.f32 %v121, %v655
    %657 = vmatpush2.msra.mxu0 %v656
    %658 = vmatprep.subr.mxu0 0.0
    %v659 = vand.u32 %v120, 4294901760
    %v660 = vsub.f32 %v120, %v659
    %661 = vmatpush2.msra.mxu0 %v660
    %662 = vmatprep.subr.mxu0 0.0
    %v663 = vand.u32 %v119, 4294901760
    %v664 = vsub.f32 %v119, %v663
    %665 = vmatpush2.msra.mxu0 %v664
    %666 = vmatprep.subr.mxu0 0.0
    %v667 = vand.u32 %v118, 4294901760
    %v668 = vsub.f32 %v118, %v667
    %669 = vmatpush2.msra.mxu0 %v668
    %670 = vmatprep.subr.mxu0 0.0
    %v671 = vand.u32 %v117, 4294901760
    %v672 = vsub.f32 %v117, %v671
    %673 = vmatpush2.msra.mxu0 %v672
    %674 = vmatprep.subr.mxu0 0.0
    %v675 = vand.u32 %v116, 4294901760
    %v676 = vsub.f32 %v116, %v675
    %677 = vmatpush2.msra.mxu0 %v676
    %678 = vmatprep.subr.mxu0 0.0
    %v679 = vand.u32 %v115, 4294901760
    %v680 = vsub.f32 %v115, %v679
    %681 = vmatpush2.msra.mxu0 %v680
    %682 = vmatprep.subr.mxu0 0.0
    %v683 = vand.u32 %v114, 4294901760
    %v684 = vsub.f32 %v114, %v683
    %685 = vmatpush2.msra.mxu0 %v684
    %686 = vmatprep.subr.mxu0 0.0
    %v687 = vand.u32 %v113, 4294901760
    %v688 = vsub.f32 %v113, %v687
    %689 = vmatpush2.msra.mxu0 %v688
    %v690 = vand.u32 %v86, 4294901760
    %v691 = vsub.f32 %v86, %v690
    %692 = vmatprep.mubr.f32.mxu0 %v691
    %v693 = vand.u32 %v85, 4294901760
    %v694 = vsub.f32 %v85, %v693
    %695 = vmatmul.mubr.f32.gmra.mxu0 %v694
    %v696 = vpop.f32.mrf.mxu0
    %v697 = vadd.f32 %v538, %v696
    %v698 = vpop.f32.mrf.mxu0
    %v699 = vand.u32 %v89, 4294901760
    %v700 = vsub.f32 %v89, %v699
    %701 = vmatprep.mubr.f32.mxu0 %v700
    %v702 = vand.u32 %v88, 4294901760
    %v703 = vsub.f32 %v88, %v702
    %704 = vmatmul.mubr.f32.gmra.mxu0 %v703
    %v705 = vpop.f32.mrf.mxu0
    %v706 = vadd.f32 %v545, %v705
    %v707 = vpop.f32.mrf.mxu0
    %v708 = vand.u32 %v92, 4294901760
    %v709 = vsub.f32 %v92, %v708
    %710 = vmatprep.mubr.f32.mxu0 %v709
    %v711 = vand.u32 %v91, 4294901760
    %v712 = vsub.f32 %v91, %v711
    %713 = vmatmul.mubr.f32.gmra.mxu0 %v712
    %v714 = vpop.f32.mrf.mxu0
    %v715 = vadd.f32 %v552, %v714
    %v716 = vpop.f32.mrf.mxu0
    %v717 = vand.u32 %v95, 4294901760
    %v718 = vsub.f32 %v95, %v717
    %719 = vmatprep.mubr.f32.mxu0 %v718
    %v720 = vand.u32 %v94, 4294901760
    %v721 = vsub.f32 %v94, %v720
    %722 = vmatmul.mubr.f32.gmra.mxu0 %v721
    %v723 = vpop.f32.mrf.mxu0
    %v724 = vadd.f32 %v559, %v723
    %v725 = vpop.f32.mrf.mxu0
    %726 = vdwg.mxu0
    %727 = vmatprep.subr.mxu0 0.0
    %v728 = vand.u32 %v112, 4294901760
    %729 = vmatpush1.msra.mxu0 %v728
    %730 = vmatprep.subr.mxu0 0.0
    %v731 = vand.u32 %v111, 4294901760
    %732 = vmatpush1.msra.mxu0 %v731
    %733 = vmatprep.subr.mxu0 0.0
    %v734 = vand.u32 %v110, 4294901760
    %735 = vmatpush1.msra.mxu0 %v734
    %736 = vmatprep.subr.mxu0 0.0
    %v737 = vand.u32 %v109, 4294901760
    %738 = vmatpush1.msra.mxu0 %v737
    %739 = vmatprep.subr.mxu0 0.0
    %v740 = vand.u32 %v108, 4294901760
    %741 = vmatpush1.msra.mxu0 %v740
    %742 = vmatprep.subr.mxu0 0.0
    %v743 = vand.u32 %v107, 4294901760
    %744 = vmatpush1.msra.mxu0 %v743
    %745 = vmatprep.subr.mxu0 0.0
    %v746 = vand.u32 %v106, 4294901760
    %747 = vmatpush1.msra.mxu0 %v746
    %748 = vmatprep.subr.mxu0 0.0
    %v749 = vand.u32 %v105, 4294901760
    %750 = vmatpush1.msra.mxu0 %v749
    %751 = vmatprep.subr.mxu0 0.0
    %v752 = vand.u32 %v104, 4294901760
    %753 = vmatpush1.msra.mxu0 %v752
    %754 = vmatprep.subr.mxu0 0.0
    %v755 = vand.u32 %v103, 4294901760
    %756 = vmatpush1.msra.mxu0 %v755
    %757 = vmatprep.subr.mxu0 0.0
    %v758 = vand.u32 %v102, 4294901760
    %759 = vmatpush1.msra.mxu0 %v758
    %760 = vmatprep.subr.mxu0 0.0
    %v761 = vand.u32 %v101, 4294901760
    %762 = vmatpush1.msra.mxu0 %v761
    %763 = vmatprep.subr.mxu0 0.0
    %v764 = vand.u32 %v100, 4294901760
    %765 = vmatpush1.msra.mxu0 %v764
    %766 = vmatprep.subr.mxu0 0.0
    %v767 = vand.u32 %v99, 4294901760
    %768 = vmatpush1.msra.mxu0 %v767
    %769 = vmatprep.subr.mxu0 0.0
    %v770 = vand.u32 %v98, 4294901760
    %771 = vmatpush1.msra.mxu0 %v770
    %772 = vmatprep.subr.mxu0 0.0
    %v773 = vand.u32 %v97, 4294901760
    %774 = vmatpush1.msra.mxu0 %v773
    %775 = vmatprep.subr.mxu0 0.0
    %v776 = vand.u32 %v128, 4294901760
    %777 = vmatpush2.msra.mxu0 %v776
    %778 = vmatprep.subr.mxu0 0.0
    %v779 = vand.u32 %v127, 4294901760
    %780 = vmatpush2.msra.mxu0 %v779
    %781 = vmatprep.subr.mxu0 0.0
    %v782 = vand.u32 %v126, 4294901760
    %783 = vmatpush2.msra.mxu0 %v782
    %784 = vmatprep.subr.mxu0 0.0
    %v785 = vand.u32 %v125, 4294901760
    %786 = vmatpush2.msra.mxu0 %v785
    %787 = vmatprep.subr.mxu0 0.0
    %v788 = vand.u32 %v124, 4294901760
    %789 = vmatpush2.msra.mxu0 %v788
    %790 = vmatprep.subr.mxu0 0.0
    %v791 = vand.u32 %v123, 4294901760
    %792 = vmatpush2.msra.mxu0 %v791
    %793 = vmatprep.subr.mxu0 0.0
    %v794 = vand.u32 %v122, 4294901760
    %795 = vmatpush2.msra.mxu0 %v794
    %796 = vmatprep.subr.mxu0 0.0
    %v797 = vand.u32 %v121, 4294901760
    %798 = vmatpush2.msra.mxu0 %v797
    %799 = vmatprep.subr.mxu0 0.0
    %v800 = vand.u32 %v120, 4294901760
    %801 = vmatpush2.msra.mxu0 %v800
    %802 = vmatprep.subr.mxu0 0.0
    %v803 = vand.u32 %v119, 4294901760
    %804 = vmatpush2.msra.mxu0 %v803
    %805 = vmatprep.subr.mxu0 0.0
    %v806 = vand.u32 %v118, 4294901760
    %807 = vmatpush2.msra.mxu0 %v806
    %808 = vmatprep.subr.mxu0 0.0
    %v809 = vand.u32 %v117, 4294901760
    %810 = vmatpush2.msra.mxu0 %v809
    %811 = vmatprep.subr.mxu0 0.0
    %v812 = vand.u32 %v116, 4294901760
    %813 = vmatpush2.msra.mxu0 %v812
    %814 = vmatprep.subr.mxu0 0.0
    %v815 = vand.u32 %v115, 4294901760
    %816 = vmatpush2.msra.mxu0 %v815
    %817 = vmatprep.subr.mxu0 0.0
    %v818 = vand.u32 %v114, 4294901760
    %819 = vmatpush2.msra.mxu0 %v818
    %820 = vmatprep.subr.mxu0 0.0
    %v821 = vand.u32 %v113, 4294901760
    %822 = vmatpush2.msra.mxu0 %v821
    %v823 = vand.u32 %v86, 4294901760
    %v824 = vsub.f32 %v86, %v823
    %v825 = vand.u32 %v824, 4294901760
    %826 = vmatprep.mubr.f32.mxu0 %v825
    %v827 = vand.u32 %v85, 4294901760
    %v828 = vsub.f32 %v85, %v827
    %v829 = vand.u32 %v828, 4294901760
    %830 = vmatmul.mubr.f32.gmra.mxu0 %v829
    %v831 = vpop.f32.mrf.mxu0
    %v832 = vadd.f32 %v697, %v831
    %v833 = vpop.f32.mrf.mxu0
    %v834 = vand.u32 %v89, 4294901760
    %v835 = vsub.f32 %v89, %v834
    %v836 = vand.u32 %v835, 4294901760
    %837 = vmatprep.mubr.f32.mxu0 %v836
    %v838 = vand.u32 %v88, 4294901760
    %v839 = vsub.f32 %v88, %v838
    %v840 = vand.u32 %v839, 4294901760
    %841 = vmatmul.mubr.f32.gmra.mxu0 %v840
    %v842 = vpop.f32.mrf.mxu0
    %v843 = vadd.f32 %v706, %v842
    %v844 = vpop.f32.mrf.mxu0
    %v845 = vand.u32 %v92, 4294901760
    %v846 = vsub.f32 %v92, %v845
    %v847 = vand.u32 %v846, 4294901760
    %848 = vmatprep.mubr.f32.mxu0 %v847
    %v849 = vand.u32 %v91, 4294901760
    %v850 = vsub.f32 %v91, %v849
    %v851 = vand.u32 %v850, 4294901760
    %852 = vmatmul.mubr.f32.gmra.mxu0 %v851
    %v853 = vpop.f32.mrf.mxu0
    %v854 = vadd.f32 %v715, %v853
    %v855 = vpop.f32.mrf.mxu0
    %v856 = vand.u32 %v95, 4294901760
    %v857 = vsub.f32 %v95, %v856
    %v858 = vand.u32 %v857, 4294901760
    %859 = vmatprep.mubr.f32.mxu0 %v858
    %v860 = vand.u32 %v94, 4294901760
    %v861 = vsub.f32 %v94, %v860
    %v862 = vand.u32 %v861, 4294901760
    %863 = vmatmul.mubr.f32.gmra.mxu0 %v862
    %v864 = vpop.f32.mrf.mxu0
    %v865 = vadd.f32 %v724, %v864
    %v866 = vpop.f32.mrf.mxu0
    %867 = vdwg.mxu0
    %868 = vmatprep.subr.mxu0 0.0
    %v869 = vand.u32 %v112, 4294901760
    %v870 = vsub.f32 %v112, %v869
    %v871 = vand.u32 %v870, 4294901760
    %872 = vmatpush1.msra.mxu0 %v871
    %873 = vmatprep.subr.mxu0 0.0
    %v874 = vand.u32 %v111, 4294901760
    %v875 = vsub.f32 %v111, %v874
    %v876 = vand.u32 %v875, 4294901760
    %877 = vmatpush1.msra.mxu0 %v876
    %878 = vmatprep.subr.mxu0 0.0
    %v879 = vand.u32 %v110, 4294901760
    %v880 = vsub.f32 %v110, %v879
    %v881 = vand.u32 %v880, 4294901760
    %882 = vmatpush1.msra.mxu0 %v881
    %883 = vmatprep.subr.mxu0 0.0
    %v884 = vand.u32 %v109, 4294901760
    %v885 = vsub.f32 %v109, %v884
    %v886 = vand.u32 %v885, 4294901760
    %887 = vmatpush1.msra.mxu0 %v886
    %888 = vmatprep.subr.mxu0 0.0
    %v889 = vand.u32 %v108, 4294901760
    %v890 = vsub.f32 %v108, %v889
    %v891 = vand.u32 %v890, 4294901760
    %892 = vmatpush1.msra.mxu0 %v891
    %893 = vmatprep.subr.mxu0 0.0
    %v894 = vand.u32 %v107, 4294901760
    %v895 = vsub.f32 %v107, %v894
    %v896 = vand.u32 %v895, 4294901760
    %897 = vmatpush1.msra.mxu0 %v896
    %898 = vmatprep.subr.mxu0 0.0
    %v899 = vand.u32 %v106, 4294901760
    %v900 = vsub.f32 %v106, %v899
    %v901 = vand.u32 %v900, 4294901760
    %902 = vmatpush1.msra.mxu0 %v901
    %903 = vmatprep.subr.mxu0 0.0
    %v904 = vand.u32 %v105, 4294901760
    %v905 = vsub.f32 %v105, %v904
    %v906 = vand.u32 %v905, 4294901760
    %907 = vmatpush1.msra.mxu0 %v906
    %908 = vmatprep.subr.mxu0 0.0
    %v909 = vand.u32 %v104, 4294901760
    %v910 = vsub.f32 %v104, %v909
    %v911 = vand.u32 %v910, 4294901760
    %912 = vmatpush1.msra.mxu0 %v911
    %913 = vmatprep.subr.mxu0 0.0
    %v914 = vand.u32 %v103, 4294901760
    %v915 = vsub.f32 %v103, %v914
    %v916 = vand.u32 %v915, 4294901760
    %917 = vmatpush1.msra.mxu0 %v916
    %918 = vmatprep.subr.mxu0 0.0
    %v919 = vand.u32 %v102, 4294901760
    %v920 = vsub.f32 %v102, %v919
    %v921 = vand.u32 %v920, 4294901760
    %922 = vmatpush1.msra.mxu0 %v921
    %923 = vmatprep.subr.mxu0 0.0
    %v924 = vand.u32 %v101, 4294901760
    %v925 = vsub.f32 %v101, %v924
    %v926 = vand.u32 %v925, 4294901760
    %927 = vmatpush1.msra.mxu0 %v926
    %928 = vmatprep.subr.mxu0 0.0
    %v929 = vand.u32 %v100, 4294901760
    %v930 = vsub.f32 %v100, %v929
    %v931 = vand.u32 %v930, 4294901760
    %932 = vmatpush1.msra.mxu0 %v931
    %933 = vmatprep.subr.mxu0 0.0
    %v934 = vand.u32 %v99, 4294901760
    %v935 = vsub.f32 %v99, %v934
    %v936 = vand.u32 %v935, 4294901760
    %937 = vmatpush1.msra.mxu0 %v936
    %938 = vmatprep.subr.mxu0 0.0
    %v939 = vand.u32 %v98, 4294901760
    %v940 = vsub.f32 %v98, %v939
    %v941 = vand.u32 %v940, 4294901760
    %942 = vmatpush1.msra.mxu0 %v941
    %943 = vmatprep.subr.mxu0 0.0
    %v944 = vand.u32 %v97, 4294901760
    %v945 = vsub.f32 %v97, %v944
    %v946 = vand.u32 %v945, 4294901760
    %947 = vmatpush1.msra.mxu0 %v946
    %948 = vmatprep.subr.mxu0 0.0
    %v949 = vand.u32 %v128, 4294901760
    %v950 = vsub.f32 %v128, %v949
    %v951 = vand.u32 %v950, 4294901760
    %952 = vmatpush2.msra.mxu0 %v951
    %953 = vmatprep.subr.mxu0 0.0
    %v954 = vand.u32 %v127, 4294901760
    %v955 = vsub.f32 %v127, %v954
    %v956 = vand.u32 %v955, 4294901760
    %957 = vmatpush2.msra.mxu0 %v956
    %958 = vmatprep.subr.mxu0 0.0
    %v959 = vand.u32 %v126, 4294901760
    %v960 = vsub.f32 %v126, %v959
    %v961 = vand.u32 %v960, 4294901760
    %962 = vmatpush2.msra.mxu0 %v961
    %963 = vmatprep.subr.mxu0 0.0
    %v964 = vand.u32 %v125, 4294901760
    %v965 = vsub.f32 %v125, %v964
    %v966 = vand.u32 %v965, 4294901760
    %967 = vmatpush2.msra.mxu0 %v966
    %968 = vmatprep.subr.mxu0 0.0
    %v969 = vand.u32 %v124, 4294901760
    %v970 = vsub.f32 %v124, %v969
    %v971 = vand.u32 %v970, 4294901760
    %972 = vmatpush2.msra.mxu0 %v971
    %973 = vmatprep.subr.mxu0 0.0
    %v974 = vand.u32 %v123, 4294901760
    %v975 = vsub.f32 %v123, %v974
    %v976 = vand.u32 %v975, 4294901760
    %977 = vmatpush2.msra.mxu0 %v976
    %978 = vmatprep.subr.mxu0 0.0
    %v979 = vand.u32 %v122, 4294901760
    %v980 = vsub.f32 %v122, %v979
    %v981 = vand.u32 %v980, 4294901760
    %982 = vmatpush2.msra.mxu0 %v981
    %983 = vmatprep.subr.mxu0 0.0
    %v984 = vand.u32 %v121, 4294901760
    %v985 = vsub.f32 %v121, %v984
    %v986 = vand.u32 %v985, 4294901760
    %987 = vmatpush2.msra.mxu0 %v986
    %988 = vmatprep.subr.mxu0 0.0
    %v989 = vand.u32 %v120, 4294901760
    %v990 = vsub.f32 %v120, %v989
    %v991 = vand.u32 %v990, 4294901760
    %992 = vmatpush2.msra.mxu0 %v991
    %993 = vmatprep.subr.mxu0 0.0
    %v994 = vand.u32 %v119, 4294901760
    %v995 = vsub.f32 %v119, %v994
    %v996 = vand.u32 %v995, 4294901760
    %997 = vmatpush2.msra.mxu0 %v996
    %998 = vmatprep.subr.mxu0 0.0
    %v999 = vand.u32 %v118, 4294901760
    %v1000 = vsub.f32 %v118, %v999
    %v1001 = vand.u32 %v1000, 4294901760
    %1002 = vmatpush2.msra.mxu0 %v1001
    %1003 = vmatprep.subr.mxu0 0.0
    %v1004 = vand.u32 %v117, 4294901760
    %v1005 = vsub.f32 %v117, %v1004
    %v1006 = vand.u32 %v1005, 4294901760
    %1007 = vmatpush2.msra.mxu0 %v1006
    %1008 = vmatprep.subr.mxu0 0.0
    %v1009 = vand.u32 %v116, 4294901760
    %v1010 = vsub.f32 %v116, %v1009
    %v1011 = vand.u32 %v1010, 4294901760
    %1012 = vmatpush2.msra.mxu0 %v1011
    %1013 = vmatprep.subr.mxu0 0.0
    %v1014 = vand.u32 %v115, 4294901760
    %v1015 = vsub.f32 %v115, %v1014
    %v1016 = vand.u32 %v1015, 4294901760
    %1017 = vmatpush2.msra.mxu0 %v1016
    %1018 = vmatprep.subr.mxu0 0.0
    %v1019 = vand.u32 %v114, 4294901760
    %v1020 = vsub.f32 %v114, %v1019
    %v1021 = vand.u32 %v1020, 4294901760
    %1022 = vmatpush2.msra.mxu0 %v1021
    %1023 = vmatprep.subr.mxu0 0.0
    %v1024 = vand.u32 %v113, 4294901760
    %v1025 = vsub.f32 %v113, %v1024
    %v1026 = vand.u32 %v1025, 4294901760
    %1027 = vmatpush2.msra.mxu0 %v1026
    %v1028 = vand.u32 %v86, 4294901760
    %1029 = vmatprep.mubr.f32.mxu0 %v1028
    %v1030 = vand.u32 %v85, 4294901760
    %1031 = vmatmul.mubr.f32.gmra.mxu0 %v1030
    %v1032 = vpop.f32.mrf.mxu0
    %v1033 = vadd.f32 %v832, %v1032
    %v1034 = vpop.f32.mrf.mxu0
    %v1035 = vand.u32 %v89, 4294901760
    %1036 = vmatprep.mubr.f32.mxu0 %v1035
    %v1037 = vand.u32 %v88, 4294901760
    %1038 = vmatmul.mubr.f32.gmra.mxu0 %v1037
    %v1039 = vpop.f32.mrf.mxu0
    %v1040 = vadd.f32 %v843, %v1039
    %v1041 = vpop.f32.mrf.mxu0
    %v1042 = vand.u32 %v92, 4294901760
    %1043 = vmatprep.mubr.f32.mxu0 %v1042
    %v1044 = vand.u32 %v91, 4294901760
    %1045 = vmatmul.mubr.f32.gmra.mxu0 %v1044
    %v1046 = vpop.f32.mrf.mxu0
    %v1047 = vadd.f32 %v854, %v1046
    %v1048 = vpop.f32.mrf.mxu0
    %v1049 = vand.u32 %v95, 4294901760
    %1050 = vmatprep.mubr.f32.mxu0 %v1049
    %v1051 = vand.u32 %v94, 4294901760
    %1052 = vmatmul.mubr.f32.gmra.mxu0 %v1051
    %v1053 = vpop.f32.mrf.mxu0
    %v1054 = vadd.f32 %v865, %v1053
    %v1055 = vpop.f32.mrf.mxu0
    %1056 = vdwg.mxu0
    %1057 = vmatprep.subr.mxu0 0.0
    %v1058 = vand.u32 %v112, 4294901760
    %1059 = vmatpush1.msra.mxu0 %v1058
    %1060 = vmatprep.subr.mxu0 0.0
    %v1061 = vand.u32 %v111, 4294901760
    %1062 = vmatpush1.msra.mxu0 %v1061
    %1063 = vmatprep.subr.mxu0 0.0
    %v1064 = vand.u32 %v110, 4294901760
    %1065 = vmatpush1.msra.mxu0 %v1064
    %1066 = vmatprep.subr.mxu0 0.0
    %v1067 = vand.u32 %v109, 4294901760
    %1068 = vmatpush1.msra.mxu0 %v1067
    %1069 = vmatprep.subr.mxu0 0.0
    %v1070 = vand.u32 %v108, 4294901760
    %1071 = vmatpush1.msra.mxu0 %v1070
    %1072 = vmatprep.subr.mxu0 0.0
    %v1073 = vand.u32 %v107, 4294901760
    %1074 = vmatpush1.msra.mxu0 %v1073
    %1075 = vmatprep.subr.mxu0 0.0
    %v1076 = vand.u32 %v106, 4294901760
    %1077 = vmatpush1.msra.mxu0 %v1076
    %1078 = vmatprep.subr.mxu0 0.0
    %v1079 = vand.u32 %v105, 4294901760
    %1080 = vmatpush1.msra.mxu0 %v1079
    %1081 = vmatprep.subr.mxu0 0.0
    %v1082 = vand.u32 %v104, 4294901760
    %1083 = vmatpush1.msra.mxu0 %v1082
    %1084 = vmatprep.subr.mxu0 0.0
    %v1085 = vand.u32 %v103, 4294901760
    %1086 = vmatpush1.msra.mxu0 %v1085
    %1087 = vmatprep.subr.mxu0 0.0
    %v1088 = vand.u32 %v102, 4294901760
    %1089 = vmatpush1.msra.mxu0 %v1088
    %1090 = vmatprep.subr.mxu0 0.0
    %v1091 = vand.u32 %v101, 4294901760
    %1092 = vmatpush1.msra.mxu0 %v1091
    %1093 = vmatprep.subr.mxu0 0.0
    %v1094 = vand.u32 %v100, 4294901760
    %1095 = vmatpush1.msra.mxu0 %v1094
    %1096 = vmatprep.subr.mxu0 0.0
    %v1097 = vand.u32 %v99, 4294901760
    %1098 = vmatpush1.msra.mxu0 %v1097
    %1099 = vmatprep.subr.mxu0 0.0
    %v1100 = vand.u32 %v98, 4294901760
    %1101 = vmatpush1.msra.mxu0 %v1100
    %1102 = vmatprep.subr.mxu0 0.0
    %v1103 = vand.u32 %v97, 4294901760
    %1104 = vmatpush1.msra.mxu0 %v1103
    %1105 = vmatprep.subr.mxu0 0.0
    %v1106 = vand.u32 %v128, 4294901760
    %1107 = vmatpush2.msra.mxu0 %v1106
    %1108 = vmatprep.subr.mxu0 0.0
    %v1109 = vand.u32 %v127, 4294901760
    %1110 = vmatpush2.msra.mxu0 %v1109
    %1111 = vmatprep.subr.mxu0 0.0
    %v1112 = vand.u32 %v126, 4294901760
    %1113 = vmatpush2.msra.mxu0 %v1112
    %1114 = vmatprep.subr.mxu0 0.0
    %v1115 = vand.u32 %v125, 4294901760
    %1116 = vmatpush2.msra.mxu0 %v1115
    %1117 = vmatprep.subr.mxu0 0.0
    %v1118 = vand.u32 %v124, 4294901760
    %1119 = vmatpush2.msra.mxu0 %v1118
    %1120 = vmatprep.subr.mxu0 0.0
    %v1121 = vand.u32 %v123, 4294901760
    %1122 = vmatpush2.msra.mxu0 %v1121
    %1123 = vmatprep.subr.mxu0 0.0
    %v1124 = vand.u32 %v122, 4294901760
    %1125 = vmatpush2.msra.mxu0 %v1124
    %1126 = vmatprep.subr.mxu0 0.0
    %v1127 = vand.u32 %v121, 4294901760
    %1128 = vmatpush2.msra.mxu0 %v1127
    %1129 = vmatprep.subr.mxu0 0.0
    %v1130 = vand.u32 %v120, 4294901760
    %1131 = vmatpush2.msra.mxu0 %v1130
    %1132 = vmatprep.subr.mxu0 0.0
    %v1133 = vand.u32 %v119, 4294901760
    %1134 = vmatpush2.msra.mxu0 %v1133
    %1135 = vmatprep.subr.mxu0 0.0
    %v1136 = vand.u32 %v118, 4294901760
    %1137 = vmatpush2.msra.mxu0 %v1136
    %1138 = vmatprep.subr.mxu0 0.0
    %v1139 = vand.u32 %v117, 4294901760
    %1140 = vmatpush2.msra.mxu0 %v1139
    %1141 = vmatprep.subr.mxu0 0.0
    %v1142 = vand.u32 %v116, 4294901760
    %1143 = vmatpush2.msra.mxu0 %v1142
    %1144 = vmatprep.subr.mxu0 0.0
    %v1145 = vand.u32 %v115, 4294901760
    %1146 = vmatpush2.msra.mxu0 %v1145
    %1147 = vmatprep.subr.mxu0 0.0
    %v1148 = vand.u32 %v114, 4294901760
    %1149 = vmatpush2.msra.mxu0 %v1148
    %1150 = vmatprep.subr.mxu0 0.0
    %v1151 = vand.u32 %v113, 4294901760
    %1152 = vmatpush2.msra.mxu0 %v1151
    %v1153 = vand.u32 %v86, 4294901760
    %1154 = vmatprep.mubr.f32.mxu0 %v1153
    %v1155 = vand.u32 %v85, 4294901760
    %1156 = vmatmul.mubr.f32.gmra.mxu0 %v1155
    %v1157 = vpop.f32.mrf.mxu0
    %v1158 = vadd.f32 %v1033, %v1157
    %v1159 = vpop.f32.mrf.mxu0
    %v1160 = vand.u32 %v89, 4294901760
    %1161 = vmatprep.mubr.f32.mxu0 %v1160
    %v1162 = vand.u32 %v88, 4294901760
    %1163 = vmatmul.mubr.f32.gmra.mxu0 %v1162
    %v1164 = vpop.f32.mrf.mxu0
    %v1165 = vadd.f32 %v1040, %v1164
    %v1166 = vpop.f32.mrf.mxu0
    %v1167 = vand.u32 %v92, 4294901760
    %1168 = vmatprep.mubr.f32.mxu0 %v1167
    %v1169 = vand.u32 %v91, 4294901760
    %1170 = vmatmul.mubr.f32.gmra.mxu0 %v1169
    %v1171 = vpop.f32.mrf.mxu0
    %v1172 = vadd.f32 %v1047, %v1171
    %v1173 = vpop.f32.mrf.mxu0
    %v1174 = vand.u32 %v95, 4294901760
    %1175 = vmatprep.mubr.f32.mxu0 %v1174
    %v1176 = vand.u32 %v94, 4294901760
    %1177 = vmatmul.mubr.f32.gmra.mxu0 %v1176
    %v1178 = vpop.f32.mrf.mxu0
    %v1179 = vadd.f32 %v1054, %v1178
    %v1180 = vpop.f32.mrf.mxu0
    %1181 = vdwg.mxu0
    %1182 = vmatprep.subr.mxu0 0.0
    %v1183 = vand.u32 %v144, 4294901760
    %1184 = vmatpush1.msra.mxu0 %v1183
    %1185 = vmatprep.subr.mxu0 0.0
    %v1186 = vand.u32 %v143, 4294901760
    %1187 = vmatpush1.msra.mxu0 %v1186
    %1188 = vmatprep.subr.mxu0 0.0
    %v1189 = vand.u32 %v142, 4294901760
    %1190 = vmatpush1.msra.mxu0 %v1189
    %1191 = vmatprep.subr.mxu0 0.0
    %v1192 = vand.u32 %v141, 4294901760
    %1193 = vmatpush1.msra.mxu0 %v1192
    %1194 = vmatprep.subr.mxu0 0.0
    %v1195 = vand.u32 %v140, 4294901760
    %1196 = vmatpush1.msra.mxu0 %v1195
    %1197 = vmatprep.subr.mxu0 0.0
    %v1198 = vand.u32 %v139, 4294901760
    %1199 = vmatpush1.msra.mxu0 %v1198
    %1200 = vmatprep.subr.mxu0 0.0
    %v1201 = vand.u32 %v138, 4294901760
    %1202 = vmatpush1.msra.mxu0 %v1201
    %1203 = vmatprep.subr.mxu0 0.0
    %v1204 = vand.u32 %v137, 4294901760
    %1205 = vmatpush1.msra.mxu0 %v1204
    %1206 = vmatprep.subr.mxu0 0.0
    %v1207 = vand.u32 %v136, 4294901760
    %1208 = vmatpush1.msra.mxu0 %v1207
    %1209 = vmatprep.subr.mxu0 0.0
    %v1210 = vand.u32 %v135, 4294901760
    %1211 = vmatpush1.msra.mxu0 %v1210
    %1212 = vmatprep.subr.mxu0 0.0
    %v1213 = vand.u32 %v134, 4294901760
    %1214 = vmatpush1.msra.mxu0 %v1213
    %1215 = vmatprep.subr.mxu0 0.0
    %v1216 = vand.u32 %v133, 4294901760
    %1217 = vmatpush1.msra.mxu0 %v1216
    %1218 = vmatprep.subr.mxu0 0.0
    %v1219 = vand.u32 %v132, 4294901760
    %1220 = vmatpush1.msra.mxu0 %v1219
    %1221 = vmatprep.subr.mxu0 0.0
    %v1222 = vand.u32 %v131, 4294901760
    %1223 = vmatpush1.msra.mxu0 %v1222
    %1224 = vmatprep.subr.mxu0 0.0
    %v1225 = vand.u32 %v130, 4294901760
    %1226 = vmatpush1.msra.mxu0 %v1225
    %1227 = vmatprep.subr.mxu0 0.0
    %v1228 = vand.u32 %v129, 4294901760
    %1229 = vmatpush1.msra.mxu0 %v1228
    %1230 = vmatprep.subr.mxu0 0.0
    %1231 = vmatpush2.msra.mxu0 0.0
    %1232 = vmatprep.subr.mxu0 0.0
    %1233 = vmatpush2.msra.mxu0 0.0
    %1234 = vmatprep.subr.mxu0 0.0
    %1235 = vmatpush2.msra.mxu0 0.0
    %1236 = vmatprep.subr.mxu0 0.0
    %1237 = vmatpush2.msra.mxu0 0.0
    %1238 = vmatprep.subr.mxu0 0.0
    %1239 = vmatpush2.msra.mxu0 0.0
    %1240 = vmatprep.subr.mxu0 0.0
    %1241 = vmatpush2.msra.mxu0 0.0
    %1242 = vmatprep.subr.mxu0 0.0
    %1243 = vmatpush2.msra.mxu0 0.0
    %1244 = vmatprep.subr.mxu0 0.0
    %1245 = vmatpush2.msra.mxu0 0.0
    %1246 = vmatprep.subr.mxu0 0.0
    %1247 = vmatpush2.msra.mxu0 0.0
    %1248 = vmatprep.subr.mxu0 0.0
    %1249 = vmatpush2.msra.mxu0 0.0
    %1250 = vmatprep.subr.mxu0 0.0
    %1251 = vmatpush2.msra.mxu0 0.0
    %1252 = vmatprep.subr.mxu0 0.0
    %1253 = vmatpush2.msra.mxu0 0.0
    %1254 = vmatprep.subr.mxu0 0.0
    %1255 = vmatpush2.msra.mxu0 0.0
    %1256 = vmatprep.subr.mxu0 0.0
    %1257 = vmatpush2.msra.mxu0 0.0
    %1258 = vmatprep.subr.mxu0 0.0
    %1259 = vmatpush2.msra.mxu0 0.0
    %1260 = vmatprep.subr.mxu0 0.0
    %1261 = vmatpush2.msra.mxu0 0.0
    %1262 = vmatprep.mubr.f32.mxu0 0.0
    %v1263 = vand.u32 %v87, 4294901760
    %v1264 = vsub.f32 %v87, %v1263
    %v1265 = vand.u32 %v1264, 4294901760
    %v1266 = vsub.f32 %v1264, %v1265
    %v1267 = vand.u32 %v1266, 4294901760
    %1268 = vmatmul.mubr.f32.gmra.mxu0 %v1267
    %v1269 = vpop.f32.mrf.mxu0
    %v1270 = vadd.f32 %v1158, %v1269
    %v1271 = vpop.f32.mrf.mxu0
    %1272 = vmatprep.mubr.f32.mxu0 0.0
    %v1273 = vand.u32 %v90, 4294901760
    %v1274 = vsub.f32 %v90, %v1273
    %v1275 = vand.u32 %v1274, 4294901760
    %v1276 = vsub.f32 %v1274, %v1275
    %v1277 = vand.u32 %v1276, 4294901760
    %1278 = vmatmul.mubr.f32.gmra.mxu0 %v1277
    %v1279 = vpop.f32.mrf.mxu0
    %v1280 = vadd.f32 %v1165, %v1279
    %v1281 = vpop.f32.mrf.mxu0
    %1282 = vmatprep.mubr.f32.mxu0 0.0
    %v1283 = vand.u32 %v93, 4294901760
    %v1284 = vsub.f32 %v93, %v1283
    %v1285 = vand.u32 %v1284, 4294901760
    %v1286 = vsub.f32 %v1284, %v1285
    %v1287 = vand.u32 %v1286, 4294901760
    %1288 = vmatmul.mubr.f32.gmra.mxu0 %v1287
    %v1289 = vpop.f32.mrf.mxu0
    %v1290 = vadd.f32 %v1172, %v1289
    %v1291 = vpop.f32.mrf.mxu0
    %1292 = vmatprep.mubr.f32.mxu0 0.0
    %v1293 = vand.u32 %v96, 4294901760
    %v1294 = vsub.f32 %v96, %v1293
    %v1295 = vand.u32 %v1294, 4294901760
    %v1296 = vsub.f32 %v1294, %v1295
    %v1297 = vand.u32 %v1296, 4294901760
    %1298 = vmatmul.mubr.f32.gmra.mxu0 %v1297
    %v1299 = vpop.f32.mrf.mxu0
    %v1300 = vadd.f32 %v1179, %v1299
    %v1301 = vpop.f32.mrf.mxu0
    %1302 = vdwg.mxu0
    %1303 = vmatprep.subr.mxu0 0.0
    %v1304 = vand.u32 %v144, 4294901760
    %v1305 = vsub.f32 %v144, %v1304
    %v1306 = vand.u32 %v1305, 4294901760
    %v1307 = vsub.f32 %v1305, %v1306
    %v1308 = vand.u32 %v1307, 4294901760
    %1309 = vmatpush1.msra.mxu0 %v1308
    %1310 = vmatprep.subr.mxu0 0.0
    %v1311 = vand.u32 %v143, 4294901760
    %v1312 = vsub.f32 %v143, %v1311
    %v1313 = vand.u32 %v1312, 4294901760
    %v1314 = vsub.f32 %v1312, %v1313
    %v1315 = vand.u32 %v1314, 4294901760
    %1316 = vmatpush1.msra.mxu0 %v1315
    %1317 = vmatprep.subr.mxu0 0.0
    %v1318 = vand.u32 %v142, 4294901760
    %v1319 = vsub.f32 %v142, %v1318
    %v1320 = vand.u32 %v1319, 4294901760
    %v1321 = vsub.f32 %v1319, %v1320
    %v1322 = vand.u32 %v1321, 4294901760
    %1323 = vmatpush1.msra.mxu0 %v1322
    %1324 = vmatprep.subr.mxu0 0.0
    %v1325 = vand.u32 %v141, 4294901760
    %v1326 = vsub.f32 %v141, %v1325
    %v1327 = vand.u32 %v1326, 4294901760
    %v1328 = vsub.f32 %v1326, %v1327
    %v1329 = vand.u32 %v1328, 4294901760
    %1330 = vmatpush1.msra.mxu0 %v1329
    %1331 = vmatprep.subr.mxu0 0.0
    %v1332 = vand.u32 %v140, 4294901760
    %v1333 = vsub.f32 %v140, %v1332
    %v1334 = vand.u32 %v1333, 4294901760
    %v1335 = vsub.f32 %v1333, %v1334
    %v1336 = vand.u32 %v1335, 4294901760
    %1337 = vmatpush1.msra.mxu0 %v1336
    %1338 = vmatprep.subr.mxu0 0.0
    %v1339 = vand.u32 %v139, 4294901760
    %v1340 = vsub.f32 %v139, %v1339
    %v1341 = vand.u32 %v1340, 4294901760
    %v1342 = vsub.f32 %v1340, %v1341
    %v1343 = vand.u32 %v1342, 4294901760
    %1344 = vmatpush1.msra.mxu0 %v1343
    %1345 = vmatprep.subr.mxu0 0.0
    %v1346 = vand.u32 %v138, 4294901760
    %v1347 = vsub.f32 %v138, %v1346
    %v1348 = vand.u32 %v1347, 4294901760
    %v1349 = vsub.f32 %v1347, %v1348
    %v1350 = vand.u32 %v1349, 4294901760
    %1351 = vmatpush1.msra.mxu0 %v1350
    %1352 = vmatprep.subr.mxu0 0.0
    %v1353 = vand.u32 %v137, 4294901760
    %v1354 = vsub.f32 %v137, %v1353
    %v1355 = vand.u32 %v1354, 4294901760
    %v1356 = vsub.f32 %v1354, %v1355
    %v1357 = vand.u32 %v1356, 4294901760
    %1358 = vmatpush1.msra.mxu0 %v1357
    %1359 = vmatprep.subr.mxu0 0.0
    %v1360 = vand.u32 %v136, 4294901760
    %v1361 = vsub.f32 %v136, %v1360
    %v1362 = vand.u32 %v1361, 4294901760
    %v1363 = vsub.f32 %v1361, %v1362
    %v1364 = vand.u32 %v1363, 4294901760
    %1365 = vmatpush1.msra.mxu0 %v1364
    %1366 = vmatprep.subr.mxu0 0.0
    %v1367 = vand.u32 %v135, 4294901760
    %v1368 = vsub.f32 %v135, %v1367
    %v1369 = vand.u32 %v1368, 4294901760
    %v1370 = vsub.f32 %v1368, %v1369
    %v1371 = vand.u32 %v1370, 4294901760
    %1372 = vmatpush1.msra.mxu0 %v1371
    %1373 = vmatprep.subr.mxu0 0.0
    %v1374 = vand.u32 %v134, 4294901760
    %v1375 = vsub.f32 %v134, %v1374
    %v1376 = vand.u32 %v1375, 4294901760
    %v1377 = vsub.f32 %v1375, %v1376
    %v1378 = vand.u32 %v1377, 4294901760
    %1379 = vmatpush1.msra.mxu0 %v1378
    %1380 = vmatprep.subr.mxu0 0.0
    %v1381 = vand.u32 %v133, 4294901760
    %v1382 = vsub.f32 %v133, %v1381
    %v1383 = vand.u32 %v1382, 4294901760
    %v1384 = vsub.f32 %v1382, %v1383
    %v1385 = vand.u32 %v1384, 4294901760
    %1386 = vmatpush1.msra.mxu0 %v1385
    %1387 = vmatprep.subr.mxu0 0.0
    %v1388 = vand.u32 %v132, 4294901760
    %v1389 = vsub.f32 %v132, %v1388
    %v1390 = vand.u32 %v1389, 4294901760
    %v1391 = vsub.f32 %v1389, %v1390
    %v1392 = vand.u32 %v1391, 4294901760
    %1393 = vmatpush1.msra.mxu0 %v1392
    %1394 = vmatprep.subr.mxu0 0.0
    %v1395 = vand.u32 %v131, 4294901760
    %v1396 = vsub.f32 %v131, %v1395
    %v1397 = vand.u32 %v1396, 4294901760
    %v1398 = vsub.f32 %v1396, %v1397
    %v1399 = vand.u32 %v1398, 4294901760
    %1400 = vmatpush1.msra.mxu0 %v1399
    %1401 = vmatprep.subr.mxu0 0.0
    %v1402 = vand.u32 %v130, 4294901760
    %v1403 = vsub.f32 %v130, %v1402
    %v1404 = vand.u32 %v1403, 4294901760
    %v1405 = vsub.f32 %v1403, %v1404
    %v1406 = vand.u32 %v1405, 4294901760
    %1407 = vmatpush1.msra.mxu0 %v1406
    %1408 = vmatprep.subr.mxu0 0.0
    %v1409 = vand.u32 %v129, 4294901760
    %v1410 = vsub.f32 %v129, %v1409
    %v1411 = vand.u32 %v1410, 4294901760
    %v1412 = vsub.f32 %v1410, %v1411
    %v1413 = vand.u32 %v1412, 4294901760
    %1414 = vmatpush1.msra.mxu0 %v1413
    %1415 = vmatprep.subr.mxu0 0.0
    %1416 = vmatpush2.msra.mxu0 0.0
    %1417 = vmatprep.subr.mxu0 0.0
    %1418 = vmatpush2.msra.mxu0 0.0
    %1419 = vmatprep.subr.mxu0 0.0
    %1420 = vmatpush2.msra.mxu0 0.0
    %1421 = vmatprep.subr.mxu0 0.0
    %1422 = vmatpush2.msra.mxu0 0.0
    %1423 = vmatprep.subr.mxu0 0.0
    %1424 = vmatpush2.msra.mxu0 0.0
    %1425 = vmatprep.subr.mxu0 0.0
    %1426 = vmatpush2.msra.mxu0 0.0
    %1427 = vmatprep.subr.mxu0 0.0
    %1428 = vmatpush2.msra.mxu0 0.0
    %1429 = vmatprep.subr.mxu0 0.0
    %1430 = vmatpush2.msra.mxu0 0.0
    %1431 = vmatprep.subr.mxu0 0.0
    %1432 = vmatpush2.msra.mxu0 0.0
    %1433 = vmatprep.subr.mxu0 0.0
    %1434 = vmatpush2.msra.mxu0 0.0
    %1435 = vmatprep.subr.mxu0 0.0
    %1436 = vmatpush2.msra.mxu0 0.0
    %1437 = vmatprep.subr.mxu0 0.0
    %1438 = vmatpush2.msra.mxu0 0.0
    %1439 = vmatprep.subr.mxu0 0.0
    %1440 = vmatpush2.msra.mxu0 0.0
    %1441 = vmatprep.subr.mxu0 0.0
    %1442 = vmatpush2.msra.mxu0 0.0
    %1443 = vmatprep.subr.mxu0 0.0
    %1444 = vmatpush2.msra.mxu0 0.0
    %1445 = vmatprep.subr.mxu0 0.0
    %1446 = vmatpush2.msra.mxu0 0.0
    %1447 = vmatprep.mubr.f32.mxu0 0.0
    %v1448 = vand.u32 %v87, 4294901760
    %1449 = vmatmul.mubr.f32.gmra.mxu0 %v1448
    %v1450 = vpop.f32.mrf.mxu0
    %v1451 = vadd.f32 %v1270, %v1450
    %v1452 = vpop.f32.mrf.mxu0
    %1453 = vmatprep.mubr.f32.mxu0 0.0
    %v1454 = vand.u32 %v90, 4294901760
    %1455 = vmatmul.mubr.f32.gmra.mxu0 %v1454
    %v1456 = vpop.f32.mrf.mxu0
    %v1457 = vadd.f32 %v1280, %v1456
    %v1458 = vpop.f32.mrf.mxu0
    %1459 = vmatprep.mubr.f32.mxu0 0.0
    %v1460 = vand.u32 %v93, 4294901760
    %1461 = vmatmul.mubr.f32.gmra.mxu0 %v1460
    %v1462 = vpop.f32.mrf.mxu0
    %v1463 = vadd.f32 %v1290, %v1462
    %v1464 = vpop.f32.mrf.mxu0
    %1465 = vmatprep.mubr.f32.mxu0 0.0
    %v1466 = vand.u32 %v96, 4294901760
    %1467 = vmatmul.mubr.f32.gmra.mxu0 %v1466
    %v1468 = vpop.f32.mrf.mxu0
    %v1469 = vadd.f32 %v1300, %v1468
    %v1470 = vpop.f32.mrf.mxu0
    %1471 = vdwg.mxu0
    %1472 = vmatprep.subr.mxu0 0.0
    %v1473 = vand.u32 %v144, 4294901760
    %v1474 = vsub.f32 %v144, %v1473
    %1475 = vmatpush1.msra.mxu0 %v1474
    %1476 = vmatprep.subr.mxu0 0.0
    %v1477 = vand.u32 %v143, 4294901760
    %v1478 = vsub.f32 %v143, %v1477
    %1479 = vmatpush1.msra.mxu0 %v1478
    %1480 = vmatprep.subr.mxu0 0.0
    %v1481 = vand.u32 %v142, 4294901760
    %v1482 = vsub.f32 %v142, %v1481
    %1483 = vmatpush1.msra.mxu0 %v1482
    %1484 = vmatprep.subr.mxu0 0.0
    %v1485 = vand.u32 %v141, 4294901760
    %v1486 = vsub.f32 %v141, %v1485
    %1487 = vmatpush1.msra.mxu0 %v1486
    %1488 = vmatprep.subr.mxu0 0.0
    %v1489 = vand.u32 %v140, 4294901760
    %v1490 = vsub.f32 %v140, %v1489
    %1491 = vmatpush1.msra.mxu0 %v1490
    %1492 = vmatprep.subr.mxu0 0.0
    %v1493 = vand.u32 %v139, 4294901760
    %v1494 = vsub.f32 %v139, %v1493
    %1495 = vmatpush1.msra.mxu0 %v1494
    %1496 = vmatprep.subr.mxu0 0.0
    %v1497 = vand.u32 %v138, 4294901760
    %v1498 = vsub.f32 %v138, %v1497
    %1499 = vmatpush1.msra.mxu0 %v1498
    %1500 = vmatprep.subr.mxu0 0.0
    %v1501 = vand.u32 %v137, 4294901760
    %v1502 = vsub.f32 %v137, %v1501
    %1503 = vmatpush1.msra.mxu0 %v1502
    %1504 = vmatprep.subr.mxu0 0.0
    %v1505 = vand.u32 %v136, 4294901760
    %v1506 = vsub.f32 %v136, %v1505
    %1507 = vmatpush1.msra.mxu0 %v1506
    %1508 = vmatprep.subr.mxu0 0.0
    %v1509 = vand.u32 %v135, 4294901760
    %v1510 = vsub.f32 %v135, %v1509
    %1511 = vmatpush1.msra.mxu0 %v1510
    %1512 = vmatprep.subr.mxu0 0.0
    %v1513 = vand.u32 %v134, 4294901760
    %v1514 = vsub.f32 %v134, %v1513
    %1515 = vmatpush1.msra.mxu0 %v1514
    %1516 = vmatprep.subr.mxu0 0.0
    %v1517 = vand.u32 %v133, 4294901760
    %v1518 = vsub.f32 %v133, %v1517
    %1519 = vmatpush1.msra.mxu0 %v1518
    %1520 = vmatprep.subr.mxu0 0.0
    %v1521 = vand.u32 %v132, 4294901760
    %v1522 = vsub.f32 %v132, %v1521
    %1523 = vmatpush1.msra.mxu0 %v1522
    %1524 = vmatprep.subr.mxu0 0.0
    %v1525 = vand.u32 %v131, 4294901760
    %v1526 = vsub.f32 %v131, %v1525
    %1527 = vmatpush1.msra.mxu0 %v1526
    %1528 = vmatprep.subr.mxu0 0.0
    %v1529 = vand.u32 %v130, 4294901760
    %v1530 = vsub.f32 %v130, %v1529
    %1531 = vmatpush1.msra.mxu0 %v1530
    %1532 = vmatprep.subr.mxu0 0.0
    %v1533 = vand.u32 %v129, 4294901760
    %v1534 = vsub.f32 %v129, %v1533
    %1535 = vmatpush1.msra.mxu0 %v1534
    %1536 = vmatprep.subr.mxu0 0.0
    %1537 = vmatpush2.msra.mxu0 0.0
    %1538 = vmatprep.subr.mxu0 0.0
    %1539 = vmatpush2.msra.mxu0 0.0
    %1540 = vmatprep.subr.mxu0 0.0
    %1541 = vmatpush2.msra.mxu0 0.0
    %1542 = vmatprep.subr.mxu0 0.0
    %1543 = vmatpush2.msra.mxu0 0.0
    %1544 = vmatprep.subr.mxu0 0.0
    %1545 = vmatpush2.msra.mxu0 0.0
    %1546 = vmatprep.subr.mxu0 0.0
    %1547 = vmatpush2.msra.mxu0 0.0
    %1548 = vmatprep.subr.mxu0 0.0
    %1549 = vmatpush2.msra.mxu0 0.0
    %1550 = vmatprep.subr.mxu0 0.0
    %1551 = vmatpush2.msra.mxu0 0.0
    %1552 = vmatprep.subr.mxu0 0.0
    %1553 = vmatpush2.msra.mxu0 0.0
    %1554 = vmatprep.subr.mxu0 0.0
    %1555 = vmatpush2.msra.mxu0 0.0
    %1556 = vmatprep.subr.mxu0 0.0
    %1557 = vmatpush2.msra.mxu0 0.0
    %1558 = vmatprep.subr.mxu0 0.0
    %1559 = vmatpush2.msra.mxu0 0.0
    %1560 = vmatprep.subr.mxu0 0.0
    %1561 = vmatpush2.msra.mxu0 0.0
    %1562 = vmatprep.subr.mxu0 0.0
    %1563 = vmatpush2.msra.mxu0 0.0
    %1564 = vmatprep.subr.mxu0 0.0
    %1565 = vmatpush2.msra.mxu0 0.0
    %1566 = vmatprep.subr.mxu0 0.0
    %1567 = vmatpush2.msra.mxu0 0.0
    %1568 = vmatprep.mubr.f32.mxu0 0.0
    %v1569 = vand.u32 %v87, 4294901760
    %v1570 = vsub.f32 %v87, %v1569
    %1571 = vmatmul.mubr.f32.gmra.mxu0 %v1570
    %v1572 = vpop.f32.mrf.mxu0
    %v1573 = vadd.f32 %v1451, %v1572
    %v1574 = vpop.f32.mrf.mxu0
    %1575 = vmatprep.mubr.f32.mxu0 0.0
    %v1576 = vand.u32 %v90, 4294901760
    %v1577 = vsub.f32 %v90, %v1576
    %1578 = vmatmul.mubr.f32.gmra.mxu0 %v1577
    %v1579 = vpop.f32.mrf.mxu0
    %v1580 = vadd.f32 %v1457, %v1579
    %v1581 = vpop.f32.mrf.mxu0
    %1582 = vmatprep.mubr.f32.mxu0 0.0
    %v1583 = vand.u32 %v93, 4294901760
    %v1584 = vsub.f32 %v93, %v1583
    %1585 = vmatmul.mubr.f32.gmra.mxu0 %v1584
    %v1586 = vpop.f32.mrf.mxu0
    %v1587 = vadd.f32 %v1463, %v1586
    %v1588 = vpop.f32.mrf.mxu0
    %1589 = vmatprep.mubr.f32.mxu0 0.0
    %v1590 = vand.u32 %v96, 4294901760
    %v1591 = vsub.f32 %v96, %v1590
    %1592 = vmatmul.mubr.f32.gmra.mxu0 %v1591
    %v1593 = vpop.f32.mrf.mxu0
    %v1594 = vadd.f32 %v1469, %v1593
    %v1595 = vpop.f32.mrf.mxu0
    %1596 = vdwg.mxu0
    %1597 = vmatprep.subr.mxu0 0.0
    %v1598 = vand.u32 %v144, 4294901760
    %1599 = vmatpush1.msra.mxu0 %v1598
    %1600 = vmatprep.subr.mxu0 0.0
    %v1601 = vand.u32 %v143, 4294901760
    %1602 = vmatpush1.msra.mxu0 %v1601
    %1603 = vmatprep.subr.mxu0 0.0
    %v1604 = vand.u32 %v142, 4294901760
    %1605 = vmatpush1.msra.mxu0 %v1604
    %1606 = vmatprep.subr.mxu0 0.0
    %v1607 = vand.u32 %v141, 4294901760
    %1608 = vmatpush1.msra.mxu0 %v1607
    %1609 = vmatprep.subr.mxu0 0.0
    %v1610 = vand.u32 %v140, 4294901760
    %1611 = vmatpush1.msra.mxu0 %v1610
    %1612 = vmatprep.subr.mxu0 0.0
    %v1613 = vand.u32 %v139, 4294901760
    %1614 = vmatpush1.msra.mxu0 %v1613
    %1615 = vmatprep.subr.mxu0 0.0
    %v1616 = vand.u32 %v138, 4294901760
    %1617 = vmatpush1.msra.mxu0 %v1616
    %1618 = vmatprep.subr.mxu0 0.0
    %v1619 = vand.u32 %v137, 4294901760
    %1620 = vmatpush1.msra.mxu0 %v1619
    %1621 = vmatprep.subr.mxu0 0.0
    %v1622 = vand.u32 %v136, 4294901760
    %1623 = vmatpush1.msra.mxu0 %v1622
    %1624 = vmatprep.subr.mxu0 0.0
    %v1625 = vand.u32 %v135, 4294901760
    %1626 = vmatpush1.msra.mxu0 %v1625
    %1627 = vmatprep.subr.mxu0 0.0
    %v1628 = vand.u32 %v134, 4294901760
    %1629 = vmatpush1.msra.mxu0 %v1628
    %1630 = vmatprep.subr.mxu0 0.0
    %v1631 = vand.u32 %v133, 4294901760
    %1632 = vmatpush1.msra.mxu0 %v1631
    %1633 = vmatprep.subr.mxu0 0.0
    %v1634 = vand.u32 %v132, 4294901760
    %1635 = vmatpush1.msra.mxu0 %v1634
    %1636 = vmatprep.subr.mxu0 0.0
    %v1637 = vand.u32 %v131, 4294901760
    %1638 = vmatpush1.msra.mxu0 %v1637
    %1639 = vmatprep.subr.mxu0 0.0
    %v1640 = vand.u32 %v130, 4294901760
    %1641 = vmatpush1.msra.mxu0 %v1640
    %1642 = vmatprep.subr.mxu0 0.0
    %v1643 = vand.u32 %v129, 4294901760
    %1644 = vmatpush1.msra.mxu0 %v1643
    %1645 = vmatprep.subr.mxu0 0.0
    %1646 = vmatpush2.msra.mxu0 0.0
    %1647 = vmatprep.subr.mxu0 0.0
    %1648 = vmatpush2.msra.mxu0 0.0
    %1649 = vmatprep.subr.mxu0 0.0
    %1650 = vmatpush2.msra.mxu0 0.0
    %1651 = vmatprep.subr.mxu0 0.0
    %1652 = vmatpush2.msra.mxu0 0.0
    %1653 = vmatprep.subr.mxu0 0.0
    %1654 = vmatpush2.msra.mxu0 0.0
    %1655 = vmatprep.subr.mxu0 0.0
    %1656 = vmatpush2.msra.mxu0 0.0
    %1657 = vmatprep.subr.mxu0 0.0
    %1658 = vmatpush2.msra.mxu0 0.0
    %1659 = vmatprep.subr.mxu0 0.0
    %1660 = vmatpush2.msra.mxu0 0.0
    %1661 = vmatprep.subr.mxu0 0.0
    %1662 = vmatpush2.msra.mxu0 0.0
    %1663 = vmatprep.subr.mxu0 0.0
    %1664 = vmatpush2.msra.mxu0 0.0
    %1665 = vmatprep.subr.mxu0 0.0
    %1666 = vmatpush2.msra.mxu0 0.0
    %1667 = vmatprep.subr.mxu0 0.0
    %1668 = vmatpush2.msra.mxu0 0.0
    %1669 = vmatprep.subr.mxu0 0.0
    %1670 = vmatpush2.msra.mxu0 0.0
    %1671 = vmatprep.subr.mxu0 0.0
    %1672 = vmatpush2.msra.mxu0 0.0
    %1673 = vmatprep.subr.mxu0 0.0
    %1674 = vmatpush2.msra.mxu0 0.0
    %1675 = vmatprep.subr.mxu0 0.0
    %1676 = vmatpush2.msra.mxu0 0.0
    %1677 = vmatprep.mubr.f32.mxu0 0.0
    %v1678 = vand.u32 %v87, 4294901760
    %v1679 = vsub.f32 %v87, %v1678
    %v1680 = vand.u32 %v1679, 4294901760
    %1681 = vmatmul.mubr.f32.gmra.mxu0 %v1680
    %v1682 = vpop.f32.mrf.mxu0
    %v1683 = vadd.f32 %v1573, %v1682
    %v1684 = vpop.f32.mrf.mxu0
    %1685 = vmatprep.mubr.f32.mxu0 0.0
    %v1686 = vand.u32 %v90, 4294901760
    %v1687 = vsub.f32 %v90, %v1686
    %v1688 = vand.u32 %v1687, 4294901760
    %1689 = vmatmul.mubr.f32.gmra.mxu0 %v1688
    %v1690 = vpop.f32.mrf.mxu0
    %v1691 = vadd.f32 %v1580, %v1690
    %v1692 = vpop.f32.mrf.mxu0
    %1693 = vmatprep.mubr.f32.mxu0 0.0
    %v1694 = vand.u32 %v93, 4294901760
    %v1695 = vsub.f32 %v93, %v1694
    %v1696 = vand.u32 %v1695, 4294901760
    %1697 = vmatmul.mubr.f32.gmra.mxu0 %v1696
    %v1698 = vpop.f32.mrf.mxu0
    %v1699 = vadd.f32 %v1587, %v1698
    %v1700 = vpop.f32.mrf.mxu0
    %1701 = vmatprep.mubr.f32.mxu0 0.0
    %v1702 = vand.u32 %v96, 4294901760
    %v1703 = vsub.f32 %v96, %v1702
    %v1704 = vand.u32 %v1703, 4294901760
    %1705 = vmatmul.mubr.f32.gmra.mxu0 %v1704
    %v1706 = vpop.f32.mrf.mxu0
    %v1707 = vadd.f32 %v1594, %v1706
    %v1708 = vpop.f32.mrf.mxu0
    %1709 = vdwg.mxu0
    %1710 = vmatprep.subr.mxu0 0.0
    %v1711 = vand.u32 %v144, 4294901760
    %v1712 = vsub.f32 %v144, %v1711
    %v1713 = vand.u32 %v1712, 4294901760
    %1714 = vmatpush1.msra.mxu0 %v1713
    %1715 = vmatprep.subr.mxu0 0.0
    %v1716 = vand.u32 %v143, 4294901760
    %v1717 = vsub.f32 %v143, %v1716
    %v1718 = vand.u32 %v1717, 4294901760
    %1719 = vmatpush1.msra.mxu0 %v1718
    %1720 = vmatprep.subr.mxu0 0.0
    %v1721 = vand.u32 %v142, 4294901760
    %v1722 = vsub.f32 %v142, %v1721
    %v1723 = vand.u32 %v1722, 4294901760
    %1724 = vmatpush1.msra.mxu0 %v1723
    %1725 = vmatprep.subr.mxu0 0.0
    %v1726 = vand.u32 %v141, 4294901760
    %v1727 = vsub.f32 %v141, %v1726
    %v1728 = vand.u32 %v1727, 4294901760
    %1729 = vmatpush1.msra.mxu0 %v1728
    %1730 = vmatprep.subr.mxu0 0.0
    %v1731 = vand.u32 %v140, 4294901760
    %v1732 = vsub.f32 %v140, %v1731
    %v1733 = vand.u32 %v1732, 4294901760
    %1734 = vmatpush1.msra.mxu0 %v1733
    %1735 = vmatprep.subr.mxu0 0.0
    %v1736 = vand.u32 %v139, 4294901760
    %v1737 = vsub.f32 %v139, %v1736
    %v1738 = vand.u32 %v1737, 4294901760
    %1739 = vmatpush1.msra.mxu0 %v1738
    %1740 = vmatprep.subr.mxu0 0.0
    %v1741 = vand.u32 %v138, 4294901760
    %v1742 = vsub.f32 %v138, %v1741
    %v1743 = vand.u32 %v1742, 4294901760
    %1744 = vmatpush1.msra.mxu0 %v1743
    %1745 = vmatprep.subr.mxu0 0.0
    %v1746 = vand.u32 %v137, 4294901760
    %v1747 = vsub.f32 %v137, %v1746
    %v1748 = vand.u32 %v1747, 4294901760
    %1749 = vmatpush1.msra.mxu0 %v1748
    %1750 = vmatprep.subr.mxu0 0.0
    %v1751 = vand.u32 %v136, 4294901760
    %v1752 = vsub.f32 %v136, %v1751
    %v1753 = vand.u32 %v1752, 4294901760
    %1754 = vmatpush1.msra.mxu0 %v1753
    %1755 = vmatprep.subr.mxu0 0.0
    %v1756 = vand.u32 %v135, 4294901760
    %v1757 = vsub.f32 %v135, %v1756
    %v1758 = vand.u32 %v1757, 4294901760
    %1759 = vmatpush1.msra.mxu0 %v1758
    %1760 = vmatprep.subr.mxu0 0.0
    %v1761 = vand.u32 %v134, 4294901760
    %v1762 = vsub.f32 %v134, %v1761
    %v1763 = vand.u32 %v1762, 4294901760
    %1764 = vmatpush1.msra.mxu0 %v1763
    %1765 = vmatprep.subr.mxu0 0.0
    %v1766 = vand.u32 %v133, 4294901760
    %v1767 = vsub.f32 %v133, %v1766
    %v1768 = vand.u32 %v1767, 4294901760
    %1769 = vmatpush1.msra.mxu0 %v1768
    %1770 = vmatprep.subr.mxu0 0.0
    %v1771 = vand.u32 %v132, 4294901760
    %v1772 = vsub.f32 %v132, %v1771
    %v1773 = vand.u32 %v1772, 4294901760
    %1774 = vmatpush1.msra.mxu0 %v1773
    %1775 = vmatprep.subr.mxu0 0.0
    %v1776 = vand.u32 %v131, 4294901760
    %v1777 = vsub.f32 %v131, %v1776
    %v1778 = vand.u32 %v1777, 4294901760
    %1779 = vmatpush1.msra.mxu0 %v1778
    %1780 = vmatprep.subr.mxu0 0.0
    %v1781 = vand.u32 %v130, 4294901760
    %v1782 = vsub.f32 %v130, %v1781
    %v1783 = vand.u32 %v1782, 4294901760
    %1784 = vmatpush1.msra.mxu0 %v1783
    %1785 = vmatprep.subr.mxu0 0.0
    %v1786 = vand.u32 %v129, 4294901760
    %v1787 = vsub.f32 %v129, %v1786
    %v1788 = vand.u32 %v1787, 4294901760
    %1789 = vmatpush1.msra.mxu0 %v1788
    %1790 = vmatprep.subr.mxu0 0.0
    %1791 = vmatpush2.msra.mxu0 0.0
    %1792 = vmatprep.subr.mxu0 0.0
    %1793 = vmatpush2.msra.mxu0 0.0
    %1794 = vmatprep.subr.mxu0 0.0
    %1795 = vmatpush2.msra.mxu0 0.0
    %1796 = vmatprep.subr.mxu0 0.0
    %1797 = vmatpush2.msra.mxu0 0.0
    %1798 = vmatprep.subr.mxu0 0.0
    %1799 = vmatpush2.msra.mxu0 0.0
    %1800 = vmatprep.subr.mxu0 0.0
    %1801 = vmatpush2.msra.mxu0 0.0
    %1802 = vmatprep.subr.mxu0 0.0
    %1803 = vmatpush2.msra.mxu0 0.0
    %1804 = vmatprep.subr.mxu0 0.0
    %1805 = vmatpush2.msra.mxu0 0.0
    %1806 = vmatprep.subr.mxu0 0.0
    %1807 = vmatpush2.msra.mxu0 0.0
    %1808 = vmatprep.subr.mxu0 0.0
    %1809 = vmatpush2.msra.mxu0 0.0
    %1810 = vmatprep.subr.mxu0 0.0
    %1811 = vmatpush2.msra.mxu0 0.0
    %1812 = vmatprep.subr.mxu0 0.0
    %1813 = vmatpush2.msra.mxu0 0.0
    %1814 = vmatprep.subr.mxu0 0.0
    %1815 = vmatpush2.msra.mxu0 0.0
    %1816 = vmatprep.subr.mxu0 0.0
    %1817 = vmatpush2.msra.mxu0 0.0
    %1818 = vmatprep.subr.mxu0 0.0
    %1819 = vmatpush2.msra.mxu0 0.0
    %1820 = vmatprep.subr.mxu0 0.0
    %1821 = vmatpush2.msra.mxu0 0.0
    %1822 = vmatprep.mubr.f32.mxu0 0.0
    %v1823 = vand.u32 %v87, 4294901760
    %1824 = vmatmul.mubr.f32.gmra.mxu0 %v1823
    %v1825 = vpop.f32.mrf.mxu0
    %v1826 = vadd.f32 %v1683, %v1825
    %v1827 = vpop.f32.mrf.mxu0
    %1828 = vmatprep.mubr.f32.mxu0 0.0
    %v1829 = vand.u32 %v90, 4294901760
    %1830 = vmatmul.mubr.f32.gmra.mxu0 %v1829
    %v1831 = vpop.f32.mrf.mxu0
    %v1832 = vadd.f32 %v1691, %v1831
    %v1833 = vpop.f32.mrf.mxu0
    %1834 = vmatprep.mubr.f32.mxu0 0.0
    %v1835 = vand.u32 %v93, 4294901760
    %1836 = vmatmul.mubr.f32.gmra.mxu0 %v1835
    %v1837 = vpop.f32.mrf.mxu0
    %v1838 = vadd.f32 %v1699, %v1837
    %v1839 = vpop.f32.mrf.mxu0
    %1840 = vmatprep.mubr.f32.mxu0 0.0
    %v1841 = vand.u32 %v96, 4294901760
    %1842 = vmatmul.mubr.f32.gmra.mxu0 %v1841
    %v1843 = vpop.f32.mrf.mxu0
    %v1844 = vadd.f32 %v1707, %v1843
    %v1845 = vpop.f32.mrf.mxu0
    %1846 = vdwg.mxu0
    %1847 = vmatprep.subr.mxu0 0.0
    %v1848 = vand.u32 %v144, 4294901760
    %1849 = vmatpush1.msra.mxu0 %v1848
    %1850 = vmatprep.subr.mxu0 0.0
    %v1851 = vand.u32 %v143, 4294901760
    %1852 = vmatpush1.msra.mxu0 %v1851
    %1853 = vmatprep.subr.mxu0 0.0
    %v1854 = vand.u32 %v142, 4294901760
    %1855 = vmatpush1.msra.mxu0 %v1854
    %1856 = vmatprep.subr.mxu0 0.0
    %v1857 = vand.u32 %v141, 4294901760
    %1858 = vmatpush1.msra.mxu0 %v1857
    %1859 = vmatprep.subr.mxu0 0.0
    %v1860 = vand.u32 %v140, 4294901760
    %1861 = vmatpush1.msra.mxu0 %v1860
    %1862 = vmatprep.subr.mxu0 0.0
    %v1863 = vand.u32 %v139, 4294901760
    %1864 = vmatpush1.msra.mxu0 %v1863
    %1865 = vmatprep.subr.mxu0 0.0
    %v1866 = vand.u32 %v138, 4294901760
    %1867 = vmatpush1.msra.mxu0 %v1866
    %1868 = vmatprep.subr.mxu0 0.0
    %v1869 = vand.u32 %v137, 4294901760
    %1870 = vmatpush1.msra.mxu0 %v1869
    %1871 = vmatprep.subr.mxu0 0.0
    %v1872 = vand.u32 %v136, 4294901760
    %1873 = vmatpush1.msra.mxu0 %v1872
    %1874 = vmatprep.subr.mxu0 0.0
    %v1875 = vand.u32 %v135, 4294901760
    %1876 = vmatpush1.msra.mxu0 %v1875
    %1877 = vmatprep.subr.mxu0 0.0
    %v1878 = vand.u32 %v134, 4294901760
    %1879 = vmatpush1.msra.mxu0 %v1878
    %1880 = vmatprep.subr.mxu0 0.0
    %v1881 = vand.u32 %v133, 4294901760
    %1882 = vmatpush1.msra.mxu0 %v1881
    %1883 = vmatprep.subr.mxu0 0.0
    %v1884 = vand.u32 %v132, 4294901760
    %1885 = vmatpush1.msra.mxu0 %v1884
    %1886 = vmatprep.subr.mxu0 0.0
    %v1887 = vand.u32 %v131, 4294901760
    %1888 = vmatpush1.msra.mxu0 %v1887
    %1889 = vmatprep.subr.mxu0 0.0
    %v1890 = vand.u32 %v130, 4294901760
    %1891 = vmatpush1.msra.mxu0 %v1890
    %1892 = vmatprep.subr.mxu0 0.0
    %v1893 = vand.u32 %v129, 4294901760
    %1894 = vmatpush1.msra.mxu0 %v1893
    %1895 = vmatprep.subr.mxu0 0.0
    %1896 = vmatpush2.msra.mxu0 0.0
    %1897 = vmatprep.subr.mxu0 0.0
    %1898 = vmatpush2.msra.mxu0 0.0
    %1899 = vmatprep.subr.mxu0 0.0
    %1900 = vmatpush2.msra.mxu0 0.0
    %1901 = vmatprep.subr.mxu0 0.0
    %1902 = vmatpush2.msra.mxu0 0.0
    %1903 = vmatprep.subr.mxu0 0.0
    %1904 = vmatpush2.msra.mxu0 0.0
    %1905 = vmatprep.subr.mxu0 0.0
    %1906 = vmatpush2.msra.mxu0 0.0
    %1907 = vmatprep.subr.mxu0 0.0
    %1908 = vmatpush2.msra.mxu0 0.0
    %1909 = vmatprep.subr.mxu0 0.0
    %1910 = vmatpush2.msra.mxu0 0.0
    %1911 = vmatprep.subr.mxu0 0.0
    %1912 = vmatpush2.msra.mxu0 0.0
    %1913 = vmatprep.subr.mxu0 0.0
    %1914 = vmatpush2.msra.mxu0 0.0
    %1915 = vmatprep.subr.mxu0 0.0
    %1916 = vmatpush2.msra.mxu0 0.0
    %1917 = vmatprep.subr.mxu0 0.0
    %1918 = vmatpush2.msra.mxu0 0.0
    %1919 = vmatprep.subr.mxu0 0.0
    %1920 = vmatpush2.msra.mxu0 0.0
    %1921 = vmatprep.subr.mxu0 0.0
    %1922 = vmatpush2.msra.mxu0 0.0
    %1923 = vmatprep.subr.mxu0 0.0
    %1924 = vmatpush2.msra.mxu0 0.0
    %1925 = vmatprep.subr.mxu0 0.0
    %1926 = vmatpush2.msra.mxu0 0.0
    %1927 = vmatprep.mubr.f32.mxu0 0.0
    %v1928 = vand.u32 %v87, 4294901760
    %1929 = vmatmul.mubr.f32.gmra.mxu0 %v1928
    %v1930 = vpop.f32.mrf.mxu0
    %v1931 = vadd.f32 %v1826, %v1930
    %v1932 = vpop.f32.mrf.mxu0
    %1933 = vmatprep.mubr.f32.mxu0 0.0
    %v1934 = vand.u32 %v90, 4294901760
    %1935 = vmatmul.mubr.f32.gmra.mxu0 %v1934
    %v1936 = vpop.f32.mrf.mxu0
    %v1937 = vadd.f32 %v1832, %v1936
    %v1938 = vpop.f32.mrf.mxu0
    %1939 = vmatprep.mubr.f32.mxu0 0.0
    %v1940 = vand.u32 %v93, 4294901760
    %1941 = vmatmul.mubr.f32.gmra.mxu0 %v1940
    %v1942 = vpop.f32.mrf.mxu0
    %v1943 = vadd.f32 %v1838, %v1942
    %v1944 = vpop.f32.mrf.mxu0
    %1945 = vmatprep.mubr.f32.mxu0 0.0
    %v1946 = vand.u32 %v96, 4294901760
    %1947 = vmatmul.mubr.f32.gmra.mxu0 %v1946
    %v1948 = vpop.f32.mrf.mxu0
    %v1949 = vadd.f32 %v1844, %v1948
    %v1950 = vpop.f32.mrf.mxu0
    %1951 = vdwg.mxu0
    %v1952 = vmax.f32 %v1931, 0.0
    %v1953 = vmax.f32 %v1937, 0.0
    %v1954 = vmax.f32 %v1943, 0.0
    %v1955 = vmax.f32 %v1949, 0.0
    %vm1956 = vcmp.lt.s32.totalorder %v83, 8
    %vm1957 = vcmp.lt.s32.totalorder %v84, 8
    %v1958 = vsel %vm1956, 1, 0
    %v1959 = vsel %vm1957, 1, 0
    %vm1960 = vcmp.eq.s32.totalorder %v1958, 1
    %vm1961 = vcmp.eq.s32.totalorder %v1959, 1
    %v1962 = vsel %vm1960, %v1952, 0.0
    %v1963 = vsel %vm1961, %v1953, 0.0
    %v1964 = vsel %vm1960, %v1954, 0.0
    %v1965 = vsel %vm1961, %v1955, 0.0
    %v1966 = vrot.slane %v1962, 7
    %v1967 = vrot.slane %v1964, 7
    %v1968 = vrot.slane %v1963, 7
    %v1969 = vrot.slane %v1965, 7
    %vm1970 = vcmp.lt.s32.totalorder %v83, 1
    %v1971 = vsel %vm1970, %v1966, %v1968
    %v1972 = vsel %vm1970, %v1967, %v1969
    %v1973 = vsel %vm1970, %v1968, %v1966
    %v1974 = vsel %vm1970, %v1969, %v1967
    %v1975 = vrot.slane %v1962, 1
    %v1976 = vrot.slane %v1964, 1
    %v1977 = vrot.slane %v1963, 1
    %v1978 = vrot.slane %v1965, 1
    %vm1979 = vcmp.lt.s32.totalorder %v83, 7
    %v1980 = vsel %vm1979, %v1975, %v1977
    %v1981 = vsel %vm1979, %v1976, %v1978
    %v1982 = vsel %vm1979, %v1977, %v1975
    %v1983 = vsel %vm1979, %v1978, %v1976
    %v1984 = vld [vmem:[#allocation7] sm:$0xff]
    %v1985 = vld [vmem:[#allocation7 + $0x8] sm:$0xff]
    %v1986 = vld [vmem:[#allocation7 + $0x10] sm:$0xff]
    %v1987 = vld [vmem:[#allocation7 + $0x18] sm:$0xff]
    %v1988 = vld [vmem:[#allocation7 + $0x20] sm:$0xff]
    %v1989 = vld [vmem:[#allocation7 + $0x28] sm:$0xff]
    %v1990 = vld [vmem:[#allocation7 + $0x30] sm:$0xff]
    %v1991 = vld [vmem:[#allocation7 + $0x38] sm:$0xff]
    %v1992 = vld [vmem:[#allocation7 + $0x40] sm:$0xff]
    %v1993 = vld [vmem:[#allocation7 + $0x48] sm:$0xff]
    %v1994 = vld [vmem:[#allocation7 + $0x50] sm:$0xff]
    %v1995 = vld [vmem:[#allocation7 + $0x58] sm:$0xff]
    %v1996 = vld [vmem:[#allocation7 + $0x60] sm:$0xff]
    %v1997 = vld [vmem:[#allocation7 + $0x68] sm:$0xff]
    %v1998 = vld [vmem:[#allocation7 + $0x70] sm:$0xff]
    %v1999 = vld [vmem:[#allocation7 + $0x78] sm:$0xff]
    %v2000 = vld [vmem:[#allocation7 + $0x80] sm:$0xff]
    %v2001 = vld [vmem:[#allocation7 + $0x88] sm:$0xff]
    %v2002 = vld [vmem:[#allocation7 + $0x90] sm:$0xff]
    %v2003 = vld [vmem:[#allocation7 + $0x98] sm:$0xff]
    %v2004 = vld [vmem:[#allocation7 + $0xa0] sm:$0xff]
    %v2005 = vld [vmem:[#allocation7 + $0xa8] sm:$0xff]
    %v2006 = vld [vmem:[#allocation7 + $0xb0] sm:$0xff]
    %v2007 = vld [vmem:[#allocation7 + $0xb8] sm:$0xff]
    %v2008 = vld [vmem:[#allocation7 + $0xc0] sm:$0xff]
    %v2009 = vld [vmem:[#allocation7 + $0xc8] sm:$0xff]
    %v2010 = vld [vmem:[#allocation7 + $0xd0] sm:$0xff]
    %v2011 = vld [vmem:[#allocation7 + $0xd8] sm:$0xff]
    %v2012 = vld [vmem:[#allocation7 + $0xe0] sm:$0xff]
    %v2013 = vld [vmem:[#allocation7 + $0xe8] sm:$0xff]
    %v2014 = vld [vmem:[#allocation7 + $0xf0] sm:$0xff]
    %v2015 = vld [vmem:[#allocation7 + $0xf8] sm:$0xff]
    %v2016 = vld [vmem:[#allocation7 + $0x100] sm:$0xff]
    %v2017 = vld [vmem:[#allocation7 + $0x108] sm:$0xff]
    %v2018 = vld [vmem:[#allocation7 + $0x110] sm:$0xff]
    %v2019 = vld [vmem:[#allocation7 + $0x118] sm:$0xff]
    %v2020 = vld [vmem:[#allocation7 + $0x120] sm:$0xff]
    %v2021 = vld [vmem:[#allocation7 + $0x128] sm:$0xff]
    %v2022 = vld [vmem:[#allocation7 + $0x130] sm:$0xff]
    %v2023 = vld [vmem:[#allocation7 + $0x138] sm:$0xff]
    %v2024 = vld [vmem:[#allocation7 + $0x140] sm:$0xff]
    %v2025 = vld [vmem:[#allocation7 + $0x148] sm:$0xff]
    %v2026 = vld [vmem:[#allocation7 + $0x150] sm:$0xff]
    %v2027 = vld [vmem:[#allocation7 + $0x158] sm:$0xff]
    %v2028 = vld [vmem:[#allocation7 + $0x160] sm:$0xff]
    %v2029 = vld [vmem:[#allocation7 + $0x168] sm:$0xff]
    %v2030 = vld [vmem:[#allocation7 + $0x170] sm:$0xff]
    %v2031 = vld [vmem:[#allocation7 + $0x178] sm:$0xff]
    %v2032 = vld [vmem:[%s4] sm:$0x1]
    %v2034 = vlaneseq
    %v2035 = vshrl.u32 %v2034, 7
    %v2036 = vsub.s32 0, %v2035
    %v2037 = vrot.slane %v2032, %v2036
    %2039 = vmatprep.subr.mxu0 0.0
    %v2040 = vand.u32 %v1999, 4294901760
    %2041 = vmatpush1.msra.mxu0 %v2040
    %2042 = vmatprep.subr.mxu0 0.0
    %v2043 = vand.u32 %v1998, 4294901760
    %2044 = vmatpush1.msra.mxu0 %v2043
    %2045 = vmatprep.subr.mxu0 0.0
    %v2046 = vand.u32 %v1997, 4294901760
    %2047 = vmatpush1.msra.mxu0 %v2046
    %2048 = vmatprep.subr.mxu0 0.0
    %v2049 = vand.u32 %v1996, 4294901760
    %2050 = vmatpush1.msra.mxu0 %v2049
    %2051 = vmatprep.subr.mxu0 0.0
    %v2052 = vand.u32 %v1995, 4294901760
    %2053 = vmatpush1.msra.mxu0 %v2052
    %2054 = vmatprep.subr.mxu0 0.0
    %v2055 = vand.u32 %v1994, 4294901760
    %2056 = vmatpush1.msra.mxu0 %v2055
    %2057 = vmatprep.subr.mxu0 0.0
    %v2058 = vand.u32 %v1993, 4294901760
    %2059 = vmatpush1.msra.mxu0 %v2058
    %2060 = vmatprep.subr.mxu0 0.0
    %v2061 = vand.u32 %v1992, 4294901760
    %2062 = vmatpush1.msra.mxu0 %v2061
    %2063 = vmatprep.subr.mxu0 0.0
    %v2064 = vand.u32 %v1991, 4294901760
    %2065 = vmatpush1.msra.mxu0 %v2064
    %2066 = vmatprep.subr.mxu0 0.0
    %v2067 = vand.u32 %v1990, 4294901760
    %2068 = vmatpush1.msra.mxu0 %v2067
    %2069 = vmatprep.subr.mxu0 0.0
    %v2070 = vand.u32 %v1989, 4294901760
    %2071 = vmatpush1.msra.mxu0 %v2070
    %2072 = vmatprep.subr.mxu0 0.0
    %v2073 = vand.u32 %v1988, 4294901760
    %2074 = vmatpush1.msra.mxu0 %v2073
    %2075 = vmatprep.subr.mxu0 0.0
    %v2076 = vand.u32 %v1987, 4294901760
    %2077 = vmatpush1.msra.mxu0 %v2076
    %2078 = vmatprep.subr.mxu0 0.0
    %v2079 = vand.u32 %v1986, 4294901760
    %2080 = vmatpush1.msra.mxu0 %v2079
    %2081 = vmatprep.subr.mxu0 0.0
    %v2082 = vand.u32 %v1985, 4294901760
    %2083 = vmatpush1.msra.mxu0 %v2082
    %2084 = vmatprep.subr.mxu0 0.0
    %v2085 = vand.u32 %v1984, 4294901760
    %2086 = vmatpush1.msra.mxu0 %v2085
    %2087 = vmatprep.subr.mxu0 0.0
    %v2088 = vand.u32 %v2015, 4294901760
    %2089 = vmatpush2.msra.mxu0 %v2088
    %2090 = vmatprep.subr.mxu0 0.0
    %v2091 = vand.u32 %v2014, 4294901760
    %2092 = vmatpush2.msra.mxu0 %v2091
    %2093 = vmatprep.subr.mxu0 0.0
    %v2094 = vand.u32 %v2013, 4294901760
    %2095 = vmatpush2.msra.mxu0 %v2094
    %2096 = vmatprep.subr.mxu0 0.0
    %v2097 = vand.u32 %v2012, 4294901760
    %2098 = vmatpush2.msra.mxu0 %v2097
    %2099 = vmatprep.subr.mxu0 0.0
    %v2100 = vand.u32 %v2011, 4294901760
    %2101 = vmatpush2.msra.mxu0 %v2100
    %2102 = vmatprep.subr.mxu0 0.0
    %v2103 = vand.u32 %v2010, 4294901760
    %2104 = vmatpush2.msra.mxu0 %v2103
    %2105 = vmatprep.subr.mxu0 0.0
    %v2106 = vand.u32 %v2009, 4294901760
    %2107 = vmatpush2.msra.mxu0 %v2106
    %2108 = vmatprep.subr.mxu0 0.0
    %v2109 = vand.u32 %v2008, 4294901760
    %2110 = vmatpush2.msra.mxu0 %v2109
    %2111 = vmatprep.subr.mxu0 0.0
    %v2112 = vand.u32 %v2007, 4294901760
    %2113 = vmatpush2.msra.mxu0 %v2112
    %2114 = vmatprep.subr.mxu0 0.0
    %v2115 = vand.u32 %v2006, 4294901760
    %2116 = vmatpush2.msra.mxu0 %v2115
    %2117 = vmatprep.subr.mxu0 0.0
    %v2118 = vand.u32 %v2005, 4294901760
    %2119 = vmatpush2.msra.mxu0 %v2118
    %2120 = vmatprep.subr.mxu0 0.0
    %v2121 = vand.u32 %v2004, 4294901760
    %2122 = vmatpush2.msra.mxu0 %v2121
    %2123 = vmatprep.subr.mxu0 0.0
    %v2124 = vand.u32 %v2003, 4294901760
    %2125 = vmatpush2.msra.mxu0 %v2124
    %2126 = vmatprep.subr.mxu0 0.0
    %v2127 = vand.u32 %v2002, 4294901760
    %2128 = vmatpush2.msra.mxu0 %v2127
    %2129 = vmatprep.subr.mxu0 0.0
    %v2130 = vand.u32 %v2001, 4294901760
    %2131 = vmatpush2.msra.mxu0 %v2130
    %2132 = vmatprep.subr.mxu0 0.0
    %v2133 = vand.u32 %v2000, 4294901760
    %2134 = vmatpush2.msra.mxu0 %v2133
    %v2135 = vand.u32 %v1962, 4294901760
    %v2136 = vsub.f32 %v1962, %v2135
    %v2137 = vand.u32 %v2136, 4294901760
    %v2138 = vsub.f32 %v2136, %v2137
    %v2139 = vand.u32 %v2138, 4294901760
    %2140 = vmatprep.mubr.f32.mxu0 %v2139
    %v2141 = vand.u32 %v1973, 4294901760
    %v2142 = vsub.f32 %v1973, %v2141
    %v2143 = vand.u32 %v2142, 4294901760
    %v2144 = vsub.f32 %v2142, %v2143
    %v2145 = vand.u32 %v2144, 4294901760
    %2146 = vmatmul.mubr.f32.gmra.mxu0 %v2145
    %v2147 = vpop.f32.mrf.mxu0
    %v2148 = vadd.f32 %v2037, %v2147
    %v2149 = vpop.f32.mrf.mxu0
    %v2150 = vand.u32 %v1963, 4294901760
    %v2151 = vsub.f32 %v1963, %v2150
    %v2152 = vand.u32 %v2151, 4294901760
    %v2153 = vsub.f32 %v2151, %v2152
    %v2154 = vand.u32 %v2153, 4294901760
    %2155 = vmatprep.mubr.f32.mxu0 %v2154
    %v2156 = vand.u32 %v1971, 4294901760
    %v2157 = vsub.f32 %v1971, %v2156
    %v2158 = vand.u32 %v2157, 4294901760
    %v2159 = vsub.f32 %v2157, %v2158
    %v2160 = vand.u32 %v2159, 4294901760
    %2161 = vmatmul.mubr.f32.gmra.mxu0 %v2160
    %v2162 = vpop.f32.mrf.mxu0
    %v2163 = vadd.f32 %v2037, %v2162
    %v2164 = vpop.f32.mrf.mxu0
    %v2165 = vand.u32 %v1964, 4294901760
    %v2166 = vsub.f32 %v1964, %v2165
    %v2167 = vand.u32 %v2166, 4294901760
    %v2168 = vsub.f32 %v2166, %v2167
    %v2169 = vand.u32 %v2168, 4294901760
    %2170 = vmatprep.mubr.f32.mxu0 %v2169
    %v2171 = vand.u32 %v1974, 4294901760
    %v2172 = vsub.f32 %v1974, %v2171
    %v2173 = vand.u32 %v2172, 4294901760
    %v2174 = vsub.f32 %v2172, %v2173
    %v2175 = vand.u32 %v2174, 4294901760
    %2176 = vmatmul.mubr.f32.gmra.mxu0 %v2175
    %v2177 = vpop.f32.mrf.mxu0
    %v2178 = vadd.f32 %v2037, %v2177
    %v2179 = vpop.f32.mrf.mxu0
    %v2180 = vand.u32 %v1965, 4294901760
    %v2181 = vsub.f32 %v1965, %v2180
    %v2182 = vand.u32 %v2181, 4294901760
    %v2183 = vsub.f32 %v2181, %v2182
    %v2184 = vand.u32 %v2183, 4294901760
    %2185 = vmatprep.mubr.f32.mxu0 %v2184
    %v2186 = vand.u32 %v1972, 4294901760
    %v2187 = vsub.f32 %v1972, %v2186
    %v2188 = vand.u32 %v2187, 4294901760
    %v2189 = vsub.f32 %v2187, %v2188
    %v2190 = vand.u32 %v2189, 4294901760
    %2191 = vmatmul.mubr.f32.gmra.mxu0 %v2190
    %v2192 = vpop.f32.mrf.mxu0
    %v2193 = vadd.f32 %v2037, %v2192
    %v2194 = vpop.f32.mrf.mxu0
    %2195 = vdwg.mxu0
    %2196 = vmatprep.subr.mxu0 0.0
    %v2197 = vand.u32 %v1999, 4294901760
    %v2198 = vsub.f32 %v1999, %v2197
    %v2199 = vand.u32 %v2198, 4294901760
    %v2200 = vsub.f32 %v2198, %v2199
    %v2201 = vand.u32 %v2200, 4294901760
    %2202 = vmatpush1.msra.mxu0 %v2201
    %2203 = vmatprep.subr.mxu0 0.0
    %v2204 = vand.u32 %v1998, 4294901760
    %v2205 = vsub.f32 %v1998, %v2204
    %v2206 = vand.u32 %v2205, 4294901760
    %v2207 = vsub.f32 %v2205, %v2206
    %v2208 = vand.u32 %v2207, 4294901760
    %2209 = vmatpush1.msra.mxu0 %v2208
    %2210 = vmatprep.subr.mxu0 0.0
    %v2211 = vand.u32 %v1997, 4294901760
    %v2212 = vsub.f32 %v1997, %v2211
    %v2213 = vand.u32 %v2212, 4294901760
    %v2214 = vsub.f32 %v2212, %v2213
    %v2215 = vand.u32 %v2214, 4294901760
    %2216 = vmatpush1.msra.mxu0 %v2215
    %2217 = vmatprep.subr.mxu0 0.0
    %v2218 = vand.u32 %v1996, 4294901760
    %v2219 = vsub.f32 %v1996, %v2218
    %v2220 = vand.u32 %v2219, 4294901760
    %v2221 = vsub.f32 %v2219, %v2220
    %v2222 = vand.u32 %v2221, 4294901760
    %2223 = vmatpush1.msra.mxu0 %v2222
    %2224 = vmatprep.subr.mxu0 0.0
    %v2225 = vand.u32 %v1995, 4294901760
    %v2226 = vsub.f32 %v1995, %v2225
    %v2227 = vand.u32 %v2226, 4294901760
    %v2228 = vsub.f32 %v2226, %v2227
    %v2229 = vand.u32 %v2228, 4294901760
    %2230 = vmatpush1.msra.mxu0 %v2229
    %2231 = vmatprep.subr.mxu0 0.0
    %v2232 = vand.u32 %v1994, 4294901760
    %v2233 = vsub.f32 %v1994, %v2232
    %v2234 = vand.u32 %v2233, 4294901760
    %v2235 = vsub.f32 %v2233, %v2234
    %v2236 = vand.u32 %v2235, 4294901760
    %2237 = vmatpush1.msra.mxu0 %v2236
    %2238 = vmatprep.subr.mxu0 0.0
    %v2239 = vand.u32 %v1993, 4294901760
    %v2240 = vsub.f32 %v1993, %v2239
    %v2241 = vand.u32 %v2240, 4294901760
    %v2242 = vsub.f32 %v2240, %v2241
    %v2243 = vand.u32 %v2242, 4294901760
    %2244 = vmatpush1.msra.mxu0 %v2243
    %2245 = vmatprep.subr.mxu0 0.0
    %v2246 = vand.u32 %v1992, 4294901760
    %v2247 = vsub.f32 %v1992, %v2246
    %v2248 = vand.u32 %v2247, 4294901760
    %v2249 = vsub.f32 %v2247, %v2248
    %v2250 = vand.u32 %v2249, 4294901760
    %2251 = vmatpush1.msra.mxu0 %v2250
    %2252 = vmatprep.subr.mxu0 0.0
    %v2253 = vand.u32 %v1991, 4294901760
    %v2254 = vsub.f32 %v1991, %v2253
    %v2255 = vand.u32 %v2254, 4294901760
    %v2256 = vsub.f32 %v2254, %v2255
    %v2257 = vand.u32 %v2256, 4294901760
    %2258 = vmatpush1.msra.mxu0 %v2257
    %2259 = vmatprep.subr.mxu0 0.0
    %v2260 = vand.u32 %v1990, 4294901760
    %v2261 = vsub.f32 %v1990, %v2260
    %v2262 = vand.u32 %v2261, 4294901760
    %v2263 = vsub.f32 %v2261, %v2262
    %v2264 = vand.u32 %v2263, 4294901760
    %2265 = vmatpush1.msra.mxu0 %v2264
    %2266 = vmatprep.subr.mxu0 0.0
    %v2267 = vand.u32 %v1989, 4294901760
    %v2268 = vsub.f32 %v1989, %v2267
    %v2269 = vand.u32 %v2268, 4294901760
    %v2270 = vsub.f32 %v2268, %v2269
    %v2271 = vand.u32 %v2270, 4294901760
    %2272 = vmatpush1.msra.mxu0 %v2271
    %2273 = vmatprep.subr.mxu0 0.0
    %v2274 = vand.u32 %v1988, 4294901760
    %v2275 = vsub.f32 %v1988, %v2274
    %v2276 = vand.u32 %v2275, 4294901760
    %v2277 = vsub.f32 %v2275, %v2276
    %v2278 = vand.u32 %v2277, 4294901760
    %2279 = vmatpush1.msra.mxu0 %v2278
    %2280 = vmatprep.subr.mxu0 0.0
    %v2281 = vand.u32 %v1987, 4294901760
    %v2282 = vsub.f32 %v1987, %v2281
    %v2283 = vand.u32 %v2282, 4294901760
    %v2284 = vsub.f32 %v2282, %v2283
    %v2285 = vand.u32 %v2284, 4294901760
    %2286 = vmatpush1.msra.mxu0 %v2285
    %2287 = vmatprep.subr.mxu0 0.0
    %v2288 = vand.u32 %v1986, 4294901760
    %v2289 = vsub.f32 %v1986, %v2288
    %v2290 = vand.u32 %v2289, 4294901760
    %v2291 = vsub.f32 %v2289, %v2290
    %v2292 = vand.u32 %v2291, 4294901760
    %2293 = vmatpush1.msra.mxu0 %v2292
    %2294 = vmatprep.subr.mxu0 0.0
    %v2295 = vand.u32 %v1985, 4294901760
    %v2296 = vsub.f32 %v1985, %v2295
    %v2297 = vand.u32 %v2296, 4294901760
    %v2298 = vsub.f32 %v2296, %v2297
    %v2299 = vand.u32 %v2298, 4294901760
    %2300 = vmatpush1.msra.mxu0 %v2299
    %2301 = vmatprep.subr.mxu0 0.0
    %v2302 = vand.u32 %v1984, 4294901760
    %v2303 = vsub.f32 %v1984, %v2302
    %v2304 = vand.u32 %v2303, 4294901760
    %v2305 = vsub.f32 %v2303, %v2304
    %v2306 = vand.u32 %v2305, 4294901760
    %2307 = vmatpush1.msra.mxu0 %v2306
    %2308 = vmatprep.subr.mxu0 0.0
    %v2309 = vand.u32 %v2015, 4294901760
    %v2310 = vsub.f32 %v2015, %v2309
    %v2311 = vand.u32 %v2310, 4294901760
    %v2312 = vsub.f32 %v2310, %v2311
    %v2313 = vand.u32 %v2312, 4294901760
    %2314 = vmatpush2.msra.mxu0 %v2313
    %2315 = vmatprep.subr.mxu0 0.0
    %v2316 = vand.u32 %v2014, 4294901760
    %v2317 = vsub.f32 %v2014, %v2316
    %v2318 = vand.u32 %v2317, 4294901760
    %v2319 = vsub.f32 %v2317, %v2318
    %v2320 = vand.u32 %v2319, 4294901760
    %2321 = vmatpush2.msra.mxu0 %v2320
    %2322 = vmatprep.subr.mxu0 0.0
    %v2323 = vand.u32 %v2013, 4294901760
    %v2324 = vsub.f32 %v2013, %v2323
    %v2325 = vand.u32 %v2324, 4294901760
    %v2326 = vsub.f32 %v2324, %v2325
    %v2327 = vand.u32 %v2326, 4294901760
    %2328 = vmatpush2.msra.mxu0 %v2327
    %2329 = vmatprep.subr.mxu0 0.0
    %v2330 = vand.u32 %v2012, 4294901760
    %v2331 = vsub.f32 %v2012, %v2330
    %v2332 = vand.u32 %v2331, 4294901760
    %v2333 = vsub.f32 %v2331, %v2332
    %v2334 = vand.u32 %v2333, 4294901760
    %2335 = vmatpush2.msra.mxu0 %v2334
    %2336 = vmatprep.subr.mxu0 0.0
    %v2337 = vand.u32 %v2011, 4294901760
    %v2338 = vsub.f32 %v2011, %v2337
    %v2339 = vand.u32 %v2338, 4294901760
    %v2340 = vsub.f32 %v2338, %v2339
    %v2341 = vand.u32 %v2340, 4294901760
    %2342 = vmatpush2.msra.mxu0 %v2341
    %2343 = vmatprep.subr.mxu0 0.0
    %v2344 = vand.u32 %v2010, 4294901760
    %v2345 = vsub.f32 %v2010, %v2344
    %v2346 = vand.u32 %v2345, 4294901760
    %v2347 = vsub.f32 %v2345, %v2346
    %v2348 = vand.u32 %v2347, 4294901760
    %2349 = vmatpush2.msra.mxu0 %v2348
    %2350 = vmatprep.subr.mxu0 0.0
    %v2351 = vand.u32 %v2009, 4294901760
    %v2352 = vsub.f32 %v2009, %v2351
    %v2353 = vand.u32 %v2352, 4294901760
    %v2354 = vsub.f32 %v2352, %v2353
    %v2355 = vand.u32 %v2354, 4294901760
    %2356 = vmatpush2.msra.mxu0 %v2355
    %2357 = vmatprep.subr.mxu0 0.0
    %v2358 = vand.u32 %v2008, 4294901760
    %v2359 = vsub.f32 %v2008, %v2358
    %v2360 = vand.u32 %v2359, 4294901760
    %v2361 = vsub.f32 %v2359, %v2360
    %v2362 = vand.u32 %v2361, 4294901760
    %2363 = vmatpush2.msra.mxu0 %v2362
    %2364 = vmatprep.subr.mxu0 0.0
    %v2365 = vand.u32 %v2007, 4294901760
    %v2366 = vsub.f32 %v2007, %v2365
    %v2367 = vand.u32 %v2366, 4294901760
    %v2368 = vsub.f32 %v2366, %v2367
    %v2369 = vand.u32 %v2368, 4294901760
    %2370 = vmatpush2.msra.mxu0 %v2369
    %2371 = vmatprep.subr.mxu0 0.0
    %v2372 = vand.u32 %v2006, 4294901760
    %v2373 = vsub.f32 %v2006, %v2372
    %v2374 = vand.u32 %v2373, 4294901760
    %v2375 = vsub.f32 %v2373, %v2374
    %v2376 = vand.u32 %v2375, 4294901760
    %2377 = vmatpush2.msra.mxu0 %v2376
    %2378 = vmatprep.subr.mxu0 0.0
    %v2379 = vand.u32 %v2005, 4294901760
    %v2380 = vsub.f32 %v2005, %v2379
    %v2381 = vand.u32 %v2380, 4294901760
    %v2382 = vsub.f32 %v2380, %v2381
    %v2383 = vand.u32 %v2382, 4294901760
    %2384 = vmatpush2.msra.mxu0 %v2383
    %2385 = vmatprep.subr.mxu0 0.0
    %v2386 = vand.u32 %v2004, 4294901760
    %v2387 = vsub.f32 %v2004, %v2386
    %v2388 = vand.u32 %v2387, 4294901760
    %v2389 = vsub.f32 %v2387, %v2388
    %v2390 = vand.u32 %v2389, 4294901760
    %2391 = vmatpush2.msra.mxu0 %v2390
    %2392 = vmatprep.subr.mxu0 0.0
    %v2393 = vand.u32 %v2003, 4294901760
    %v2394 = vsub.f32 %v2003, %v2393
    %v2395 = vand.u32 %v2394, 4294901760
    %v2396 = vsub.f32 %v2394, %v2395
    %v2397 = vand.u32 %v2396, 4294901760
    %2398 = vmatpush2.msra.mxu0 %v2397
    %2399 = vmatprep.subr.mxu0 0.0
    %v2400 = vand.u32 %v2002, 4294901760
    %v2401 = vsub.f32 %v2002, %v2400
    %v2402 = vand.u32 %v2401, 4294901760
    %v2403 = vsub.f32 %v2401, %v2402
    %v2404 = vand.u32 %v2403, 4294901760
    %2405 = vmatpush2.msra.mxu0 %v2404
    %2406 = vmatprep.subr.mxu0 0.0
    %v2407 = vand.u32 %v2001, 4294901760
    %v2408 = vsub.f32 %v2001, %v2407
    %v2409 = vand.u32 %v2408, 4294901760
    %v2410 = vsub.f32 %v2408, %v2409
    %v2411 = vand.u32 %v2410, 4294901760
    %2412 = vmatpush2.msra.mxu0 %v2411
    %2413 = vmatprep.subr.mxu0 0.0
    %v2414 = vand.u32 %v2000, 4294901760
    %v2415 = vsub.f32 %v2000, %v2414
    %v2416 = vand.u32 %v2415, 4294901760
    %v2417 = vsub.f32 %v2415, %v2416
    %v2418 = vand.u32 %v2417, 4294901760
    %2419 = vmatpush2.msra.mxu0 %v2418
    %v2420 = vand.u32 %v1962, 4294901760
    %2421 = vmatprep.mubr.f32.mxu0 %v2420
    %v2422 = vand.u32 %v1973, 4294901760
    %2423 = vmatmul.mubr.f32.gmra.mxu0 %v2422
    %v2424 = vpop.f32.mrf.mxu0
    %v2425 = vadd.f32 %v2148, %v2424
    %v2426 = vpop.f32.mrf.mxu0
    %v2427 = vand.u32 %v1963, 4294901760
    %2428 = vmatprep.mubr.f32.mxu0 %v2427
    %v2429 = vand.u32 %v1971, 4294901760
    %2430 = vmatmul.mubr.f32.gmra.mxu0 %v2429
    %v2431 = vpop.f32.mrf.mxu0
    %v2432 = vadd.f32 %v2163, %v2431
    %v2433 = vpop.f32.mrf.mxu0
    %v2434 = vand.u32 %v1964, 4294901760
    %2435 = vmatprep.mubr.f32.mxu0 %v2434
    %v2436 = vand.u32 %v1974, 4294901760
    %2437 = vmatmul.mubr.f32.gmra.mxu0 %v2436
    %v2438 = vpop.f32.mrf.mxu0
    %v2439 = vadd.f32 %v2178, %v2438
    %v2440 = vpop.f32.mrf.mxu0
    %v2441 = vand.u32 %v1965, 4294901760
    %2442 = vmatprep.mubr.f32.mxu0 %v2441
    %v2443 = vand.u32 %v1972, 4294901760
    %2444 = vmatmul.mubr.f32.gmra.mxu0 %v2443
    %v2445 = vpop.f32.mrf.mxu0
    %v2446 = vadd.f32 %v2193, %v2445
    %v2447 = vpop.f32.mrf.mxu0
    %2448 = vdwg.mxu0
    %2449 = vmatprep.subr.mxu0 0.0
    %v2450 = vand.u32 %v1999, 4294901760
    %v2451 = vsub.f32 %v1999, %v2450
    %2452 = vmatpush1.msra.mxu0 %v2451
    %2453 = vmatprep.subr.mxu0 0.0
    %v2454 = vand.u32 %v1998, 4294901760
    %v2455 = vsub.f32 %v1998, %v2454
    %2456 = vmatpush1.msra.mxu0 %v2455
    %2457 = vmatprep.subr.mxu0 0.0
    %v2458 = vand.u32 %v1997, 4294901760
    %v2459 = vsub.f32 %v1997, %v2458
    %2460 = vmatpush1.msra.mxu0 %v2459
    %2461 = vmatprep.subr.mxu0 0.0
    %v2462 = vand.u32 %v1996, 4294901760
    %v2463 = vsub.f32 %v1996, %v2462
    %2464 = vmatpush1.msra.mxu0 %v2463
    %2465 = vmatprep.subr.mxu0 0.0
    %v2466 = vand.u32 %v1995, 4294901760
    %v2467 = vsub.f32 %v1995, %v2466
    %2468 = vmatpush1.msra.mxu0 %v2467
    %2469 = vmatprep.subr.mxu0 0.0
    %v2470 = vand.u32 %v1994, 4294901760
    %v2471 = vsub.f32 %v1994, %v2470
    %2472 = vmatpush1.msra.mxu0 %v2471
    %2473 = vmatprep.subr.mxu0 0.0
    %v2474 = vand.u32 %v1993, 4294901760
    %v2475 = vsub.f32 %v1993, %v2474
    %2476 = vmatpush1.msra.mxu0 %v2475
    %2477 = vmatprep.subr.mxu0 0.0
    %v2478 = vand.u32 %v1992, 4294901760
    %v2479 = vsub.f32 %v1992, %v2478
    %2480 = vmatpush1.msra.mxu0 %v2479
    %2481 = vmatprep.subr.mxu0 0.0
    %v2482 = vand.u32 %v1991, 4294901760
    %v2483 = vsub.f32 %v1991, %v2482
    %2484 = vmatpush1.msra.mxu0 %v2483
    %2485 = vmatprep.subr.mxu0 0.0
    %v2486 = vand.u32 %v1990, 4294901760
    %v2487 = vsub.f32 %v1990, %v2486
    %2488 = vmatpush1.msra.mxu0 %v2487
    %2489 = vmatprep.subr.mxu0 0.0
    %v2490 = vand.u32 %v1989, 4294901760
    %v2491 = vsub.f32 %v1989, %v2490
    %2492 = vmatpush1.msra.mxu0 %v2491
    %2493 = vmatprep.subr.mxu0 0.0
    %v2494 = vand.u32 %v1988, 4294901760
    %v2495 = vsub.f32 %v1988, %v2494
    %2496 = vmatpush1.msra.mxu0 %v2495
    %2497 = vmatprep.subr.mxu0 0.0
    %v2498 = vand.u32 %v1987, 4294901760
    %v2499 = vsub.f32 %v1987, %v2498
    %2500 = vmatpush1.msra.mxu0 %v2499
    %2501 = vmatprep.subr.mxu0 0.0
    %v2502 = vand.u32 %v1986, 4294901760
    %v2503 = vsub.f32 %v1986, %v2502
    %2504 = vmatpush1.msra.mxu0 %v2503
    %2505 = vmatprep.subr.mxu0 0.0
    %v2506 = vand.u32 %v1985, 4294901760
    %v2507 = vsub.f32 %v1985, %v2506
    %2508 = vmatpush1.msra.mxu0 %v2507
    %2509 = vmatprep.subr.mxu0 0.0
    %v2510 = vand.u32 %v1984, 4294901760
    %v2511 = vsub.f32 %v1984, %v2510
    %2512 = vmatpush1.msra.mxu0 %v2511
    %2513 = vmatprep.subr.mxu0 0.0
    %v2514 = vand.u32 %v2015, 4294901760
    %v2515 = vsub.f32 %v2015, %v2514
    %2516 = vmatpush2.msra.mxu0 %v2515
    %2517 = vmatprep.subr.mxu0 0.0
    %v2518 = vand.u32 %v2014, 4294901760
    %v2519 = vsub.f32 %v2014, %v2518
    %2520 = vmatpush2.msra.mxu0 %v2519
    %2521 = vmatprep.subr.mxu0 0.0
    %v2522 = vand.u32 %v2013, 4294901760
    %v2523 = vsub.f32 %v2013, %v2522
    %2524 = vmatpush2.msra.mxu0 %v2523
    %2525 = vmatprep.subr.mxu0 0.0
    %v2526 = vand.u32 %v2012, 4294901760
    %v2527 = vsub.f32 %v2012, %v2526
    %2528 = vmatpush2.msra.mxu0 %v2527
    %2529 = vmatprep.subr.mxu0 0.0
    %v2530 = vand.u32 %v2011, 4294901760
    %v2531 = vsub.f32 %v2011, %v2530
    %2532 = vmatpush2.msra.mxu0 %v2531
    %2533 = vmatprep.subr.mxu0 0.0
    %v2534 = vand.u32 %v2010, 4294901760
    %v2535 = vsub.f32 %v2010, %v2534
    %2536 = vmatpush2.msra.mxu0 %v2535
    %2537 = vmatprep.subr.mxu0 0.0
    %v2538 = vand.u32 %v2009, 4294901760
    %v2539 = vsub.f32 %v2009, %v2538
    %2540 = vmatpush2.msra.mxu0 %v2539
    %2541 = vmatprep.subr.mxu0 0.0
    %v2542 = vand.u32 %v2008, 4294901760
    %v2543 = vsub.f32 %v2008, %v2542
    %2544 = vmatpush2.msra.mxu0 %v2543
    %2545 = vmatprep.subr.mxu0 0.0
    %v2546 = vand.u32 %v2007, 4294901760
    %v2547 = vsub.f32 %v2007, %v2546
    %2548 = vmatpush2.msra.mxu0 %v2547
    %2549 = vmatprep.subr.mxu0 0.0
    %v2550 = vand.u32 %v2006, 4294901760
    %v2551 = vsub.f32 %v2006, %v2550
    %2552 = vmatpush2.msra.mxu0 %v2551
    %2553 = vmatprep.subr.mxu0 0.0
    %v2554 = vand.u32 %v2005, 4294901760
    %v2555 = vsub.f32 %v2005, %v2554
    %2556 = vmatpush2.msra.mxu0 %v2555
    %2557 = vmatprep.subr.mxu0 0.0
    %v2558 = vand.u32 %v2004, 4294901760
    %v2559 = vsub.f32 %v2004, %v2558
    %2560 = vmatpush2.msra.mxu0 %v2559
    %2561 = vmatprep.subr.mxu0 0.0
    %v2562 = vand.u32 %v2003, 4294901760
    %v2563 = vsub.f32 %v2003, %v2562
    %2564 = vmatpush2.msra.mxu0 %v2563
    %2565 = vmatprep.subr.mxu0 0.0
    %v2566 = vand.u32 %v2002, 4294901760
    %v2567 = vsub.f32 %v2002, %v2566
    %2568 = vmatpush2.msra.mxu0 %v2567
    %2569 = vmatprep.subr.mxu0 0.0
    %v2570 = vand.u32 %v2001, 4294901760
    %v2571 = vsub.f32 %v2001, %v2570
    %2572 = vmatpush2.msra.mxu0 %v2571
    %2573 = vmatprep.subr.mxu0 0.0
    %v2574 = vand.u32 %v2000, 4294901760
    %v2575 = vsub.f32 %v2000, %v2574
    %2576 = vmatpush2.msra.mxu0 %v2575
    %v2577 = vand.u32 %v1962, 4294901760
    %v2578 = vsub.f32 %v1962, %v2577
    %2579 = vmatprep.mubr.f32.mxu0 %v2578
    %v2580 = vand.u32 %v1973, 4294901760
    %v2581 = vsub.f32 %v1973, %v2580
    %2582 = vmatmul.mubr.f32.gmra.mxu0 %v2581
    %v2583 = vpop.f32.mrf.mxu0
    %v2584 = vadd.f32 %v2425, %v2583
    %v2585 = vpop.f32.mrf.mxu0
    %v2586 = vand.u32 %v1963, 4294901760
    %v2587 = vsub.f32 %v1963, %v2586
    %2588 = vmatprep.mubr.f32.mxu0 %v2587
    %v2589 = vand.u32 %v1971, 4294901760
    %v2590 = vsub.f32 %v1971, %v2589
    %2591 = vmatmul.mubr.f32.gmra.mxu0 %v2590
    %v2592 = vpop.f32.mrf.mxu0
    %v2593 = vadd.f32 %v2432, %v2592
    %v2594 = vpop.f32.mrf.mxu0
    %v2595 = vand.u32 %v1964, 4294901760
    %v2596 = vsub.f32 %v1964, %v2595
    %2597 = vmatprep.mubr.f32.mxu0 %v2596
    %v2598 = vand.u32 %v1974, 4294901760
    %v2599 = vsub.f32 %v1974, %v2598
    %2600 = vmatmul.mubr.f32.gmra.mxu0 %v2599
    %v2601 = vpop.f32.mrf.mxu0
    %v2602 = vadd.f32 %v2439, %v2601
    %v2603 = vpop.f32.mrf.mxu0
    %v2604 = vand.u32 %v1965, 4294901760
    %v2605 = vsub.f32 %v1965, %v2604
    %2606 = vmatprep.mubr.f32.mxu0 %v2605
    %v2607 = vand.u32 %v1972, 4294901760
    %v2608 = vsub.f32 %v1972, %v2607
    %2609 = vmatmul.mubr.f32.gmra.mxu0 %v2608
    %v2610 = vpop.f32.mrf.mxu0
    %v2611 = vadd.f32 %v2446, %v2610
    %v2612 = vpop.f32.mrf.mxu0
    %2613 = vdwg.mxu0
    %2614 = vmatprep.subr.mxu0 0.0
    %v2615 = vand.u32 %v1999, 4294901760
    %2616 = vmatpush1.msra.mxu0 %v2615
    %2617 = vmatprep.subr.mxu0 0.0
    %v2618 = vand.u32 %v1998, 4294901760
    %2619 = vmatpush1.msra.mxu0 %v2618
    %2620 = vmatprep.subr.mxu0 0.0
    %v2621 = vand.u32 %v1997, 4294901760
    %2622 = vmatpush1.msra.mxu0 %v2621
    %2623 = vmatprep.subr.mxu0 0.0
    %v2624 = vand.u32 %v1996, 4294901760
    %2625 = vmatpush1.msra.mxu0 %v2624
    %2626 = vmatprep.subr.mxu0 0.0
    %v2627 = vand.u32 %v1995, 4294901760
    %2628 = vmatpush1.msra.mxu0 %v2627
    %2629 = vmatprep.subr.mxu0 0.0
    %v2630 = vand.u32 %v1994, 4294901760
    %2631 = vmatpush1.msra.mxu0 %v2630
    %2632 = vmatprep.subr.mxu0 0.0
    %v2633 = vand.u32 %v1993, 4294901760
    %2634 = vmatpush1.msra.mxu0 %v2633
    %2635 = vmatprep.subr.mxu0 0.0
    %v2636 = vand.u32 %v1992, 4294901760
    %2637 = vmatpush1.msra.mxu0 %v2636
    %2638 = vmatprep.subr.mxu0 0.0
    %v2639 = vand.u32 %v1991, 4294901760
    %2640 = vmatpush1.msra.mxu0 %v2639
    %2641 = vmatprep.subr.mxu0 0.0
    %v2642 = vand.u32 %v1990, 4294901760
    %2643 = vmatpush1.msra.mxu0 %v2642
    %2644 = vmatprep.subr.mxu0 0.0
    %v2645 = vand.u32 %v1989, 4294901760
    %2646 = vmatpush1.msra.mxu0 %v2645
    %2647 = vmatprep.subr.mxu0 0.0
    %v2648 = vand.u32 %v1988, 4294901760
    %2649 = vmatpush1.msra.mxu0 %v2648
    %2650 = vmatprep.subr.mxu0 0.0
    %v2651 = vand.u32 %v1987, 4294901760
    %2652 = vmatpush1.msra.mxu0 %v2651
    %2653 = vmatprep.subr.mxu0 0.0
    %v2654 = vand.u32 %v1986, 4294901760
    %2655 = vmatpush1.msra.mxu0 %v2654
    %2656 = vmatprep.subr.mxu0 0.0
    %v2657 = vand.u32 %v1985, 4294901760
    %2658 = vmatpush1.msra.mxu0 %v2657
    %2659 = vmatprep.subr.mxu0 0.0
    %v2660 = vand.u32 %v1984, 4294901760
    %2661 = vmatpush1.msra.mxu0 %v2660
    %2662 = vmatprep.subr.mxu0 0.0
    %v2663 = vand.u32 %v2015, 4294901760
    %2664 = vmatpush2.msra.mxu0 %v2663
    %2665 = vmatprep.subr.mxu0 0.0
    %v2666 = vand.u32 %v2014, 4294901760
    %2667 = vmatpush2.msra.mxu0 %v2666
    %2668 = vmatprep.subr.mxu0 0.0
    %v2669 = vand.u32 %v2013, 4294901760
    %2670 = vmatpush2.msra.mxu0 %v2669
    %2671 = vmatprep.subr.mxu0 0.0
    %v2672 = vand.u32 %v2012, 4294901760
    %2673 = vmatpush2.msra.mxu0 %v2672
    %2674 = vmatprep.subr.mxu0 0.0
    %v2675 = vand.u32 %v2011, 4294901760
    %2676 = vmatpush2.msra.mxu0 %v2675
    %2677 = vmatprep.subr.mxu0 0.0
    %v2678 = vand.u32 %v2010, 4294901760
    %2679 = vmatpush2.msra.mxu0 %v2678
    %2680 = vmatprep.subr.mxu0 0.0
    %v2681 = vand.u32 %v2009, 4294901760
    %2682 = vmatpush2.msra.mxu0 %v2681
    %2683 = vmatprep.subr.mxu0 0.0
    %v2684 = vand.u32 %v2008, 4294901760
    %2685 = vmatpush2.msra.mxu0 %v2684
    %2686 = vmatprep.subr.mxu0 0.0
    %v2687 = vand.u32 %v2007, 4294901760
    %2688 = vmatpush2.msra.mxu0 %v2687
    %2689 = vmatprep.subr.mxu0 0.0
    %v2690 = vand.u32 %v2006, 4294901760
    %2691 = vmatpush2.msra.mxu0 %v2690
    %2692 = vmatprep.subr.mxu0 0.0
    %v2693 = vand.u32 %v2005, 4294901760
    %2694 = vmatpush2.msra.mxu0 %v2693
    %2695 = vmatprep.subr.mxu0 0.0
    %v2696 = vand.u32 %v2004, 4294901760
    %2697 = vmatpush2.msra.mxu0 %v2696
    %2698 = vmatprep.subr.mxu0 0.0
    %v2699 = vand.u32 %v2003, 4294901760
    %2700 = vmatpush2.msra.mxu0 %v2699
    %2701 = vmatprep.subr.mxu0 0.0
    %v2702 = vand.u32 %v2002, 4294901760
    %2703 = vmatpush2.msra.mxu0 %v2702
    %2704 = vmatprep.subr.mxu0 0.0
    %v2705 = vand.u32 %v2001, 4294901760
    %2706 = vmatpush2.msra.mxu0 %v2705
    %2707 = vmatprep.subr.mxu0 0.0
    %v2708 = vand.u32 %v2000, 4294901760
    %2709 = vmatpush2.msra.mxu0 %v2708
    %v2710 = vand.u32 %v1962, 4294901760
    %v2711 = vsub.f32 %v1962, %v2710
    %v2712 = vand.u32 %v2711, 4294901760
    %2713 = vmatprep.mubr.f32.mxu0 %v2712
    %v2714 = vand.u32 %v1973, 4294901760
    %v2715 = vsub.f32 %v1973, %v2714
    %v2716 = vand.u32 %v2715, 4294901760
    %2717 = vmatmul.mubr.f32.gmra.mxu0 %v2716
    %v2718 = vpop.f32.mrf.mxu0
    %v2719 = vadd.f32 %v2584, %v2718
    %v2720 = vpop.f32.mrf.mxu0
    %v2721 = vand.u32 %v1963, 4294901760
    %v2722 = vsub.f32 %v1963, %v2721
    %v2723 = vand.u32 %v2722, 4294901760
    %2724 = vmatprep.mubr.f32.mxu0 %v2723
    %v2725 = vand.u32 %v1971, 4294901760
    %v2726 = vsub.f32 %v1971, %v2725
    %v2727 = vand.u32 %v2726, 4294901760
    %2728 = vmatmul.mubr.f32.gmra.mxu0 %v2727
    %v2729 = vpop.f32.mrf.mxu0
    %v2730 = vadd.f32 %v2593, %v2729
    %v2731 = vpop.f32.mrf.mxu0
    %v2732 = vand.u32 %v1964, 4294901760
    %v2733 = vsub.f32 %v1964, %v2732
    %v2734 = vand.u32 %v2733, 4294901760
    %2735 = vmatprep.mubr.f32.mxu0 %v2734
    %v2736 = vand.u32 %v1974, 4294901760
    %v2737 = vsub.f32 %v1974, %v2736
    %v2738 = vand.u32 %v2737, 4294901760
    %2739 = vmatmul.mubr.f32.gmra.mxu0 %v2738
    %v2740 = vpop.f32.mrf.mxu0
    %v2741 = vadd.f32 %v2602, %v2740
    %v2742 = vpop.f32.mrf.mxu0
    %v2743 = vand.u32 %v1965, 4294901760
    %v2744 = vsub.f32 %v1965, %v2743
    %v2745 = vand.u32 %v2744, 4294901760
    %2746 = vmatprep.mubr.f32.mxu0 %v2745
    %v2747 = vand.u32 %v1972, 4294901760
    %v2748 = vsub.f32 %v1972, %v2747
    %v2749 = vand.u32 %v2748, 4294901760
    %2750 = vmatmul.mubr.f32.gmra.mxu0 %v2749
    %v2751 = vpop.f32.mrf.mxu0
    %v2752 = vadd.f32 %v2611, %v2751
    %v2753 = vpop.f32.mrf.mxu0
    %2754 = vdwg.mxu0
    %2755 = vmatprep.subr.mxu0 0.0
    %v2756 = vand.u32 %v1999, 4294901760
    %v2757 = vsub.f32 %v1999, %v2756
    %v2758 = vand.u32 %v2757, 4294901760
    %2759 = vmatpush1.msra.mxu0 %v2758
    %2760 = vmatprep.subr.mxu0 0.0
    %v2761 = vand.u32 %v1998, 4294901760
    %v2762 = vsub.f32 %v1998, %v2761
    %v2763 = vand.u32 %v2762, 4294901760
    %2764 = vmatpush1.msra.mxu0 %v2763
    %2765 = vmatprep.subr.mxu0 0.0
    %v2766 = vand.u32 %v1997, 4294901760
    %v2767 = vsub.f32 %v1997, %v2766
    %v2768 = vand.u32 %v2767, 4294901760
    %2769 = vmatpush1.msra.mxu0 %v2768
    %2770 = vmatprep.subr.mxu0 0.0
    %v2771 = vand.u32 %v1996, 4294901760
    %v2772 = vsub.f32 %v1996, %v2771
    %v2773 = vand.u32 %v2772, 4294901760
    %2774 = vmatpush1.msra.mxu0 %v2773
    %2775 = vmatprep.subr.mxu0 0.0
    %v2776 = vand.u32 %v1995, 4294901760
    %v2777 = vsub.f32 %v1995, %v2776
    %v2778 = vand.u32 %v2777, 4294901760
    %2779 = vmatpush1.msra.mxu0 %v2778
    %2780 = vmatprep.subr.mxu0 0.0
    %v2781 = vand.u32 %v1994, 4294901760
    %v2782 = vsub.f32 %v1994, %v2781
    %v2783 = vand.u32 %v2782, 4294901760
    %2784 = vmatpush1.msra.mxu0 %v2783
    %2785 = vmatprep.subr.mxu0 0.0
    %v2786 = vand.u32 %v1993, 4294901760
    %v2787 = vsub.f32 %v1993, %v2786
    %v2788 = vand.u32 %v2787, 4294901760
    %2789 = vmatpush1.msra.mxu0 %v2788
    %2790 = vmatprep.subr.mxu0 0.0
    %v2791 = vand.u32 %v1992, 4294901760
    %v2792 = vsub.f32 %v1992, %v2791
    %v2793 = vand.u32 %v2792, 4294901760
    %2794 = vmatpush1.msra.mxu0 %v2793
    %2795 = vmatprep.subr.mxu0 0.0
    %v2796 = vand.u32 %v1991, 4294901760
    %v2797 = vsub.f32 %v1991, %v2796
    %v2798 = vand.u32 %v2797, 4294901760
    %2799 = vmatpush1.msra.mxu0 %v2798
    %2800 = vmatprep.subr.mxu0 0.0
    %v2801 = vand.u32 %v1990, 4294901760
    %v2802 = vsub.f32 %v1990, %v2801
    %v2803 = vand.u32 %v2802, 4294901760
    %2804 = vmatpush1.msra.mxu0 %v2803
    %2805 = vmatprep.subr.mxu0 0.0
    %v2806 = vand.u32 %v1989, 4294901760
    %v2807 = vsub.f32 %v1989, %v2806
    %v2808 = vand.u32 %v2807, 4294901760
    %2809 = vmatpush1.msra.mxu0 %v2808
    %2810 = vmatprep.subr.mxu0 0.0
    %v2811 = vand.u32 %v1988, 4294901760
    %v2812 = vsub.f32 %v1988, %v2811
    %v2813 = vand.u32 %v2812, 4294901760
    %2814 = vmatpush1.msra.mxu0 %v2813
    %2815 = vmatprep.subr.mxu0 0.0
    %v2816 = vand.u32 %v1987, 4294901760
    %v2817 = vsub.f32 %v1987, %v2816
    %v2818 = vand.u32 %v2817, 4294901760
    %2819 = vmatpush1.msra.mxu0 %v2818
    %2820 = vmatprep.subr.mxu0 0.0
    %v2821 = vand.u32 %v1986, 4294901760
    %v2822 = vsub.f32 %v1986, %v2821
    %v2823 = vand.u32 %v2822, 4294901760
    %2824 = vmatpush1.msra.mxu0 %v2823
    %2825 = vmatprep.subr.mxu0 0.0
    %v2826 = vand.u32 %v1985, 4294901760
    %v2827 = vsub.f32 %v1985, %v2826
    %v2828 = vand.u32 %v2827, 4294901760
    %2829 = vmatpush1.msra.mxu0 %v2828
    %2830 = vmatprep.subr.mxu0 0.0
    %v2831 = vand.u32 %v1984, 4294901760
    %v2832 = vsub.f32 %v1984, %v2831
    %v2833 = vand.u32 %v2832, 4294901760
    %2834 = vmatpush1.msra.mxu0 %v2833
    %2835 = vmatprep.subr.mxu0 0.0
    %v2836 = vand.u32 %v2015, 4294901760
    %v2837 = vsub.f32 %v2015, %v2836
    %v2838 = vand.u32 %v2837, 4294901760
    %2839 = vmatpush2.msra.mxu0 %v2838
    %2840 = vmatprep.subr.mxu0 0.0
    %v2841 = vand.u32 %v2014, 4294901760
    %v2842 = vsub.f32 %v2014, %v2841
    %v2843 = vand.u32 %v2842, 4294901760
    %2844 = vmatpush2.msra.mxu0 %v2843
    %2845 = vmatprep.subr.mxu0 0.0
    %v2846 = vand.u32 %v2013, 4294901760
    %v2847 = vsub.f32 %v2013, %v2846
    %v2848 = vand.u32 %v2847, 4294901760
    %2849 = vmatpush2.msra.mxu0 %v2848
    %2850 = vmatprep.subr.mxu0 0.0
    %v2851 = vand.u32 %v2012, 4294901760
    %v2852 = vsub.f32 %v2012, %v2851
    %v2853 = vand.u32 %v2852, 4294901760
    %2854 = vmatpush2.msra.mxu0 %v2853
    %2855 = vmatprep.subr.mxu0 0.0
    %v2856 = vand.u32 %v2011, 4294901760
    %v2857 = vsub.f32 %v2011, %v2856
    %v2858 = vand.u32 %v2857, 4294901760
    %2859 = vmatpush2.msra.mxu0 %v2858
    %2860 = vmatprep.subr.mxu0 0.0
    %v2861 = vand.u32 %v2010, 4294901760
    %v2862 = vsub.f32 %v2010, %v2861
    %v2863 = vand.u32 %v2862, 4294901760
    %2864 = vmatpush2.msra.mxu0 %v2863
    %2865 = vmatprep.subr.mxu0 0.0
    %v2866 = vand.u32 %v2009, 4294901760
    %v2867 = vsub.f32 %v2009, %v2866
    %v2868 = vand.u32 %v2867, 4294901760
    %2869 = vmatpush2.msra.mxu0 %v2868
    %2870 = vmatprep.subr.mxu0 0.0
    %v2871 = vand.u32 %v2008, 4294901760
    %v2872 = vsub.f32 %v2008, %v2871
    %v2873 = vand.u32 %v2872, 4294901760
    %2874 = vmatpush2.msra.mxu0 %v2873
    %2875 = vmatprep.subr.mxu0 0.0
    %v2876 = vand.u32 %v2007, 4294901760
    %v2877 = vsub.f32 %v2007, %v2876
    %v2878 = vand.u32 %v2877, 4294901760
    %2879 = vmatpush2.msra.mxu0 %v2878
    %2880 = vmatprep.subr.mxu0 0.0
    %v2881 = vand.u32 %v2006, 4294901760
    %v2882 = vsub.f32 %v2006, %v2881
    %v2883 = vand.u32 %v2882, 4294901760
    %2884 = vmatpush2.msra.mxu0 %v2883
    %2885 = vmatprep.subr.mxu0 0.0
    %v2886 = vand.u32 %v2005, 4294901760
    %v2887 = vsub.f32 %v2005, %v2886
    %v2888 = vand.u32 %v2887, 4294901760
    %2889 = vmatpush2.msra.mxu0 %v2888
    %2890 = vmatprep.subr.mxu0 0.0
    %v2891 = vand.u32 %v2004, 4294901760
    %v2892 = vsub.f32 %v2004, %v2891
    %v2893 = vand.u32 %v2892, 4294901760
    %2894 = vmatpush2.msra.mxu0 %v2893
    %2895 = vmatprep.subr.mxu0 0.0
    %v2896 = vand.u32 %v2003, 4294901760
    %v2897 = vsub.f32 %v2003, %v2896
    %v2898 = vand.u32 %v2897, 4294901760
    %2899 = vmatpush2.msra.mxu0 %v2898
    %2900 = vmatprep.subr.mxu0 0.0
    %v2901 = vand.u32 %v2002, 4294901760
    %v2902 = vsub.f32 %v2002, %v2901
    %v2903 = vand.u32 %v2902, 4294901760
    %2904 = vmatpush2.msra.mxu0 %v2903
    %2905 = vmatprep.subr.mxu0 0.0
    %v2906 = vand.u32 %v2001, 4294901760
    %v2907 = vsub.f32 %v2001, %v2906
    %v2908 = vand.u32 %v2907, 4294901760
    %2909 = vmatpush2.msra.mxu0 %v2908
    %2910 = vmatprep.subr.mxu0 0.0
    %v2911 = vand.u32 %v2000, 4294901760
    %v2912 = vsub.f32 %v2000, %v2911
    %v2913 = vand.u32 %v2912, 4294901760
    %2914 = vmatpush2.msra.mxu0 %v2913
    %v2915 = vand.u32 %v1962, 4294901760
    %2916 = vmatprep.mubr.f32.mxu0 %v2915
    %v2917 = vand.u32 %v1973, 4294901760
    %2918 = vmatmul.mubr.f32.gmra.mxu0 %v2917
    %v2919 = vpop.f32.mrf.mxu0
    %v2920 = vadd.f32 %v2719, %v2919
    %v2921 = vpop.f32.mrf.mxu0
    %v2922 = vand.u32 %v1963, 4294901760
    %2923 = vmatprep.mubr.f32.mxu0 %v2922
    %v2924 = vand.u32 %v1971, 4294901760
    %2925 = vmatmul.mubr.f32.gmra.mxu0 %v2924
    %v2926 = vpop.f32.mrf.mxu0
    %v2927 = vadd.f32 %v2730, %v2926
    %v2928 = vpop.f32.mrf.mxu0
    %v2929 = vand.u32 %v1964, 4294901760
    %2930 = vmatprep.mubr.f32.mxu0 %v2929
    %v2931 = vand.u32 %v1974, 4294901760
    %2932 = vmatmul.mubr.f32.gmra.mxu0 %v2931
    %v2933 = vpop.f32.mrf.mxu0
    %v2934 = vadd.f32 %v2741, %v2933
    %v2935 = vpop.f32.mrf.mxu0
    %v2936 = vand.u32 %v1965, 4294901760
    %2937 = vmatprep.mubr.f32.mxu0 %v2936
    %v2938 = vand.u32 %v1972, 4294901760
    %2939 = vmatmul.mubr.f32.gmra.mxu0 %v2938
    %v2940 = vpop.f32.mrf.mxu0
    %v2941 = vadd.f32 %v2752, %v2940
    %v2942 = vpop.f32.mrf.mxu0
    %2943 = vdwg.mxu0
    %2944 = vmatprep.subr.mxu0 0.0
    %v2945 = vand.u32 %v1999, 4294901760
    %2946 = vmatpush1.msra.mxu0 %v2945
    %2947 = vmatprep.subr.mxu0 0.0
    %v2948 = vand.u32 %v1998, 4294901760
    %2949 = vmatpush1.msra.mxu0 %v2948
    %2950 = vmatprep.subr.mxu0 0.0
    %v2951 = vand.u32 %v1997, 4294901760
    %2952 = vmatpush1.msra.mxu0 %v2951
    %2953 = vmatprep.subr.mxu0 0.0
    %v2954 = vand.u32 %v1996, 4294901760
    %2955 = vmatpush1.msra.mxu0 %v2954
    %2956 = vmatprep.subr.mxu0 0.0
    %v2957 = vand.u32 %v1995, 4294901760
    %2958 = vmatpush1.msra.mxu0 %v2957
    %2959 = vmatprep.subr.mxu0 0.0
    %v2960 = vand.u32 %v1994, 4294901760
    %2961 = vmatpush1.msra.mxu0 %v2960
    %2962 = vmatprep.subr.mxu0 0.0
    %v2963 = vand.u32 %v1993, 4294901760
    %2964 = vmatpush1.msra.mxu0 %v2963
    %2965 = vmatprep.subr.mxu0 0.0
    %v2966 = vand.u32 %v1992, 4294901760
    %2967 = vmatpush1.msra.mxu0 %v2966
    %2968 = vmatprep.subr.mxu0 0.0
    %v2969 = vand.u32 %v1991, 4294901760
    %2970 = vmatpush1.msra.mxu0 %v2969
    %2971 = vmatprep.subr.mxu0 0.0
    %v2972 = vand.u32 %v1990, 4294901760
    %2973 = vmatpush1.msra.mxu0 %v2972
    %2974 = vmatprep.subr.mxu0 0.0
    %v2975 = vand.u32 %v1989, 4294901760
    %2976 = vmatpush1.msra.mxu0 %v2975
    %2977 = vmatprep.subr.mxu0 0.0
    %v2978 = vand.u32 %v1988, 4294901760
    %2979 = vmatpush1.msra.mxu0 %v2978
    %2980 = vmatprep.subr.mxu0 0.0
    %v2981 = vand.u32 %v1987, 4294901760
    %2982 = vmatpush1.msra.mxu0 %v2981
    %2983 = vmatprep.subr.mxu0 0.0
    %v2984 = vand.u32 %v1986, 4294901760
    %2985 = vmatpush1.msra.mxu0 %v2984
    %2986 = vmatprep.subr.mxu0 0.0
    %v2987 = vand.u32 %v1985, 4294901760
    %2988 = vmatpush1.msra.mxu0 %v2987
    %2989 = vmatprep.subr.mxu0 0.0
    %v2990 = vand.u32 %v1984, 4294901760
    %2991 = vmatpush1.msra.mxu0 %v2990
    %2992 = vmatprep.subr.mxu0 0.0
    %v2993 = vand.u32 %v2015, 4294901760
    %2994 = vmatpush2.msra.mxu0 %v2993
    %2995 = vmatprep.subr.mxu0 0.0
    %v2996 = vand.u32 %v2014, 4294901760
    %2997 = vmatpush2.msra.mxu0 %v2996
    %2998 = vmatprep.subr.mxu0 0.0
    %v2999 = vand.u32 %v2013, 4294901760
    %3000 = vmatpush2.msra.mxu0 %v2999
    %3001 = vmatprep.subr.mxu0 0.0
    %v3002 = vand.u32 %v2012, 4294901760
    %3003 = vmatpush2.msra.mxu0 %v3002
    %3004 = vmatprep.subr.mxu0 0.0
    %v3005 = vand.u32 %v2011, 4294901760
    %3006 = vmatpush2.msra.mxu0 %v3005
    %3007 = vmatprep.subr.mxu0 0.0
    %v3008 = vand.u32 %v2010, 4294901760
    %3009 = vmatpush2.msra.mxu0 %v3008
    %3010 = vmatprep.subr.mxu0 0.0
    %v3011 = vand.u32 %v2009, 4294901760
    %3012 = vmatpush2.msra.mxu0 %v3011
    %3013 = vmatprep.subr.mxu0 0.0
    %v3014 = vand.u32 %v2008, 4294901760
    %3015 = vmatpush2.msra.mxu0 %v3014
    %3016 = vmatprep.subr.mxu0 0.0
    %v3017 = vand.u32 %v2007, 4294901760
    %3018 = vmatpush2.msra.mxu0 %v3017
    %3019 = vmatprep.subr.mxu0 0.0
    %v3020 = vand.u32 %v2006, 4294901760
    %3021 = vmatpush2.msra.mxu0 %v3020
    %3022 = vmatprep.subr.mxu0 0.0
    %v3023 = vand.u32 %v2005, 4294901760
    %3024 = vmatpush2.msra.mxu0 %v3023
    %3025 = vmatprep.subr.mxu0 0.0
    %v3026 = vand.u32 %v2004, 4294901760
    %3027 = vmatpush2.msra.mxu0 %v3026
    %3028 = vmatprep.subr.mxu0 0.0
    %v3029 = vand.u32 %v2003, 4294901760
    %3030 = vmatpush2.msra.mxu0 %v3029
    %3031 = vmatprep.subr.mxu0 0.0
    %v3032 = vand.u32 %v2002, 4294901760
    %3033 = vmatpush2.msra.mxu0 %v3032
    %3034 = vmatprep.subr.mxu0 0.0
    %v3035 = vand.u32 %v2001, 4294901760
    %3036 = vmatpush2.msra.mxu0 %v3035
    %3037 = vmatprep.subr.mxu0 0.0
    %v3038 = vand.u32 %v2000, 4294901760
    %3039 = vmatpush2.msra.mxu0 %v3038
    %v3040 = vand.u32 %v1962, 4294901760
    %3041 = vmatprep.mubr.f32.mxu0 %v3040
    %v3042 = vand.u32 %v1973, 4294901760
    %3043 = vmatmul.mubr.f32.gmra.mxu0 %v3042
    %v3044 = vpop.f32.mrf.mxu0
    %v3045 = vadd.f32 %v2920, %v3044
    %v3046 = vpop.f32.mrf.mxu0
    %v3047 = vand.u32 %v1963, 4294901760
    %3048 = vmatprep.mubr.f32.mxu0 %v3047
    %v3049 = vand.u32 %v1971, 4294901760
    %3050 = vmatmul.mubr.f32.gmra.mxu0 %v3049
    %v3051 = vpop.f32.mrf.mxu0
    %v3052 = vadd.f32 %v2927, %v3051
    %v3053 = vpop.f32.mrf.mxu0
    %v3054 = vand.u32 %v1964, 4294901760
    %3055 = vmatprep.mubr.f32.mxu0 %v3054
    %v3056 = vand.u32 %v1974, 4294901760
    %3057 = vmatmul.mubr.f32.gmra.mxu0 %v3056
    %v3058 = vpop.f32.mrf.mxu0
    %v3059 = vadd.f32 %v2934, %v3058
    %v3060 = vpop.f32.mrf.mxu0
    %v3061 = vand.u32 %v1965, 4294901760
    %3062 = vmatprep.mubr.f32.mxu0 %v3061
    %v3063 = vand.u32 %v1972, 4294901760
    %3064 = vmatmul.mubr.f32.gmra.mxu0 %v3063
    %v3065 = vpop.f32.mrf.mxu0
    %v3066 = vadd.f32 %v2941, %v3065
    %v3067 = vpop.f32.mrf.mxu0
    %3068 = vdwg.mxu0
    %3069 = vmatprep.subr.mxu0 0.0
    %v3070 = vand.u32 %v2031, 4294901760
    %3071 = vmatpush1.msra.mxu0 %v3070
    %3072 = vmatprep.subr.mxu0 0.0
    %v3073 = vand.u32 %v2030, 4294901760
    %3074 = vmatpush1.msra.mxu0 %v3073
    %3075 = vmatprep.subr.mxu0 0.0
    %v3076 = vand.u32 %v2029, 4294901760
    %3077 = vmatpush1.msra.mxu0 %v3076
    %3078 = vmatprep.subr.mxu0 0.0
    %v3079 = vand.u32 %v2028, 4294901760
    %3080 = vmatpush1.msra.mxu0 %v3079
    %3081 = vmatprep.subr.mxu0 0.0
    %v3082 = vand.u32 %v2027, 4294901760
    %3083 = vmatpush1.msra.mxu0 %v3082
    %3084 = vmatprep.subr.mxu0 0.0
    %v3085 = vand.u32 %v2026, 4294901760
    %3086 = vmatpush1.msra.mxu0 %v3085
    %3087 = vmatprep.subr.mxu0 0.0
    %v3088 = vand.u32 %v2025, 4294901760
    %3089 = vmatpush1.msra.mxu0 %v3088
    %3090 = vmatprep.subr.mxu0 0.0
    %v3091 = vand.u32 %v2024, 4294901760
    %3092 = vmatpush1.msra.mxu0 %v3091
    %3093 = vmatprep.subr.mxu0 0.0
    %v3094 = vand.u32 %v2023, 4294901760
    %3095 = vmatpush1.msra.mxu0 %v3094
    %3096 = vmatprep.subr.mxu0 0.0
    %v3097 = vand.u32 %v2022, 4294901760
    %3098 = vmatpush1.msra.mxu0 %v3097
    %3099 = vmatprep.subr.mxu0 0.0
    %v3100 = vand.u32 %v2021, 4294901760
    %3101 = vmatpush1.msra.mxu0 %v3100
    %3102 = vmatprep.subr.mxu0 0.0
    %v3103 = vand.u32 %v2020, 4294901760
    %3104 = vmatpush1.msra.mxu0 %v3103
    %3105 = vmatprep.subr.mxu0 0.0
    %v3106 = vand.u32 %v2019, 4294901760
    %3107 = vmatpush1.msra.mxu0 %v3106
    %3108 = vmatprep.subr.mxu0 0.0
    %v3109 = vand.u32 %v2018, 4294901760
    %3110 = vmatpush1.msra.mxu0 %v3109
    %3111 = vmatprep.subr.mxu0 0.0
    %v3112 = vand.u32 %v2017, 4294901760
    %3113 = vmatpush1.msra.mxu0 %v3112
    %3114 = vmatprep.subr.mxu0 0.0
    %v3115 = vand.u32 %v2016, 4294901760
    %3116 = vmatpush1.msra.mxu0 %v3115
    %3117 = vmatprep.subr.mxu0 0.0
    %3118 = vmatpush2.msra.mxu0 0.0
    %3119 = vmatprep.subr.mxu0 0.0
    %3120 = vmatpush2.msra.mxu0 0.0
    %3121 = vmatprep.subr.mxu0 0.0
    %3122 = vmatpush2.msra.mxu0 0.0
    %3123 = vmatprep.subr.mxu0 0.0
    %3124 = vmatpush2.msra.mxu0 0.0
    %3125 = vmatprep.subr.mxu0 0.0
    %3126 = vmatpush2.msra.mxu0 0.0
    %3127 = vmatprep.subr.mxu0 0.0
    %3128 = vmatpush2.msra.mxu0 0.0
    %3129 = vmatprep.subr.mxu0 0.0
    %3130 = vmatpush2.msra.mxu0 0.0
    %3131 = vmatprep.subr.mxu0 0.0
    %3132 = vmatpush2.msra.mxu0 0.0
    %3133 = vmatprep.subr.mxu0 0.0
    %3134 = vmatpush2.msra.mxu0 0.0
    %3135 = vmatprep.subr.mxu0 0.0
    %3136 = vmatpush2.msra.mxu0 0.0
    %3137 = vmatprep.subr.mxu0 0.0
    %3138 = vmatpush2.msra.mxu0 0.0
    %3139 = vmatprep.subr.mxu0 0.0
    %3140 = vmatpush2.msra.mxu0 0.0
    %3141 = vmatprep.subr.mxu0 0.0
    %3142 = vmatpush2.msra.mxu0 0.0
    %3143 = vmatprep.subr.mxu0 0.0
    %3144 = vmatpush2.msra.mxu0 0.0
    %3145 = vmatprep.subr.mxu0 0.0
    %3146 = vmatpush2.msra.mxu0 0.0
    %3147 = vmatprep.subr.mxu0 0.0
    %3148 = vmatpush2.msra.mxu0 0.0
    %3149 = vmatprep.mubr.f32.mxu0 0.0
    %v3150 = vand.u32 %v1980, 4294901760
    %v3151 = vsub.f32 %v1980, %v3150
    %v3152 = vand.u32 %v3151, 4294901760
    %v3153 = vsub.f32 %v3151, %v3152
    %v3154 = vand.u32 %v3153, 4294901760
    %3155 = vmatmul.mubr.f32.gmra.mxu0 %v3154
    %v3156 = vpop.f32.mrf.mxu0
    %v3157 = vadd.f32 %v3045, %v3156
    %v3158 = vpop.f32.mrf.mxu0
    %3159 = vmatprep.mubr.f32.mxu0 0.0
    %v3160 = vand.u32 %v1982, 4294901760
    %v3161 = vsub.f32 %v1982, %v3160
    %v3162 = vand.u32 %v3161, 4294901760
    %v3163 = vsub.f32 %v3161, %v3162
    %v3164 = vand.u32 %v3163, 4294901760
    %3165 = vmatmul.mubr.f32.gmra.mxu0 %v3164
    %v3166 = vpop.f32.mrf.mxu0
    %v3167 = vadd.f32 %v3052, %v3166
    %v3168 = vpop.f32.mrf.mxu0
    %3169 = vmatprep.mubr.f32.mxu0 0.0
    %v3170 = vand.u32 %v1981, 4294901760
    %v3171 = vsub.f32 %v1981, %v3170
    %v3172 = vand.u32 %v3171, 4294901760
    %v3173 = vsub.f32 %v3171, %v3172
    %v3174 = vand.u32 %v3173, 4294901760
    %3175 = vmatmul.mubr.f32.gmra.mxu0 %v3174
    %v3176 = vpop.f32.mrf.mxu0
    %v3177 = vadd.f32 %v3059, %v3176
    %v3178 = vpop.f32.mrf.mxu0
    %3179 = vmatprep.mubr.f32.mxu0 0.0
    %v3180 = vand.u32 %v1983, 4294901760
    %v3181 = vsub.f32 %v1983, %v3180
    %v3182 = vand.u32 %v3181, 4294901760
    %v3183 = vsub.f32 %v3181, %v3182
    %v3184 = vand.u32 %v3183, 4294901760
    %3185 = vmatmul.mubr.f32.gmra.mxu0 %v3184
    %v3186 = vpop.f32.mrf.mxu0
    %v3187 = vadd.f32 %v3066, %v3186
    %v3188 = vpop.f32.mrf.mxu0
    %3189 = vdwg.mxu0
    %3190 = vmatprep.subr.mxu0 0.0
    %v3191 = vand.u32 %v2031, 4294901760
    %v3192 = vsub.f32 %v2031, %v3191
    %v3193 = vand.u32 %v3192, 4294901760
    %v3194 = vsub.f32 %v3192, %v3193
    %v3195 = vand.u32 %v3194, 4294901760
    %3196 = vmatpush1.msra.mxu0 %v3195
    %3197 = vmatprep.subr.mxu0 0.0
    %v3198 = vand.u32 %v2030, 4294901760
    %v3199 = vsub.f32 %v2030, %v3198
    %v3200 = vand.u32 %v3199, 4294901760
    %v3201 = vsub.f32 %v3199, %v3200
    %v3202 = vand.u32 %v3201, 4294901760
    %3203 = vmatpush1.msra.mxu0 %v3202
    %3204 = vmatprep.subr.mxu0 0.0
    %v3205 = vand.u32 %v2029, 4294901760
    %v3206 = vsub.f32 %v2029, %v3205
    %v3207 = vand.u32 %v3206, 4294901760
    %v3208 = vsub.f32 %v3206, %v3207
    %v3209 = vand.u32 %v3208, 4294901760
    %3210 = vmatpush1.msra.mxu0 %v3209
    %3211 = vmatprep.subr.mxu0 0.0
    %v3212 = vand.u32 %v2028, 4294901760
    %v3213 = vsub.f32 %v2028, %v3212
    %v3214 = vand.u32 %v3213, 4294901760
    %v3215 = vsub.f32 %v3213, %v3214
    %v3216 = vand.u32 %v3215, 4294901760
    %3217 = vmatpush1.msra.mxu0 %v3216
    %3218 = vmatprep.subr.mxu0 0.0
    %v3219 = vand.u32 %v2027, 4294901760
    %v3220 = vsub.f32 %v2027, %v3219
    %v3221 = vand.u32 %v3220, 4294901760
    %v3222 = vsub.f32 %v3220, %v3221
    %v3223 = vand.u32 %v3222, 4294901760
    %3224 = vmatpush1.msra.mxu0 %v3223
    %3225 = vmatprep.subr.mxu0 0.0
    %v3226 = vand.u32 %v2026, 4294901760
    %v3227 = vsub.f32 %v2026, %v3226
    %v3228 = vand.u32 %v3227, 4294901760
    %v3229 = vsub.f32 %v3227, %v3228
    %v3230 = vand.u32 %v3229, 4294901760
    %3231 = vmatpush1.msra.mxu0 %v3230
    %3232 = vmatprep.subr.mxu0 0.0
    %v3233 = vand.u32 %v2025, 4294901760
    %v3234 = vsub.f32 %v2025, %v3233
    %v3235 = vand.u32 %v3234, 4294901760
    %v3236 = vsub.f32 %v3234, %v3235
    %v3237 = vand.u32 %v3236, 4294901760
    %3238 = vmatpush1.msra.mxu0 %v3237
    %3239 = vmatprep.subr.mxu0 0.0
    %v3240 = vand.u32 %v2024, 4294901760
    %v3241 = vsub.f32 %v2024, %v3240
    %v3242 = vand.u32 %v3241, 4294901760
    %v3243 = vsub.f32 %v3241, %v3242
    %v3244 = vand.u32 %v3243, 4294901760
    %3245 = vmatpush1.msra.mxu0 %v3244
    %3246 = vmatprep.subr.mxu0 0.0
    %v3247 = vand.u32 %v2023, 4294901760
    %v3248 = vsub.f32 %v2023, %v3247
    %v3249 = vand.u32 %v3248, 4294901760
    %v3250 = vsub.f32 %v3248, %v3249
    %v3251 = vand.u32 %v3250, 4294901760
    %3252 = vmatpush1.msra.mxu0 %v3251
    %3253 = vmatprep.subr.mxu0 0.0
    %v3254 = vand.u32 %v2022, 4294901760
    %v3255 = vsub.f32 %v2022, %v3254
    %v3256 = vand.u32 %v3255, 4294901760
    %v3257 = vsub.f32 %v3255, %v3256
    %v3258 = vand.u32 %v3257, 4294901760
    %3259 = vmatpush1.msra.mxu0 %v3258
    %3260 = vmatprep.subr.mxu0 0.0
    %v3261 = vand.u32 %v2021, 4294901760
    %v3262 = vsub.f32 %v2021, %v3261
    %v3263 = vand.u32 %v3262, 4294901760
    %v3264 = vsub.f32 %v3262, %v3263
    %v3265 = vand.u32 %v3264, 4294901760
    %3266 = vmatpush1.msra.mxu0 %v3265
    %3267 = vmatprep.subr.mxu0 0.0
    %v3268 = vand.u32 %v2020, 4294901760
    %v3269 = vsub.f32 %v2020, %v3268
    %v3270 = vand.u32 %v3269, 4294901760
    %v3271 = vsub.f32 %v3269, %v3270
    %v3272 = vand.u32 %v3271, 4294901760
    %3273 = vmatpush1.msra.mxu0 %v3272
    %3274 = vmatprep.subr.mxu0 0.0
    %v3275 = vand.u32 %v2019, 4294901760
    %v3276 = vsub.f32 %v2019, %v3275
    %v3277 = vand.u32 %v3276, 4294901760
    %v3278 = vsub.f32 %v3276, %v3277
    %v3279 = vand.u32 %v3278, 4294901760
    %3280 = vmatpush1.msra.mxu0 %v3279
    %3281 = vmatprep.subr.mxu0 0.0
    %v3282 = vand.u32 %v2018, 4294901760
    %v3283 = vsub.f32 %v2018, %v3282
    %v3284 = vand.u32 %v3283, 4294901760
    %v3285 = vsub.f32 %v3283, %v3284
    %v3286 = vand.u32 %v3285, 4294901760
    %3287 = vmatpush1.msra.mxu0 %v3286
    %3288 = vmatprep.subr.mxu0 0.0
    %v3289 = vand.u32 %v2017, 4294901760
    %v3290 = vsub.f32 %v2017, %v3289
    %v3291 = vand.u32 %v3290, 4294901760
    %v3292 = vsub.f32 %v3290, %v3291
    %v3293 = vand.u32 %v3292, 4294901760
    %3294 = vmatpush1.msra.mxu0 %v3293
    %3295 = vmatprep.subr.mxu0 0.0
    %v3296 = vand.u32 %v2016, 4294901760
    %v3297 = vsub.f32 %v2016, %v3296
    %v3298 = vand.u32 %v3297, 4294901760
    %v3299 = vsub.f32 %v3297, %v3298
    %v3300 = vand.u32 %v3299, 4294901760
    %3301 = vmatpush1.msra.mxu0 %v3300
    %3302 = vmatprep.subr.mxu0 0.0
    %3303 = vmatpush2.msra.mxu0 0.0
    %3304 = vmatprep.subr.mxu0 0.0
    %3305 = vmatpush2.msra.mxu0 0.0
    %3306 = vmatprep.subr.mxu0 0.0
    %3307 = vmatpush2.msra.mxu0 0.0
    %3308 = vmatprep.subr.mxu0 0.0
    %3309 = vmatpush2.msra.mxu0 0.0
    %3310 = vmatprep.subr.mxu0 0.0
    %3311 = vmatpush2.msra.mxu0 0.0
    %3312 = vmatprep.subr.mxu0 0.0
    %3313 = vmatpush2.msra.mxu0 0.0
    %3314 = vmatprep.subr.mxu0 0.0
    %3315 = vmatpush2.msra.mxu0 0.0
    %3316 = vmatprep.subr.mxu0 0.0
    %3317 = vmatpush2.msra.mxu0 0.0
    %3318 = vmatprep.subr.mxu0 0.0
    %3319 = vmatpush2.msra.mxu0 0.0
    %3320 = vmatprep.subr.mxu0 0.0
    %3321 = vmatpush2.msra.mxu0 0.0
    %3322 = vmatprep.subr.mxu0 0.0
    %3323 = vmatpush2.msra.mxu0 0.0
    %3324 = vmatprep.subr.mxu0 0.0
    %3325 = vmatpush2.msra.mxu0 0.0
    %3326 = vmatprep.subr.mxu0 0.0
    %3327 = vmatpush2.msra.mxu0 0.0
    %3328 = vmatprep.subr.mxu0 0.0
    %3329 = vmatpush2.msra.mxu0 0.0
    %3330 = vmatprep.subr.mxu0 0.0
    %3331 = vmatpush2.msra.mxu0 0.0
    %3332 = vmatprep.subr.mxu0 0.0
    %3333 = vmatpush2.msra.mxu0 0.0
    %3334 = vmatprep.mubr.f32.mxu0 0.0
    %v3335 = vand.u32 %v1980, 4294901760
    %3336 = vmatmul.mubr.f32.gmra.mxu0 %v3335
    %v3337 = vpop.f32.mrf.mxu0
    %v3338 = vadd.f32 %v3157, %v3337
    %v3339 = vpop.f32.mrf.mxu0
    %3340 = vmatprep.mubr.f32.mxu0 0.0
    %v3341 = vand.u32 %v1982, 4294901760
    %3342 = vmatmul.mubr.f32.gmra.mxu0 %v3341
    %v3343 = vpop.f32.mrf.mxu0
    %v3344 = vadd.f32 %v3167, %v3343
    %v3345 = vpop.f32.mrf.mxu0
    %3346 = vmatprep.mubr.f32.mxu0 0.0
    %v3347 = vand.u32 %v1981, 4294901760
    %3348 = vmatmul.mubr.f32.gmra.mxu0 %v3347
    %v3349 = vpop.f32.mrf.mxu0
    %v3350 = vadd.f32 %v3177, %v3349
    %v3351 = vpop.f32.mrf.mxu0
    %3352 = vmatprep.mubr.f32.mxu0 0.0
    %v3353 = vand.u32 %v1983, 4294901760
    %3354 = vmatmul.mubr.f32.gmra.mxu0 %v3353
    %v3355 = vpop.f32.mrf.mxu0
    %v3356 = vadd.f32 %v3187, %v3355
    %v3357 = vpop.f32.mrf.mxu0
    %3358 = vdwg.mxu0
    %3359 = vmatprep.subr.mxu0 0.0
    %v3360 = vand.u32 %v2031, 4294901760
    %v3361 = vsub.f32 %v2031, %v3360
    %3362 = vmatpush1.msra.mxu0 %v3361
    %3363 = vmatprep.subr.mxu0 0.0
    %v3364 = vand.u32 %v2030, 4294901760
    %v3365 = vsub.f32 %v2030, %v3364
    %3366 = vmatpush1.msra.mxu0 %v3365
    %3367 = vmatprep.subr.mxu0 0.0
    %v3368 = vand.u32 %v2029, 4294901760
    %v3369 = vsub.f32 %v2029, %v3368
    %3370 = vmatpush1.msra.mxu0 %v3369
    %3371 = vmatprep.subr.mxu0 0.0
    %v3372 = vand.u32 %v2028, 4294901760
    %v3373 = vsub.f32 %v2028, %v3372
    %3374 = vmatpush1.msra.mxu0 %v3373
    %3375 = vmatprep.subr.mxu0 0.0
    %v3376 = vand.u32 %v2027, 4294901760
    %v3377 = vsub.f32 %v2027, %v3376
    %3378 = vmatpush1.msra.mxu0 %v3377
    %3379 = vmatprep.subr.mxu0 0.0
    %v3380 = vand.u32 %v2026, 4294901760
    %v3381 = vsub.f32 %v2026, %v3380
    %3382 = vmatpush1.msra.mxu0 %v3381
    %3383 = vmatprep.subr.mxu0 0.0
    %v3384 = vand.u32 %v2025, 4294901760
    %v3385 = vsub.f32 %v2025, %v3384
    %3386 = vmatpush1.msra.mxu0 %v3385
    %3387 = vmatprep.subr.mxu0 0.0
    %v3388 = vand.u32 %v2024, 4294901760
    %v3389 = vsub.f32 %v2024, %v3388
    %3390 = vmatpush1.msra.mxu0 %v3389
    %3391 = vmatprep.subr.mxu0 0.0
    %v3392 = vand.u32 %v2023, 4294901760
    %v3393 = vsub.f32 %v2023, %v3392
    %3394 = vmatpush1.msra.mxu0 %v3393
    %3395 = vmatprep.subr.mxu0 0.0
    %v3396 = vand.u32 %v2022, 4294901760
    %v3397 = vsub.f32 %v2022, %v3396
    %3398 = vmatpush1.msra.mxu0 %v3397
    %3399 = vmatprep.subr.mxu0 0.0
    %v3400 = vand.u32 %v2021, 4294901760
    %v3401 = vsub.f32 %v2021, %v3400
    %3402 = vmatpush1.msra.mxu0 %v3401
    %3403 = vmatprep.subr.mxu0 0.0
    %v3404 = vand.u32 %v2020, 4294901760
    %v3405 = vsub.f32 %v2020, %v3404
    %3406 = vmatpush1.msra.mxu0 %v3405
    %3407 = vmatprep.subr.mxu0 0.0
    %v3408 = vand.u32 %v2019, 4294901760
    %v3409 = vsub.f32 %v2019, %v3408
    %3410 = vmatpush1.msra.mxu0 %v3409
    %3411 = vmatprep.subr.mxu0 0.0
    %v3412 = vand.u32 %v2018, 4294901760
    %v3413 = vsub.f32 %v2018, %v3412
    %3414 = vmatpush1.msra.mxu0 %v3413
    %3415 = vmatprep.subr.mxu0 0.0
    %v3416 = vand.u32 %v2017, 4294901760
    %v3417 = vsub.f32 %v2017, %v3416
    %3418 = vmatpush1.msra.mxu0 %v3417
    %3419 = vmatprep.subr.mxu0 0.0
    %v3420 = vand.u32 %v2016, 4294901760
    %v3421 = vsub.f32 %v2016, %v3420
    %3422 = vmatpush1.msra.mxu0 %v3421
    %3423 = vmatprep.subr.mxu0 0.0
    %3424 = vmatpush2.msra.mxu0 0.0
    %3425 = vmatprep.subr.mxu0 0.0
    %3426 = vmatpush2.msra.mxu0 0.0
    %3427 = vmatprep.subr.mxu0 0.0
    %3428 = vmatpush2.msra.mxu0 0.0
    %3429 = vmatprep.subr.mxu0 0.0
    %3430 = vmatpush2.msra.mxu0 0.0
    %3431 = vmatprep.subr.mxu0 0.0
    %3432 = vmatpush2.msra.mxu0 0.0
    %3433 = vmatprep.subr.mxu0 0.0
    %3434 = vmatpush2.msra.mxu0 0.0
    %3435 = vmatprep.subr.mxu0 0.0
    %3436 = vmatpush2.msra.mxu0 0.0
    %3437 = vmatprep.subr.mxu0 0.0
    %3438 = vmatpush2.msra.mxu0 0.0
    %3439 = vmatprep.subr.mxu0 0.0
    %3440 = vmatpush2.msra.mxu0 0.0
    %3441 = vmatprep.subr.mxu0 0.0
    %3442 = vmatpush2.msra.mxu0 0.0
    %3443 = vmatprep.subr.mxu0 0.0
    %3444 = vmatpush2.msra.mxu0 0.0
    %3445 = vmatprep.subr.mxu0 0.0
    %3446 = vmatpush2.msra.mxu0 0.0
    %3447 = vmatprep.subr.mxu0 0.0
    %3448 = vmatpush2.msra.mxu0 0.0
    %3449 = vmatprep.subr.mxu0 0.0
    %3450 = vmatpush2.msra.mxu0 0.0
    %3451 = vmatprep.subr.mxu0 0.0
    %3452 = vmatpush2.msra.mxu0 0.0
    %3453 = vmatprep.subr.mxu0 0.0
    %3454 = vmatpush2.msra.mxu0 0.0
    %3455 = vmatprep.mubr.f32.mxu0 0.0
    %v3456 = vand.u32 %v1980, 4294901760
    %v3457 = vsub.f32 %v1980, %v3456
    %3458 = vmatmul.mubr.f32.gmra.mxu0 %v3457
    %v3459 = vpop.f32.mrf.mxu0
    %v3460 = vadd.f32 %v3338, %v3459
    %v3461 = vpop.f32.mrf.mxu0
    %3462 = vmatprep.mubr.f32.mxu0 0.0
    %v3463 = vand.u32 %v1982, 4294901760
    %v3464 = vsub.f32 %v1982, %v3463
    %3465 = vmatmul.mubr.f32.gmra.mxu0 %v3464
    %v3466 = vpop.f32.mrf.mxu0
    %v3467 = vadd.f32 %v3344, %v3466
    %v3468 = vpop.f32.mrf.mxu0
    %3469 = vmatprep.mubr.f32.mxu0 0.0
    %v3470 = vand.u32 %v1981, 4294901760
    %v3471 = vsub.f32 %v1981, %v3470
    %3472 = vmatmul.mubr.f32.gmra.mxu0 %v3471
    %v3473 = vpop.f32.mrf.mxu0
    %v3474 = vadd.f32 %v3350, %v3473
    %v3475 = vpop.f32.mrf.mxu0
    %3476 = vmatprep.mubr.f32.mxu0 0.0
    %v3477 = vand.u32 %v1983, 4294901760
    %v3478 = vsub.f32 %v1983, %v3477
    %3479 = vmatmul.mubr.f32.gmra.mxu0 %v3478
    %v3480 = vpop.f32.mrf.mxu0
    %v3481 = vadd.f32 %v3356, %v3480
    %v3482 = vpop.f32.mrf.mxu0
    %3483 = vdwg.mxu0
    %3484 = vmatprep.subr.mxu0 0.0
    %v3485 = vand.u32 %v2031, 4294901760
    %3486 = vmatpush1.msra.mxu0 %v3485
    %3487 = vmatprep.subr.mxu0 0.0
    %v3488 = vand.u32 %v2030, 4294901760
    %3489 = vmatpush1.msra.mxu0 %v3488
    %3490 = vmatprep.subr.mxu0 0.0
    %v3491 = vand.u32 %v2029, 4294901760
    %3492 = vmatpush1.msra.mxu0 %v3491
    %3493 = vmatprep.subr.mxu0 0.0
    %v3494 = vand.u32 %v2028, 4294901760
    %3495 = vmatpush1.msra.mxu0 %v3494
    %3496 = vmatprep.subr.mxu0 0.0
    %v3497 = vand.u32 %v2027, 4294901760
    %3498 = vmatpush1.msra.mxu0 %v3497
    %3499 = vmatprep.subr.mxu0 0.0
    %v3500 = vand.u32 %v2026, 4294901760
    %3501 = vmatpush1.msra.mxu0 %v3500
    %3502 = vmatprep.subr.mxu0 0.0
    %v3503 = vand.u32 %v2025, 4294901760
    %3504 = vmatpush1.msra.mxu0 %v3503
    %3505 = vmatprep.subr.mxu0 0.0
    %v3506 = vand.u32 %v2024, 4294901760
    %3507 = vmatpush1.msra.mxu0 %v3506
    %3508 = vmatprep.subr.mxu0 0.0
    %v3509 = vand.u32 %v2023, 4294901760
    %3510 = vmatpush1.msra.mxu0 %v3509
    %3511 = vmatprep.subr.mxu0 0.0
    %v3512 = vand.u32 %v2022, 4294901760
    %3513 = vmatpush1.msra.mxu0 %v3512
    %3514 = vmatprep.subr.mxu0 0.0
    %v3515 = vand.u32 %v2021, 4294901760
    %3516 = vmatpush1.msra.mxu0 %v3515
    %3517 = vmatprep.subr.mxu0 0.0
    %v3518 = vand.u32 %v2020, 4294901760
    %3519 = vmatpush1.msra.mxu0 %v3518
    %3520 = vmatprep.subr.mxu0 0.0
    %v3521 = vand.u32 %v2019, 4294901760
    %3522 = vmatpush1.msra.mxu0 %v3521
    %3523 = vmatprep.subr.mxu0 0.0
    %v3524 = vand.u32 %v2018, 4294901760
    %3525 = vmatpush1.msra.mxu0 %v3524
    %3526 = vmatprep.subr.mxu0 0.0
    %v3527 = vand.u32 %v2017, 4294901760
    %3528 = vmatpush1.msra.mxu0 %v3527
    %3529 = vmatprep.subr.mxu0 0.0
    %v3530 = vand.u32 %v2016, 4294901760
    %3531 = vmatpush1.msra.mxu0 %v3530
    %3532 = vmatprep.subr.mxu0 0.0
    %3533 = vmatpush2.msra.mxu0 0.0
    %3534 = vmatprep.subr.mxu0 0.0
    %3535 = vmatpush2.msra.mxu0 0.0
    %3536 = vmatprep.subr.mxu0 0.0
    %3537 = vmatpush2.msra.mxu0 0.0
    %3538 = vmatprep.subr.mxu0 0.0
    %3539 = vmatpush2.msra.mxu0 0.0
    %3540 = vmatprep.subr.mxu0 0.0
    %3541 = vmatpush2.msra.mxu0 0.0
    %3542 = vmatprep.subr.mxu0 0.0
    %3543 = vmatpush2.msra.mxu0 0.0
    %3544 = vmatprep.subr.mxu0 0.0
    %3545 = vmatpush2.msra.mxu0 0.0
    %3546 = vmatprep.subr.mxu0 0.0
    %3547 = vmatpush2.msra.mxu0 0.0
    %3548 = vmatprep.subr.mxu0 0.0
    %3549 = vmatpush2.msra.mxu0 0.0
    %3550 = vmatprep.subr.mxu0 0.0
    %3551 = vmatpush2.msra.mxu0 0.0
    %3552 = vmatprep.subr.mxu0 0.0
    %3553 = vmatpush2.msra.mxu0 0.0
    %3554 = vmatprep.subr.mxu0 0.0
    %3555 = vmatpush2.msra.mxu0 0.0
    %3556 = vmatprep.subr.mxu0 0.0
    %3557 = vmatpush2.msra.mxu0 0.0
    %3558 = vmatprep.subr.mxu0 0.0
    %3559 = vmatpush2.msra.mxu0 0.0
    %3560 = vmatprep.subr.mxu0 0.0
    %3561 = vmatpush2.msra.mxu0 0.0
    %3562 = vmatprep.subr.mxu0 0.0
    %3563 = vmatpush2.msra.mxu0 0.0
    %3564 = vmatprep.mubr.f32.mxu0 0.0
    %v3565 = vand.u32 %v1980, 4294901760
    %v3566 = vsub.f32 %v1980, %v3565
    %v3567 = vand.u32 %v3566, 4294901760
    %3568 = vmatmul.mubr.f32.gmra.mxu0 %v3567
    %v3569 = vpop.f32.mrf.mxu0
    %v3570 = vadd.f32 %v3460, %v3569
    %v3571 = vpop.f32.mrf.mxu0
    %3572 = vmatprep.mubr.f32.mxu0 0.0
    %v3573 = vand.u32 %v1982, 4294901760
    %v3574 = vsub.f32 %v1982, %v3573
    %v3575 = vand.u32 %v3574, 4294901760
    %3576 = vmatmul.mubr.f32.gmra.mxu0 %v3575
    %v3577 = vpop.f32.mrf.mxu0
    %v3578 = vadd.f32 %v3467, %v3577
    %v3579 = vpop.f32.mrf.mxu0
    %3580 = vmatprep.mubr.f32.mxu0 0.0
    %v3581 = vand.u32 %v1981, 4294901760
    %v3582 = vsub.f32 %v1981, %v3581
    %v3583 = vand.u32 %v3582, 4294901760
    %3584 = vmatmul.mubr.f32.gmra.mxu0 %v3583
    %v3585 = vpop.f32.mrf.mxu0
    %v3586 = vadd.f32 %v3474, %v3585
    %v3587 = vpop.f32.mrf.mxu0
    %3588 = vmatprep.mubr.f32.mxu0 0.0
    %v3589 = vand.u32 %v1983, 4294901760
    %v3590 = vsub.f32 %v1983, %v3589
    %v3591 = vand.u32 %v3590, 4294901760
    %3592 = vmatmul.mubr.f32.gmra.mxu0 %v3591
    %v3593 = vpop.f32.mrf.mxu0
    %v3594 = vadd.f32 %v3481, %v3593
    %v3595 = vpop.f32.mrf.mxu0
    %3596 = vdwg.mxu0
    %3597 = vmatprep.subr.mxu0 0.0
    %v3598 = vand.u32 %v2031, 4294901760
    %v3599 = vsub.f32 %v2031, %v3598
    %v3600 = vand.u32 %v3599, 4294901760
    %3601 = vmatpush1.msra.mxu0 %v3600
    %3602 = vmatprep.subr.mxu0 0.0
    %v3603 = vand.u32 %v2030, 4294901760
    %v3604 = vsub.f32 %v2030, %v3603
    %v3605 = vand.u32 %v3604, 4294901760
    %3606 = vmatpush1.msra.mxu0 %v3605
    %3607 = vmatprep.subr.mxu0 0.0
    %v3608 = vand.u32 %v2029, 4294901760
    %v3609 = vsub.f32 %v2029, %v3608
    %v3610 = vand.u32 %v3609, 4294901760
    %3611 = vmatpush1.msra.mxu0 %v3610
    %3612 = vmatprep.subr.mxu0 0.0
    %v3613 = vand.u32 %v2028, 4294901760
    %v3614 = vsub.f32 %v2028, %v3613
    %v3615 = vand.u32 %v3614, 4294901760
    %3616 = vmatpush1.msra.mxu0 %v3615
    %3617 = vmatprep.subr.mxu0 0.0
    %v3618 = vand.u32 %v2027, 4294901760
    %v3619 = vsub.f32 %v2027, %v3618
    %v3620 = vand.u32 %v3619, 4294901760
    %3621 = vmatpush1.msra.mxu0 %v3620
    %3622 = vmatprep.subr.mxu0 0.0
    %v3623 = vand.u32 %v2026, 4294901760
    %v3624 = vsub.f32 %v2026, %v3623
    %v3625 = vand.u32 %v3624, 4294901760
    %3626 = vmatpush1.msra.mxu0 %v3625
    %3627 = vmatprep.subr.mxu0 0.0
    %v3628 = vand.u32 %v2025, 4294901760
    %v3629 = vsub.f32 %v2025, %v3628
    %v3630 = vand.u32 %v3629, 4294901760
    %3631 = vmatpush1.msra.mxu0 %v3630
    %3632 = vmatprep.subr.mxu0 0.0
    %v3633 = vand.u32 %v2024, 4294901760
    %v3634 = vsub.f32 %v2024, %v3633
    %v3635 = vand.u32 %v3634, 4294901760
    %3636 = vmatpush1.msra.mxu0 %v3635
    %3637 = vmatprep.subr.mxu0 0.0
    %v3638 = vand.u32 %v2023, 4294901760
    %v3639 = vsub.f32 %v2023, %v3638
    %v3640 = vand.u32 %v3639, 4294901760
    %3641 = vmatpush1.msra.mxu0 %v3640
    %3642 = vmatprep.subr.mxu0 0.0
    %v3643 = vand.u32 %v2022, 4294901760
    %v3644 = vsub.f32 %v2022, %v3643
    %v3645 = vand.u32 %v3644, 4294901760
    %3646 = vmatpush1.msra.mxu0 %v3645
    %3647 = vmatprep.subr.mxu0 0.0
    %v3648 = vand.u32 %v2021, 4294901760
    %v3649 = vsub.f32 %v2021, %v3648
    %v3650 = vand.u32 %v3649, 4294901760
    %3651 = vmatpush1.msra.mxu0 %v3650
    %3652 = vmatprep.subr.mxu0 0.0
    %v3653 = vand.u32 %v2020, 4294901760
    %v3654 = vsub.f32 %v2020, %v3653
    %v3655 = vand.u32 %v3654, 4294901760
    %3656 = vmatpush1.msra.mxu0 %v3655
    %3657 = vmatprep.subr.mxu0 0.0
    %v3658 = vand.u32 %v2019, 4294901760
    %v3659 = vsub.f32 %v2019, %v3658
    %v3660 = vand.u32 %v3659, 4294901760
    %3661 = vmatpush1.msra.mxu0 %v3660
    %3662 = vmatprep.subr.mxu0 0.0
    %v3663 = vand.u32 %v2018, 4294901760
    %v3664 = vsub.f32 %v2018, %v3663
    %v3665 = vand.u32 %v3664, 4294901760
    %3666 = vmatpush1.msra.mxu0 %v3665
    %3667 = vmatprep.subr.mxu0 0.0
    %v3668 = vand.u32 %v2017, 4294901760
    %v3669 = vsub.f32 %v2017, %v3668
    %v3670 = vand.u32 %v3669, 4294901760
    %3671 = vmatpush1.msra.mxu0 %v3670
    %3672 = vmatprep.subr.mxu0 0.0
    %v3673 = vand.u32 %v2016, 4294901760
    %v3674 = vsub.f32 %v2016, %v3673
    %v3675 = vand.u32 %v3674, 4294901760
    %3676 = vmatpush1.msra.mxu0 %v3675
    %3677 = vmatprep.subr.mxu0 0.0
    %3678 = vmatpush2.msra.mxu0 0.0
    %3679 = vmatprep.subr.mxu0 0.0
    %3680 = vmatpush2.msra.mxu0 0.0
    %3681 = vmatprep.subr.mxu0 0.0
    %3682 = vmatpush2.msra.mxu0 0.0
    %3683 = vmatprep.subr.mxu0 0.0
    %3684 = vmatpush2.msra.mxu0 0.0
    %3685 = vmatprep.subr.mxu0 0.0
    %3686 = vmatpush2.msra.mxu0 0.0
    %3687 = vmatprep.subr.mxu0 0.0
    %3688 = vmatpush2.msra.mxu0 0.0
    %3689 = vmatprep.subr.mxu0 0.0
    %3690 = vmatpush2.msra.mxu0 0.0
    %3691 = vmatprep.subr.mxu0 0.0
    %3692 = vmatpush2.msra.mxu0 0.0
    %3693 = vmatprep.subr.mxu0 0.0
    %3694 = vmatpush2.msra.mxu0 0.0
    %3695 = vmatprep.subr.mxu0 0.0
    %3696 = vmatpush2.msra.mxu0 0.0
    %3697 = vmatprep.subr.mxu0 0.0
    %3698 = vmatpush2.msra.mxu0 0.0
    %3699 = vmatprep.subr.mxu0 0.0
    %3700 = vmatpush2.msra.mxu0 0.0
    %3701 = vmatprep.subr.mxu0 0.0
    %3702 = vmatpush2.msra.mxu0 0.0
    %3703 = vmatprep.subr.mxu0 0.0
    %3704 = vmatpush2.msra.mxu0 0.0
    %3705 = vmatprep.subr.mxu0 0.0
    %3706 = vmatpush2.msra.mxu0 0.0
    %3707 = vmatprep.subr.mxu0 0.0
    %3708 = vmatpush2.msra.mxu0 0.0
    %3709 = vmatprep.mubr.f32.mxu0 0.0
    %v3710 = vand.u32 %v1980, 4294901760
    %3711 = vmatmul.mubr.f32.gmra.mxu0 %v3710
    %v3712 = vpop.f32.mrf.mxu0
    %v3713 = vadd.f32 %v3570, %v3712
    %v3714 = vpop.f32.mrf.mxu0
    %3715 = vmatprep.mubr.f32.mxu0 0.0
    %v3716 = vand.u32 %v1982, 4294901760
    %3717 = vmatmul.mubr.f32.gmra.mxu0 %v3716
    %v3718 = vpop.f32.mrf.mxu0
    %v3719 = vadd.f32 %v3578, %v3718
    %v3720 = vpop.f32.mrf.mxu0
    %3721 = vmatprep.mubr.f32.mxu0 0.0
    %v3722 = vand.u32 %v1981, 4294901760
    %3723 = vmatmul.mubr.f32.gmra.mxu0 %v3722
    %v3724 = vpop.f32.mrf.mxu0
    %v3725 = vadd.f32 %v3586, %v3724
    %v3726 = vpop.f32.mrf.mxu0
    %3727 = vmatprep.mubr.f32.mxu0 0.0
    %v3728 = vand.u32 %v1983, 4294901760
    %3729 = vmatmul.mubr.f32.gmra.mxu0 %v3728
    %v3730 = vpop.f32.mrf.mxu0
    %v3731 = vadd.f32 %v3594, %v3730
    %v3732 = vpop.f32.mrf.mxu0
    %3733 = vdwg.mxu0
    %3734 = vmatprep.subr.mxu0 0.0
    %v3735 = vand.u32 %v2031, 4294901760
    %3736 = vmatpush1.msra.mxu0 %v3735
    %3737 = vmatprep.subr.mxu0 0.0
    %v3738 = vand.u32 %v2030, 4294901760
    %3739 = vmatpush1.msra.mxu0 %v3738
    %3740 = vmatprep.subr.mxu0 0.0
    %v3741 = vand.u32 %v2029, 4294901760
    %3742 = vmatpush1.msra.mxu0 %v3741
    %3743 = vmatprep.subr.mxu0 0.0
    %v3744 = vand.u32 %v2028, 4294901760
    %3745 = vmatpush1.msra.mxu0 %v3744
    %3746 = vmatprep.subr.mxu0 0.0
    %v3747 = vand.u32 %v2027, 4294901760
    %3748 = vmatpush1.msra.mxu0 %v3747
    %3749 = vmatprep.subr.mxu0 0.0
    %v3750 = vand.u32 %v2026, 4294901760
    %3751 = vmatpush1.msra.mxu0 %v3750
    %3752 = vmatprep.subr.mxu0 0.0
    %v3753 = vand.u32 %v2025, 4294901760
    %3754 = vmatpush1.msra.mxu0 %v3753
    %3755 = vmatprep.subr.mxu0 0.0
    %v3756 = vand.u32 %v2024, 4294901760
    %3757 = vmatpush1.msra.mxu0 %v3756
    %3758 = vmatprep.subr.mxu0 0.0
    %v3759 = vand.u32 %v2023, 4294901760
    %3760 = vmatpush1.msra.mxu0 %v3759
    %3761 = vmatprep.subr.mxu0 0.0
    %v3762 = vand.u32 %v2022, 4294901760
    %3763 = vmatpush1.msra.mxu0 %v3762
    %3764 = vmatprep.subr.mxu0 0.0
    %v3765 = vand.u32 %v2021, 4294901760
    %3766 = vmatpush1.msra.mxu0 %v3765
    %3767 = vmatprep.subr.mxu0 0.0
    %v3768 = vand.u32 %v2020, 4294901760
    %3769 = vmatpush1.msra.mxu0 %v3768
    %3770 = vmatprep.subr.mxu0 0.0
    %v3771 = vand.u32 %v2019, 4294901760
    %3772 = vmatpush1.msra.mxu0 %v3771
    %3773 = vmatprep.subr.mxu0 0.0
    %v3774 = vand.u32 %v2018, 4294901760
    %3775 = vmatpush1.msra.mxu0 %v3774
    %3776 = vmatprep.subr.mxu0 0.0
    %v3777 = vand.u32 %v2017, 4294901760
    %3778 = vmatpush1.msra.mxu0 %v3777
    %3779 = vmatprep.subr.mxu0 0.0
    %v3780 = vand.u32 %v2016, 4294901760
    %3781 = vmatpush1.msra.mxu0 %v3780
    %3782 = vmatprep.subr.mxu0 0.0
    %3783 = vmatpush2.msra.mxu0 0.0
    %3784 = vmatprep.subr.mxu0 0.0
    %3785 = vmatpush2.msra.mxu0 0.0
    %3786 = vmatprep.subr.mxu0 0.0
    %3787 = vmatpush2.msra.mxu0 0.0
    %3788 = vmatprep.subr.mxu0 0.0
    %3789 = vmatpush2.msra.mxu0 0.0
    %3790 = vmatprep.subr.mxu0 0.0
    %3791 = vmatpush2.msra.mxu0 0.0
    %3792 = vmatprep.subr.mxu0 0.0
    %3793 = vmatpush2.msra.mxu0 0.0
    %3794 = vmatprep.subr.mxu0 0.0
    %3795 = vmatpush2.msra.mxu0 0.0
    %3796 = vmatprep.subr.mxu0 0.0
    %3797 = vmatpush2.msra.mxu0 0.0
    %3798 = vmatprep.subr.mxu0 0.0
    %3799 = vmatpush2.msra.mxu0 0.0
    %3800 = vmatprep.subr.mxu0 0.0
    %3801 = vmatpush2.msra.mxu0 0.0
    %3802 = vmatprep.subr.mxu0 0.0
    %3803 = vmatpush2.msra.mxu0 0.0
    %3804 = vmatprep.subr.mxu0 0.0
    %3805 = vmatpush2.msra.mxu0 0.0
    %3806 = vmatprep.subr.mxu0 0.0
    %3807 = vmatpush2.msra.mxu0 0.0
    %3808 = vmatprep.subr.mxu0 0.0
    %3809 = vmatpush2.msra.mxu0 0.0
    %3810 = vmatprep.subr.mxu0 0.0
    %3811 = vmatpush2.msra.mxu0 0.0
    %3812 = vmatprep.subr.mxu0 0.0
    %3813 = vmatpush2.msra.mxu0 0.0
    %3814 = vmatprep.mubr.f32.mxu0 0.0
    %v3815 = vand.u32 %v1980, 4294901760
    %3816 = vmatmul.mubr.f32.gmra.mxu0 %v3815
    %v3817 = vpop.f32.mrf.mxu0
    %v3818 = vadd.f32 %v3713, %v3817
    %v3819 = vpop.f32.mrf.mxu0
    %3820 = vmatprep.mubr.f32.mxu0 0.0
    %v3821 = vand.u32 %v1982, 4294901760
    %3822 = vmatmul.mubr.f32.gmra.mxu0 %v3821
    %v3823 = vpop.f32.mrf.mxu0
    %v3824 = vadd.f32 %v3719, %v3823
    %v3825 = vpop.f32.mrf.mxu0
    %3826 = vmatprep.mubr.f32.mxu0 0.0
    %v3827 = vand.u32 %v1981, 4294901760
    %3828 = vmatmul.mubr.f32.gmra.mxu0 %v3827
    %v3829 = vpop.f32.mrf.mxu0
    %v3830 = vadd.f32 %v3725, %v3829
    %v3831 = vpop.f32.mrf.mxu0
    %3832 = vmatprep.mubr.f32.mxu0 0.0
    %v3833 = vand.u32 %v1983, 4294901760
    %3834 = vmatmul.mubr.f32.gmra.mxu0 %v3833
    %v3835 = vpop.f32.mrf.mxu0
    %v3836 = vadd.f32 %v3731, %v3835
    %v3837 = vpop.f32.mrf.mxu0
    %3838 = vdwg.mxu0
    %v3839 = vld [vmem:[#allocation8] sm:$0xff]
    %v3840 = vld [vmem:[#allocation8 + $0x8] sm:$0xff]
    %v3841 = vld [vmem:[#allocation8 + $0x10] sm:$0xff]
    %v3842 = vld [vmem:[#allocation8 + $0x18] sm:$0xff]
    %v3843 = vld [vmem:[#allocation8 + $0x20] sm:$0xff]
    %v3844 = vld [vmem:[#allocation8 + $0x28] sm:$0xff]
    %v3845 = vld [vmem:[#allocation8 + $0x30] sm:$0xff]
    %v3846 = vld [vmem:[#allocation8 + $0x38] sm:$0xff]
    %v3847 = vld [vmem:[#allocation8 + $0x40] sm:$0xff]
    %v3848 = vld [vmem:[#allocation8 + $0x48] sm:$0xff]
    %v3849 = vld [vmem:[#allocation8 + $0x50] sm:$0xff]
    %v3850 = vld [vmem:[#allocation8 + $0x58] sm:$0xff]
    %v3851 = vld [vmem:[#allocation8 + $0x60] sm:$0xff]
    %v3852 = vld [vmem:[#allocation8 + $0x68] sm:$0xff]
    %v3853 = vld [vmem:[#allocation8 + $0x70] sm:$0xff]
    %v3854 = vld [vmem:[#allocation8 + $0x78] sm:$0xff]
    %v3855 = vld [vmem:[%s6] sm:$0x1]
    %v3857 = vlaneseq
    %v3858 = vshrl.u32 %v3857, 7
    %v3859 = vsub.s32 0, %v3858
    %v3860 = vrot.slane %v3855, %v3859
    %3862 = vmatprep.subr.mxu0 0.0
    %v3863 = vand.u32 %v3854, 4294901760
    %3864 = vmatpush1.msra.mxu0 %v3863
    %3865 = vmatprep.subr.mxu0 0.0
    %v3866 = vand.u32 %v3853, 4294901760
    %3867 = vmatpush1.msra.mxu0 %v3866
    %3868 = vmatprep.subr.mxu0 0.0
    %v3869 = vand.u32 %v3852, 4294901760
    %3870 = vmatpush1.msra.mxu0 %v3869
    %3871 = vmatprep.subr.mxu0 0.0
    %v3872 = vand.u32 %v3851, 4294901760
    %3873 = vmatpush1.msra.mxu0 %v3872
    %3874 = vmatprep.subr.mxu0 0.0
    %v3875 = vand.u32 %v3850, 4294901760
    %3876 = vmatpush1.msra.mxu0 %v3875
    %3877 = vmatprep.subr.mxu0 0.0
    %v3878 = vand.u32 %v3849, 4294901760
    %3879 = vmatpush1.msra.mxu0 %v3878
    %3880 = vmatprep.subr.mxu0 0.0
    %v3881 = vand.u32 %v3848, 4294901760
    %3882 = vmatpush1.msra.mxu0 %v3881
    %3883 = vmatprep.subr.mxu0 0.0
    %v3884 = vand.u32 %v3847, 4294901760
    %3885 = vmatpush1.msra.mxu0 %v3884
    %3886 = vmatprep.subr.mxu0 0.0
    %v3887 = vand.u32 %v3846, 4294901760
    %3888 = vmatpush1.msra.mxu0 %v3887
    %3889 = vmatprep.subr.mxu0 0.0
    %v3890 = vand.u32 %v3845, 4294901760
    %3891 = vmatpush1.msra.mxu0 %v3890
    %3892 = vmatprep.subr.mxu0 0.0
    %v3893 = vand.u32 %v3844, 4294901760
    %3894 = vmatpush1.msra.mxu0 %v3893
    %3895 = vmatprep.subr.mxu0 0.0
    %v3896 = vand.u32 %v3843, 4294901760
    %3897 = vmatpush1.msra.mxu0 %v3896
    %3898 = vmatprep.subr.mxu0 0.0
    %v3899 = vand.u32 %v3842, 4294901760
    %3900 = vmatpush1.msra.mxu0 %v3899
    %3901 = vmatprep.subr.mxu0 0.0
    %v3902 = vand.u32 %v3841, 4294901760
    %3903 = vmatpush1.msra.mxu0 %v3902
    %3904 = vmatprep.subr.mxu0 0.0
    %v3905 = vand.u32 %v3840, 4294901760
    %3906 = vmatpush1.msra.mxu0 %v3905
    %3907 = vmatprep.subr.mxu0 0.0
    %v3908 = vand.u32 %v3839, 4294901760
    %3909 = vmatpush1.msra.mxu0 %v3908
    %3910 = vmatprep.subr.mxu0 0.0
    %3911 = vmatpush2.msra.mxu0 0.0
    %3912 = vmatprep.subr.mxu0 0.0
    %3913 = vmatpush2.msra.mxu0 0.0
    %3914 = vmatprep.subr.mxu0 0.0
    %3915 = vmatpush2.msra.mxu0 0.0
    %3916 = vmatprep.subr.mxu0 0.0
    %3917 = vmatpush2.msra.mxu0 0.0
    %3918 = vmatprep.subr.mxu0 0.0
    %3919 = vmatpush2.msra.mxu0 0.0
    %3920 = vmatprep.subr.mxu0 0.0
    %3921 = vmatpush2.msra.mxu0 0.0
    %3922 = vmatprep.subr.mxu0 0.0
    %3923 = vmatpush2.msra.mxu0 0.0
    %3924 = vmatprep.subr.mxu0 0.0
    %3925 = vmatpush2.msra.mxu0 0.0
    %3926 = vmatprep.subr.mxu0 0.0
    %3927 = vmatpush2.msra.mxu0 0.0
    %3928 = vmatprep.subr.mxu0 0.0
    %3929 = vmatpush2.msra.mxu0 0.0
    %3930 = vmatprep.subr.mxu0 0.0
    %3931 = vmatpush2.msra.mxu0 0.0
    %3932 = vmatprep.subr.mxu0 0.0
    %3933 = vmatpush2.msra.mxu0 0.0
    %3934 = vmatprep.subr.mxu0 0.0
    %3935 = vmatpush2.msra.mxu0 0.0
    %3936 = vmatprep.subr.mxu0 0.0
    %3937 = vmatpush2.msra.mxu0 0.0
    %3938 = vmatprep.subr.mxu0 0.0
    %3939 = vmatpush2.msra.mxu0 0.0
    %3940 = vmatprep.subr.mxu0 0.0
    %3941 = vmatpush2.msra.mxu0 0.0
    %3942 = vmatprep.mubr.f32.mxu0 0.0
    %v3943 = vand.u32 %v86, 4294901760
    %v3944 = vsub.f32 %v86, %v3943
    %v3945 = vand.u32 %v3944, 4294901760
    %v3946 = vsub.f32 %v3944, %v3945
    %v3947 = vand.u32 %v3946, 4294901760
    %3948 = vmatmul.mubr.f32.gmra.mxu0 %v3947
    %v3949 = vpop.f32.mrf.mxu0
    %v3950 = vadd.f32 %v3860, %v3949
    %v3951 = vpop.f32.mrf.mxu0
    %3952 = vmatprep.mubr.f32.mxu0 0.0
    %v3953 = vand.u32 %v89, 4294901760
    %v3954 = vsub.f32 %v89, %v3953
    %v3955 = vand.u32 %v3954, 4294901760
    %v3956 = vsub.f32 %v3954, %v3955
    %v3957 = vand.u32 %v3956, 4294901760
    %3958 = vmatmul.mubr.f32.gmra.mxu0 %v3957
    %v3959 = vpop.f32.mrf.mxu0
    %v3960 = vadd.f32 %v3860, %v3959
    %v3961 = vpop.f32.mrf.mxu0
    %3962 = vmatprep.mubr.f32.mxu0 0.0
    %v3963 = vand.u32 %v92, 4294901760
    %v3964 = vsub.f32 %v92, %v3963
    %v3965 = vand.u32 %v3964, 4294901760
    %v3966 = vsub.f32 %v3964, %v3965
    %v3967 = vand.u32 %v3966, 4294901760
    %3968 = vmatmul.mubr.f32.gmra.mxu0 %v3967
    %v3969 = vpop.f32.mrf.mxu0
    %v3970 = vadd.f32 %v3860, %v3969
    %v3971 = vpop.f32.mrf.mxu0
    %3972 = vmatprep.mubr.f32.mxu0 0.0
    %v3973 = vand.u32 %v95, 4294901760
    %v3974 = vsub.f32 %v95, %v3973
    %v3975 = vand.u32 %v3974, 4294901760
    %v3976 = vsub.f32 %v3974, %v3975
    %v3977 = vand.u32 %v3976, 4294901760
    %3978 = vmatmul.mubr.f32.gmra.mxu0 %v3977
    %v3979 = vpop.f32.mrf.mxu0
    %v3980 = vadd.f32 %v3860, %v3979
    %v3981 = vpop.f32.mrf.mxu0
    %3982 = vdwg.mxu0
    %3983 = vmatprep.subr.mxu0 0.0
    %v3984 = vand.u32 %v3854, 4294901760
    %v3985 = vsub.f32 %v3854, %v3984
    %v3986 = vand.u32 %v3985, 4294901760
    %v3987 = vsub.f32 %v3985, %v3986
    %v3988 = vand.u32 %v3987, 4294901760
    %3989 = vmatpush1.msra.mxu0 %v3988
    %3990 = vmatprep.subr.mxu0 0.0
    %v3991 = vand.u32 %v3853, 4294901760
    %v3992 = vsub.f32 %v3853, %v3991
    %v3993 = vand.u32 %v3992, 4294901760
    %v3994 = vsub.f32 %v3992, %v3993
    %v3995 = vand.u32 %v3994, 4294901760
    %3996 = vmatpush1.msra.mxu0 %v3995
    %3997 = vmatprep.subr.mxu0 0.0
    %v3998 = vand.u32 %v3852, 4294901760
    %v3999 = vsub.f32 %v3852, %v3998
    %v4000 = vand.u32 %v3999, 4294901760
    %v4001 = vsub.f32 %v3999, %v4000
    %v4002 = vand.u32 %v4001, 4294901760
    %4003 = vmatpush1.msra.mxu0 %v4002
    %4004 = vmatprep.subr.mxu0 0.0
    %v4005 = vand.u32 %v3851, 4294901760
    %v4006 = vsub.f32 %v3851, %v4005
    %v4007 = vand.u32 %v4006, 4294901760
    %v4008 = vsub.f32 %v4006, %v4007
    %v4009 = vand.u32 %v4008, 4294901760
    %4010 = vmatpush1.msra.mxu0 %v4009
    %4011 = vmatprep.subr.mxu0 0.0
    %v4012 = vand.u32 %v3850, 4294901760
    %v4013 = vsub.f32 %v3850, %v4012
    %v4014 = vand.u32 %v4013, 4294901760
    %v4015 = vsub.f32 %v4013, %v4014
    %v4016 = vand.u32 %v4015, 4294901760
    %4017 = vmatpush1.msra.mxu0 %v4016
    %4018 = vmatprep.subr.mxu0 0.0
    %v4019 = vand.u32 %v3849, 4294901760
    %v4020 = vsub.f32 %v3849, %v4019
    %v4021 = vand.u32 %v4020, 4294901760
    %v4022 = vsub.f32 %v4020, %v4021
    %v4023 = vand.u32 %v4022, 4294901760
    %4024 = vmatpush1.msra.mxu0 %v4023
    %4025 = vmatprep.subr.mxu0 0.0
    %v4026 = vand.u32 %v3848, 4294901760
    %v4027 = vsub.f32 %v3848, %v4026
    %v4028 = vand.u32 %v4027, 4294901760
    %v4029 = vsub.f32 %v4027, %v4028
    %v4030 = vand.u32 %v4029, 4294901760
    %4031 = vmatpush1.msra.mxu0 %v4030
    %4032 = vmatprep.subr.mxu0 0.0
    %v4033 = vand.u32 %v3847, 4294901760
    %v4034 = vsub.f32 %v3847, %v4033
    %v4035 = vand.u32 %v4034, 4294901760
    %v4036 = vsub.f32 %v4034, %v4035
    %v4037 = vand.u32 %v4036, 4294901760
    %4038 = vmatpush1.msra.mxu0 %v4037
    %4039 = vmatprep.subr.mxu0 0.0
    %v4040 = vand.u32 %v3846, 4294901760
    %v4041 = vsub.f32 %v3846, %v4040
    %v4042 = vand.u32 %v4041, 4294901760
    %v4043 = vsub.f32 %v4041, %v4042
    %v4044 = vand.u32 %v4043, 4294901760
    %4045 = vmatpush1.msra.mxu0 %v4044
    %4046 = vmatprep.subr.mxu0 0.0
    %v4047 = vand.u32 %v3845, 4294901760
    %v4048 = vsub.f32 %v3845, %v4047
    %v4049 = vand.u32 %v4048, 4294901760
    %v4050 = vsub.f32 %v4048, %v4049
    %v4051 = vand.u32 %v4050, 4294901760
    %4052 = vmatpush1.msra.mxu0 %v4051
    %4053 = vmatprep.subr.mxu0 0.0
    %v4054 = vand.u32 %v3844, 4294901760
    %v4055 = vsub.f32 %v3844, %v4054
    %v4056 = vand.u32 %v4055, 4294901760
    %v4057 = vsub.f32 %v4055, %v4056
    %v4058 = vand.u32 %v4057, 4294901760
    %4059 = vmatpush1.msra.mxu0 %v4058
    %4060 = vmatprep.subr.mxu0 0.0
    %v4061 = vand.u32 %v3843, 4294901760
    %v4062 = vsub.f32 %v3843, %v4061
    %v4063 = vand.u32 %v4062, 4294901760
    %v4064 = vsub.f32 %v4062, %v4063
    %v4065 = vand.u32 %v4064, 4294901760
    %4066 = vmatpush1.msra.mxu0 %v4065
    %4067 = vmatprep.subr.mxu0 0.0
    %v4068 = vand.u32 %v3842, 4294901760
    %v4069 = vsub.f32 %v3842, %v4068
    %v4070 = vand.u32 %v4069, 4294901760
    %v4071 = vsub.f32 %v4069, %v4070
    %v4072 = vand.u32 %v4071, 4294901760
    %4073 = vmatpush1.msra.mxu0 %v4072
    %4074 = vmatprep.subr.mxu0 0.0
    %v4075 = vand.u32 %v3841, 4294901760
    %v4076 = vsub.f32 %v3841, %v4075
    %v4077 = vand.u32 %v4076, 4294901760
    %v4078 = vsub.f32 %v4076, %v4077
    %v4079 = vand.u32 %v4078, 4294901760
    %4080 = vmatpush1.msra.mxu0 %v4079
    %4081 = vmatprep.subr.mxu0 0.0
    %v4082 = vand.u32 %v3840, 4294901760
    %v4083 = vsub.f32 %v3840, %v4082
    %v4084 = vand.u32 %v4083, 4294901760
    %v4085 = vsub.f32 %v4083, %v4084
    %v4086 = vand.u32 %v4085, 4294901760
    %4087 = vmatpush1.msra.mxu0 %v4086
    %4088 = vmatprep.subr.mxu0 0.0
    %v4089 = vand.u32 %v3839, 4294901760
    %v4090 = vsub.f32 %v3839, %v4089
    %v4091 = vand.u32 %v4090, 4294901760
    %v4092 = vsub.f32 %v4090, %v4091
    %v4093 = vand.u32 %v4092, 4294901760
    %4094 = vmatpush1.msra.mxu0 %v4093
    %4095 = vmatprep.subr.mxu0 0.0
    %4096 = vmatpush2.msra.mxu0 0.0
    %4097 = vmatprep.subr.mxu0 0.0
    %4098 = vmatpush2.msra.mxu0 0.0
    %4099 = vmatprep.subr.mxu0 0.0
    %4100 = vmatpush2.msra.mxu0 0.0
    %4101 = vmatprep.subr.mxu0 0.0
    %4102 = vmatpush2.msra.mxu0 0.0
    %4103 = vmatprep.subr.mxu0 0.0
    %4104 = vmatpush2.msra.mxu0 0.0
    %4105 = vmatprep.subr.mxu0 0.0
    %4106 = vmatpush2.msra.mxu0 0.0
    %4107 = vmatprep.subr.mxu0 0.0
    %4108 = vmatpush2.msra.mxu0 0.0
    %4109 = vmatprep.subr.mxu0 0.0
    %4110 = vmatpush2.msra.mxu0 0.0
    %4111 = vmatprep.subr.mxu0 0.0
    %4112 = vmatpush2.msra.mxu0 0.0
    %4113 = vmatprep.subr.mxu0 0.0
    %4114 = vmatpush2.msra.mxu0 0.0
    %4115 = vmatprep.subr.mxu0 0.0
    %4116 = vmatpush2.msra.mxu0 0.0
    %4117 = vmatprep.subr.mxu0 0.0
    %4118 = vmatpush2.msra.mxu0 0.0
    %4119 = vmatprep.subr.mxu0 0.0
    %4120 = vmatpush2.msra.mxu0 0.0
    %4121 = vmatprep.subr.mxu0 0.0
    %4122 = vmatpush2.msra.mxu0 0.0
    %4123 = vmatprep.subr.mxu0 0.0
    %4124 = vmatpush2.msra.mxu0 0.0
    %4125 = vmatprep.subr.mxu0 0.0
    %4126 = vmatpush2.msra.mxu0 0.0
    %4127 = vmatprep.mubr.f32.mxu0 0.0
    %v4128 = vand.u32 %v86, 4294901760
    %4129 = vmatmul.mubr.f32.gmra.mxu0 %v4128
    %v4130 = vpop.f32.mrf.mxu0
    %v4131 = vadd.f32 %v3950, %v4130
    %v4132 = vpop.f32.mrf.mxu0
    %4133 = vmatprep.mubr.f32.mxu0 0.0
    %v4134 = vand.u32 %v89, 4294901760
    %4135 = vmatmul.mubr.f32.gmra.mxu0 %v4134
    %v4136 = vpop.f32.mrf.mxu0
    %v4137 = vadd.f32 %v3960, %v4136
    %v4138 = vpop.f32.mrf.mxu0
    %4139 = vmatprep.mubr.f32.mxu0 0.0
    %v4140 = vand.u32 %v92, 4294901760
    %4141 = vmatmul.mubr.f32.gmra.mxu0 %v4140
    %v4142 = vpop.f32.mrf.mxu0
    %v4143 = vadd.f32 %v3970, %v4142
    %v4144 = vpop.f32.mrf.mxu0
    %4145 = vmatprep.mubr.f32.mxu0 0.0
    %v4146 = vand.u32 %v95, 4294901760
    %4147 = vmatmul.mubr.f32.gmra.mxu0 %v4146
    %v4148 = vpop.f32.mrf.mxu0
    %v4149 = vadd.f32 %v3980, %v4148
    %v4150 = vpop.f32.mrf.mxu0
    %4151 = vdwg.mxu0
    %4152 = vmatprep.subr.mxu0 0.0
    %v4153 = vand.u32 %v3854, 4294901760
    %v4154 = vsub.f32 %v3854, %v4153
    %4155 = vmatpush1.msra.mxu0 %v4154
    %4156 = vmatprep.subr.mxu0 0.0
    %v4157 = vand.u32 %v3853, 4294901760
    %v4158 = vsub.f32 %v3853, %v4157
    %4159 = vmatpush1.msra.mxu0 %v4158
    %4160 = vmatprep.subr.mxu0 0.0
    %v4161 = vand.u32 %v3852, 4294901760
    %v4162 = vsub.f32 %v3852, %v4161
    %4163 = vmatpush1.msra.mxu0 %v4162
    %4164 = vmatprep.subr.mxu0 0.0
    %v4165 = vand.u32 %v3851, 4294901760
    %v4166 = vsub.f32 %v3851, %v4165
    %4167 = vmatpush1.msra.mxu0 %v4166
    %4168 = vmatprep.subr.mxu0 0.0
    %v4169 = vand.u32 %v3850, 4294901760
    %v4170 = vsub.f32 %v3850, %v4169
    %4171 = vmatpush1.msra.mxu0 %v4170
    %4172 = vmatprep.subr.mxu0 0.0
    %v4173 = vand.u32 %v3849, 4294901760
    %v4174 = vsub.f32 %v3849, %v4173
    %4175 = vmatpush1.msra.mxu0 %v4174
    %4176 = vmatprep.subr.mxu0 0.0
    %v4177 = vand.u32 %v3848, 4294901760
    %v4178 = vsub.f32 %v3848, %v4177
    %4179 = vmatpush1.msra.mxu0 %v4178
    %4180 = vmatprep.subr.mxu0 0.0
    %v4181 = vand.u32 %v3847, 4294901760
    %v4182 = vsub.f32 %v3847, %v4181
    %4183 = vmatpush1.msra.mxu0 %v4182
    %4184 = vmatprep.subr.mxu0 0.0
    %v4185 = vand.u32 %v3846, 4294901760
    %v4186 = vsub.f32 %v3846, %v4185
    %4187 = vmatpush1.msra.mxu0 %v4186
    %4188 = vmatprep.subr.mxu0 0.0
    %v4189 = vand.u32 %v3845, 4294901760
    %v4190 = vsub.f32 %v3845, %v4189
    %4191 = vmatpush1.msra.mxu0 %v4190
    %4192 = vmatprep.subr.mxu0 0.0
    %v4193 = vand.u32 %v3844, 4294901760
    %v4194 = vsub.f32 %v3844, %v4193
    %4195 = vmatpush1.msra.mxu0 %v4194
    %4196 = vmatprep.subr.mxu0 0.0
    %v4197 = vand.u32 %v3843, 4294901760
    %v4198 = vsub.f32 %v3843, %v4197
    %4199 = vmatpush1.msra.mxu0 %v4198
    %4200 = vmatprep.subr.mxu0 0.0
    %v4201 = vand.u32 %v3842, 4294901760
    %v4202 = vsub.f32 %v3842, %v4201
    %4203 = vmatpush1.msra.mxu0 %v4202
    %4204 = vmatprep.subr.mxu0 0.0
    %v4205 = vand.u32 %v3841, 4294901760
    %v4206 = vsub.f32 %v3841, %v4205
    %4207 = vmatpush1.msra.mxu0 %v4206
    %4208 = vmatprep.subr.mxu0 0.0
    %v4209 = vand.u32 %v3840, 4294901760
    %v4210 = vsub.f32 %v3840, %v4209
    %4211 = vmatpush1.msra.mxu0 %v4210
    %4212 = vmatprep.subr.mxu0 0.0
    %v4213 = vand.u32 %v3839, 4294901760
    %v4214 = vsub.f32 %v3839, %v4213
    %4215 = vmatpush1.msra.mxu0 %v4214
    %4216 = vmatprep.subr.mxu0 0.0
    %4217 = vmatpush2.msra.mxu0 0.0
    %4218 = vmatprep.subr.mxu0 0.0
    %4219 = vmatpush2.msra.mxu0 0.0
    %4220 = vmatprep.subr.mxu0 0.0
    %4221 = vmatpush2.msra.mxu0 0.0
    %4222 = vmatprep.subr.mxu0 0.0
    %4223 = vmatpush2.msra.mxu0 0.0
    %4224 = vmatprep.subr.mxu0 0.0
    %4225 = vmatpush2.msra.mxu0 0.0
    %4226 = vmatprep.subr.mxu0 0.0
    %4227 = vmatpush2.msra.mxu0 0.0
    %4228 = vmatprep.subr.mxu0 0.0
    %4229 = vmatpush2.msra.mxu0 0.0
    %4230 = vmatprep.subr.mxu0 0.0
    %4231 = vmatpush2.msra.mxu0 0.0
    %4232 = vmatprep.subr.mxu0 0.0
    %4233 = vmatpush2.msra.mxu0 0.0
    %4234 = vmatprep.subr.mxu0 0.0
    %4235 = vmatpush2.msra.mxu0 0.0
    %4236 = vmatprep.subr.mxu0 0.0
    %4237 = vmatpush2.msra.mxu0 0.0
    %4238 = vmatprep.subr.mxu0 0.0
    %4239 = vmatpush2.msra.mxu0 0.0
    %4240 = vmatprep.subr.mxu0 0.0
    %4241 = vmatpush2.msra.mxu0 0.0
    %4242 = vmatprep.subr.mxu0 0.0
    %4243 = vmatpush2.msra.mxu0 0.0
    %4244 = vmatprep.subr.mxu0 0.0
    %4245 = vmatpush2.msra.mxu0 0.0
    %4246 = vmatprep.subr.mxu0 0.0
    %4247 = vmatpush2.msra.mxu0 0.0
    %4248 = vmatprep.mubr.f32.mxu0 0.0
    %v4249 = vand.u32 %v86, 4294901760
    %v4250 = vsub.f32 %v86, %v4249
    %4251 = vmatmul.mubr.f32.gmra.mxu0 %v4250
    %v4252 = vpop.f32.mrf.mxu0
    %v4253 = vadd.f32 %v4131, %v4252
    %v4254 = vpop.f32.mrf.mxu0
    %4255 = vmatprep.mubr.f32.mxu0 0.0
    %v4256 = vand.u32 %v89, 4294901760
    %v4257 = vsub.f32 %v89, %v4256
    %4258 = vmatmul.mubr.f32.gmra.mxu0 %v4257
    %v4259 = vpop.f32.mrf.mxu0
    %v4260 = vadd.f32 %v4137, %v4259
    %v4261 = vpop.f32.mrf.mxu0
    %4262 = vmatprep.mubr.f32.mxu0 0.0
    %v4263 = vand.u32 %v92, 4294901760
    %v4264 = vsub.f32 %v92, %v4263
    %4265 = vmatmul.mubr.f32.gmra.mxu0 %v4264
    %v4266 = vpop.f32.mrf.mxu0
    %v4267 = vadd.f32 %v4143, %v4266
    %v4268 = vpop.f32.mrf.mxu0
    %4269 = vmatprep.mubr.f32.mxu0 0.0
    %v4270 = vand.u32 %v95, 4294901760
    %v4271 = vsub.f32 %v95, %v4270
    %4272 = vmatmul.mubr.f32.gmra.mxu0 %v4271
    %v4273 = vpop.f32.mrf.mxu0
    %v4274 = vadd.f32 %v4149, %v4273
    %v4275 = vpop.f32.mrf.mxu0
    %4276 = vdwg.mxu0
    %4277 = vmatprep.subr.mxu0 0.0
    %v4278 = vand.u32 %v3854, 4294901760
    %4279 = vmatpush1.msra.mxu0 %v4278
    %4280 = vmatprep.subr.mxu0 0.0
    %v4281 = vand.u32 %v3853, 4294901760
    %4282 = vmatpush1.msra.mxu0 %v4281
    %4283 = vmatprep.subr.mxu0 0.0
    %v4284 = vand.u32 %v3852, 4294901760
    %4285 = vmatpush1.msra.mxu0 %v4284
    %4286 = vmatprep.subr.mxu0 0.0
    %v4287 = vand.u32 %v3851, 4294901760
    %4288 = vmatpush1.msra.mxu0 %v4287
    %4289 = vmatprep.subr.mxu0 0.0
    %v4290 = vand.u32 %v3850, 4294901760
    %4291 = vmatpush1.msra.mxu0 %v4290
    %4292 = vmatprep.subr.mxu0 0.0
    %v4293 = vand.u32 %v3849, 4294901760
    %4294 = vmatpush1.msra.mxu0 %v4293
    %4295 = vmatprep.subr.mxu0 0.0
    %v4296 = vand.u32 %v3848, 4294901760
    %4297 = vmatpush1.msra.mxu0 %v4296
    %4298 = vmatprep.subr.mxu0 0.0
    %v4299 = vand.u32 %v3847, 4294901760
    %4300 = vmatpush1.msra.mxu0 %v4299
    %4301 = vmatprep.subr.mxu0 0.0
    %v4302 = vand.u32 %v3846, 4294901760
    %4303 = vmatpush1.msra.mxu0 %v4302
    %4304 = vmatprep.subr.mxu0 0.0
    %v4305 = vand.u32 %v3845, 4294901760
    %4306 = vmatpush1.msra.mxu0 %v4305
    %4307 = vmatprep.subr.mxu0 0.0
    %v4308 = vand.u32 %v3844, 4294901760
    %4309 = vmatpush1.msra.mxu0 %v4308
    %4310 = vmatprep.subr.mxu0 0.0
    %v4311 = vand.u32 %v3843, 4294901760
    %4312 = vmatpush1.msra.mxu0 %v4311
    %4313 = vmatprep.subr.mxu0 0.0
    %v4314 = vand.u32 %v3842, 4294901760
    %4315 = vmatpush1.msra.mxu0 %v4314
    %4316 = vmatprep.subr.mxu0 0.0
    %v4317 = vand.u32 %v3841, 4294901760
    %4318 = vmatpush1.msra.mxu0 %v4317
    %4319 = vmatprep.subr.mxu0 0.0
    %v4320 = vand.u32 %v3840, 4294901760
    %4321 = vmatpush1.msra.mxu0 %v4320
    %4322 = vmatprep.subr.mxu0 0.0
    %v4323 = vand.u32 %v3839, 4294901760
    %4324 = vmatpush1.msra.mxu0 %v4323
    %4325 = vmatprep.subr.mxu0 0.0
    %4326 = vmatpush2.msra.mxu0 0.0
    %4327 = vmatprep.subr.mxu0 0.0
    %4328 = vmatpush2.msra.mxu0 0.0
    %4329 = vmatprep.subr.mxu0 0.0
    %4330 = vmatpush2.msra.mxu0 0.0
    %4331 = vmatprep.subr.mxu0 0.0
    %4332 = vmatpush2.msra.mxu0 0.0
    %4333 = vmatprep.subr.mxu0 0.0
    %4334 = vmatpush2.msra.mxu0 0.0
    %4335 = vmatprep.subr.mxu0 0.0
    %4336 = vmatpush2.msra.mxu0 0.0
    %4337 = vmatprep.subr.mxu0 0.0
    %4338 = vmatpush2.msra.mxu0 0.0
    %4339 = vmatprep.subr.mxu0 0.0
    %4340 = vmatpush2.msra.mxu0 0.0
    %4341 = vmatprep.subr.mxu0 0.0
    %4342 = vmatpush2.msra.mxu0 0.0
    %4343 = vmatprep.subr.mxu0 0.0
    %4344 = vmatpush2.msra.mxu0 0.0
    %4345 = vmatprep.subr.mxu0 0.0
    %4346 = vmatpush2.msra.mxu0 0.0
    %4347 = vmatprep.subr.mxu0 0.0
    %4348 = vmatpush2.msra.mxu0 0.0
    %4349 = vmatprep.subr.mxu0 0.0
    %4350 = vmatpush2.msra.mxu0 0.0
    %4351 = vmatprep.subr.mxu0 0.0
    %4352 = vmatpush2.msra.mxu0 0.0
    %4353 = vmatprep.subr.mxu0 0.0
    %4354 = vmatpush2.msra.mxu0 0.0
    %4355 = vmatprep.subr.mxu0 0.0
    %4356 = vmatpush2.msra.mxu0 0.0
    %4357 = vmatprep.mubr.f32.mxu0 0.0
    %v4358 = vand.u32 %v86, 4294901760
    %v4359 = vsub.f32 %v86, %v4358
    %v4360 = vand.u32 %v4359, 4294901760
    %4361 = vmatmul.mubr.f32.gmra.mxu0 %v4360
    %v4362 = vpop.f32.mrf.mxu0
    %v4363 = vadd.f32 %v4253, %v4362
    %v4364 = vpop.f32.mrf.mxu0
    %4365 = vmatprep.mubr.f32.mxu0 0.0
    %v4366 = vand.u32 %v89, 4294901760
    %v4367 = vsub.f32 %v89, %v4366
    %v4368 = vand.u32 %v4367, 4294901760
    %4369 = vmatmul.mubr.f32.gmra.mxu0 %v4368
    %v4370 = vpop.f32.mrf.mxu0
    %v4371 = vadd.f32 %v4260, %v4370
    %v4372 = vpop.f32.mrf.mxu0
    %4373 = vmatprep.mubr.f32.mxu0 0.0
    %v4374 = vand.u32 %v92, 4294901760
    %v4375 = vsub.f32 %v92, %v4374
    %v4376 = vand.u32 %v4375, 4294901760
    %4377 = vmatmul.mubr.f32.gmra.mxu0 %v4376
    %v4378 = vpop.f32.mrf.mxu0
    %v4379 = vadd.f32 %v4267, %v4378
    %v4380 = vpop.f32.mrf.mxu0
    %4381 = vmatprep.mubr.f32.mxu0 0.0
    %v4382 = vand.u32 %v95, 4294901760
    %v4383 = vsub.f32 %v95, %v4382
    %v4384 = vand.u32 %v4383, 4294901760
    %4385 = vmatmul.mubr.f32.gmra.mxu0 %v4384
    %v4386 = vpop.f32.mrf.mxu0
    %v4387 = vadd.f32 %v4274, %v4386
    %v4388 = vpop.f32.mrf.mxu0
    %4389 = vdwg.mxu0
    %4390 = vmatprep.subr.mxu0 0.0
    %v4391 = vand.u32 %v3854, 4294901760
    %v4392 = vsub.f32 %v3854, %v4391
    %v4393 = vand.u32 %v4392, 4294901760
    %4394 = vmatpush1.msra.mxu0 %v4393
    %4395 = vmatprep.subr.mxu0 0.0
    %v4396 = vand.u32 %v3853, 4294901760
    %v4397 = vsub.f32 %v3853, %v4396
    %v4398 = vand.u32 %v4397, 4294901760
    %4399 = vmatpush1.msra.mxu0 %v4398
    %4400 = vmatprep.subr.mxu0 0.0
    %v4401 = vand.u32 %v3852, 4294901760
    %v4402 = vsub.f32 %v3852, %v4401
    %v4403 = vand.u32 %v4402, 4294901760
    %4404 = vmatpush1.msra.mxu0 %v4403
    %4405 = vmatprep.subr.mxu0 0.0
    %v4406 = vand.u32 %v3851, 4294901760
    %v4407 = vsub.f32 %v3851, %v4406
    %v4408 = vand.u32 %v4407, 4294901760
    %4409 = vmatpush1.msra.mxu0 %v4408
    %4410 = vmatprep.subr.mxu0 0.0
    %v4411 = vand.u32 %v3850, 4294901760
    %v4412 = vsub.f32 %v3850, %v4411
    %v4413 = vand.u32 %v4412, 4294901760
    %4414 = vmatpush1.msra.mxu0 %v4413
    %4415 = vmatprep.subr.mxu0 0.0
    %v4416 = vand.u32 %v3849, 4294901760
    %v4417 = vsub.f32 %v3849, %v4416
    %v4418 = vand.u32 %v4417, 4294901760
    %4419 = vmatpush1.msra.mxu0 %v4418
    %4420 = vmatprep.subr.mxu0 0.0
    %v4421 = vand.u32 %v3848, 4294901760
    %v4422 = vsub.f32 %v3848, %v4421
    %v4423 = vand.u32 %v4422, 4294901760
    %4424 = vmatpush1.msra.mxu0 %v4423
    %4425 = vmatprep.subr.mxu0 0.0
    %v4426 = vand.u32 %v3847, 4294901760
    %v4427 = vsub.f32 %v3847, %v4426
    %v4428 = vand.u32 %v4427, 4294901760
    %4429 = vmatpush1.msra.mxu0 %v4428
    %4430 = vmatprep.subr.mxu0 0.0
    %v4431 = vand.u32 %v3846, 4294901760
    %v4432 = vsub.f32 %v3846, %v4431
    %v4433 = vand.u32 %v4432, 4294901760
    %4434 = vmatpush1.msra.mxu0 %v4433
    %4435 = vmatprep.subr.mxu0 0.0
    %v4436 = vand.u32 %v3845, 4294901760
    %v4437 = vsub.f32 %v3845, %v4436
    %v4438 = vand.u32 %v4437, 4294901760
    %4439 = vmatpush1.msra.mxu0 %v4438
    %4440 = vmatprep.subr.mxu0 0.0
    %v4441 = vand.u32 %v3844, 4294901760
    %v4442 = vsub.f32 %v3844, %v4441
    %v4443 = vand.u32 %v4442, 4294901760
    %4444 = vmatpush1.msra.mxu0 %v4443
    %4445 = vmatprep.subr.mxu0 0.0
    %v4446 = vand.u32 %v3843, 4294901760
    %v4447 = vsub.f32 %v3843, %v4446
    %v4448 = vand.u32 %v4447, 4294901760
    %4449 = vmatpush1.msra.mxu0 %v4448
    %4450 = vmatprep.subr.mxu0 0.0
    %v4451 = vand.u32 %v3842, 4294901760
    %v4452 = vsub.f32 %v3842, %v4451
    %v4453 = vand.u32 %v4452, 4294901760
    %4454 = vmatpush1.msra.mxu0 %v4453
    %4455 = vmatprep.subr.mxu0 0.0
    %v4456 = vand.u32 %v3841, 4294901760
    %v4457 = vsub.f32 %v3841, %v4456
    %v4458 = vand.u32 %v4457, 4294901760
    %4459 = vmatpush1.msra.mxu0 %v4458
    %4460 = vmatprep.subr.mxu0 0.0
    %v4461 = vand.u32 %v3840, 4294901760
    %v4462 = vsub.f32 %v3840, %v4461
    %v4463 = vand.u32 %v4462, 4294901760
    %4464 = vmatpush1.msra.mxu0 %v4463
    %4465 = vmatprep.subr.mxu0 0.0
    %v4466 = vand.u32 %v3839, 4294901760
    %v4467 = vsub.f32 %v3839, %v4466
    %v4468 = vand.u32 %v4467, 4294901760
    %4469 = vmatpush1.msra.mxu0 %v4468
    %4470 = vmatprep.subr.mxu0 0.0
    %4471 = vmatpush2.msra.mxu0 0.0
    %4472 = vmatprep.subr.mxu0 0.0
    %4473 = vmatpush2.msra.mxu0 0.0
    %4474 = vmatprep.subr.mxu0 0.0
    %4475 = vmatpush2.msra.mxu0 0.0
    %4476 = vmatprep.subr.mxu0 0.0
    %4477 = vmatpush2.msra.mxu0 0.0
    %4478 = vmatprep.subr.mxu0 0.0
    %4479 = vmatpush2.msra.mxu0 0.0
    %4480 = vmatprep.subr.mxu0 0.0
    %4481 = vmatpush2.msra.mxu0 0.0
    %4482 = vmatprep.subr.mxu0 0.0
    %4483 = vmatpush2.msra.mxu0 0.0
    %4484 = vmatprep.subr.mxu0 0.0
    %4485 = vmatpush2.msra.mxu0 0.0
    %4486 = vmatprep.subr.mxu0 0.0
    %4487 = vmatpush2.msra.mxu0 0.0
    %4488 = vmatprep.subr.mxu0 0.0
    %4489 = vmatpush2.msra.mxu0 0.0
    %4490 = vmatprep.subr.mxu0 0.0
    %4491 = vmatpush2.msra.mxu0 0.0
    %4492 = vmatprep.subr.mxu0 0.0
    %4493 = vmatpush2.msra.mxu0 0.0
    %4494 = vmatprep.subr.mxu0 0.0
    %4495 = vmatpush2.msra.mxu0 0.0
    %4496 = vmatprep.subr.mxu0 0.0
    %4497 = vmatpush2.msra.mxu0 0.0
    %4498 = vmatprep.subr.mxu0 0.0
    %4499 = vmatpush2.msra.mxu0 0.0
    %4500 = vmatprep.subr.mxu0 0.0
    %4501 = vmatpush2.msra.mxu0 0.0
    %4502 = vmatprep.mubr.f32.mxu0 0.0
    %v4503 = vand.u32 %v86, 4294901760
    %4504 = vmatmul.mubr.f32.gmra.mxu0 %v4503
    %v4505 = vpop.f32.mrf.mxu0
    %v4506 = vadd.f32 %v4363, %v4505
    %v4507 = vpop.f32.mrf.mxu0
    %4508 = vmatprep.mubr.f32.mxu0 0.0
    %v4509 = vand.u32 %v89, 4294901760
    %4510 = vmatmul.mubr.f32.gmra.mxu0 %v4509
    %v4511 = vpop.f32.mrf.mxu0
    %v4512 = vadd.f32 %v4371, %v4511
    %v4513 = vpop.f32.mrf.mxu0
    %4514 = vmatprep.mubr.f32.mxu0 0.0
    %v4515 = vand.u32 %v92, 4294901760
    %4516 = vmatmul.mubr.f32.gmra.mxu0 %v4515
    %v4517 = vpop.f32.mrf.mxu0
    %v4518 = vadd.f32 %v4379, %v4517
    %v4519 = vpop.f32.mrf.mxu0
    %4520 = vmatprep.mubr.f32.mxu0 0.0
    %v4521 = vand.u32 %v95, 4294901760
    %4522 = vmatmul.mubr.f32.gmra.mxu0 %v4521
    %v4523 = vpop.f32.mrf.mxu0
    %v4524 = vadd.f32 %v4387, %v4523
    %v4525 = vpop.f32.mrf.mxu0
    %4526 = vdwg.mxu0
    %4527 = vmatprep.subr.mxu0 0.0
    %v4528 = vand.u32 %v3854, 4294901760
    %4529 = vmatpush1.msra.mxu0 %v4528
    %4530 = vmatprep.subr.mxu0 0.0
    %v4531 = vand.u32 %v3853, 4294901760
    %4532 = vmatpush1.msra.mxu0 %v4531
    %4533 = vmatprep.subr.mxu0 0.0
    %v4534 = vand.u32 %v3852, 4294901760
    %4535 = vmatpush1.msra.mxu0 %v4534
    %4536 = vmatprep.subr.mxu0 0.0
    %v4537 = vand.u32 %v3851, 4294901760
    %4538 = vmatpush1.msra.mxu0 %v4537
    %4539 = vmatprep.subr.mxu0 0.0
    %v4540 = vand.u32 %v3850, 4294901760
    %4541 = vmatpush1.msra.mxu0 %v4540
    %4542 = vmatprep.subr.mxu0 0.0
    %v4543 = vand.u32 %v3849, 4294901760
    %4544 = vmatpush1.msra.mxu0 %v4543
    %4545 = vmatprep.subr.mxu0 0.0
    %v4546 = vand.u32 %v3848, 4294901760
    %4547 = vmatpush1.msra.mxu0 %v4546
    %4548 = vmatprep.subr.mxu0 0.0
    %v4549 = vand.u32 %v3847, 4294901760
    %4550 = vmatpush1.msra.mxu0 %v4549
    %4551 = vmatprep.subr.mxu0 0.0
    %v4552 = vand.u32 %v3846, 4294901760
    %4553 = vmatpush1.msra.mxu0 %v4552
    %4554 = vmatprep.subr.mxu0 0.0
    %v4555 = vand.u32 %v3845, 4294901760
    %4556 = vmatpush1.msra.mxu0 %v4555
    %4557 = vmatprep.subr.mxu0 0.0
    %v4558 = vand.u32 %v3844, 4294901760
    %4559 = vmatpush1.msra.mxu0 %v4558
    %4560 = vmatprep.subr.mxu0 0.0
    %v4561 = vand.u32 %v3843, 4294901760
    %4562 = vmatpush1.msra.mxu0 %v4561
    %4563 = vmatprep.subr.mxu0 0.0
    %v4564 = vand.u32 %v3842, 4294901760
    %4565 = vmatpush1.msra.mxu0 %v4564
    %4566 = vmatprep.subr.mxu0 0.0
    %v4567 = vand.u32 %v3841, 4294901760
    %4568 = vmatpush1.msra.mxu0 %v4567
    %4569 = vmatprep.subr.mxu0 0.0
    %v4570 = vand.u32 %v3840, 4294901760
    %4571 = vmatpush1.msra.mxu0 %v4570
    %4572 = vmatprep.subr.mxu0 0.0
    %v4573 = vand.u32 %v3839, 4294901760
    %4574 = vmatpush1.msra.mxu0 %v4573
    %4575 = vmatprep.subr.mxu0 0.0
    %4576 = vmatpush2.msra.mxu0 0.0
    %4577 = vmatprep.subr.mxu0 0.0
    %4578 = vmatpush2.msra.mxu0 0.0
    %4579 = vmatprep.subr.mxu0 0.0
    %4580 = vmatpush2.msra.mxu0 0.0
    %4581 = vmatprep.subr.mxu0 0.0
    %4582 = vmatpush2.msra.mxu0 0.0
    %4583 = vmatprep.subr.mxu0 0.0
    %4584 = vmatpush2.msra.mxu0 0.0
    %4585 = vmatprep.subr.mxu0 0.0
    %4586 = vmatpush2.msra.mxu0 0.0
    %4587 = vmatprep.subr.mxu0 0.0
    %4588 = vmatpush2.msra.mxu0 0.0
    %4589 = vmatprep.subr.mxu0 0.0
    %4590 = vmatpush2.msra.mxu0 0.0
    %4591 = vmatprep.subr.mxu0 0.0
    %4592 = vmatpush2.msra.mxu0 0.0
    %4593 = vmatprep.subr.mxu0 0.0
    %4594 = vmatpush2.msra.mxu0 0.0
    %4595 = vmatprep.subr.mxu0 0.0
    %4596 = vmatpush2.msra.mxu0 0.0
    %4597 = vmatprep.subr.mxu0 0.0
    %4598 = vmatpush2.msra.mxu0 0.0
    %4599 = vmatprep.subr.mxu0 0.0
    %4600 = vmatpush2.msra.mxu0 0.0
    %4601 = vmatprep.subr.mxu0 0.0
    %4602 = vmatpush2.msra.mxu0 0.0
    %4603 = vmatprep.subr.mxu0 0.0
    %4604 = vmatpush2.msra.mxu0 0.0
    %4605 = vmatprep.subr.mxu0 0.0
    %4606 = vmatpush2.msra.mxu0 0.0
    %4607 = vmatprep.mubr.f32.mxu0 0.0
    %v4608 = vand.u32 %v86, 4294901760
    %4609 = vmatmul.mubr.f32.gmra.mxu0 %v4608
    %v4610 = vpop.f32.mrf.mxu0
    %v4611 = vadd.f32 %v4506, %v4610
    %v4612 = vpop.f32.mrf.mxu0
    %4613 = vmatprep.mubr.f32.mxu0 0.0
    %v4614 = vand.u32 %v89, 4294901760
    %4615 = vmatmul.mubr.f32.gmra.mxu0 %v4614
    %v4616 = vpop.f32.mrf.mxu0
    %v4617 = vadd.f32 %v4512, %v4616
    %v4618 = vpop.f32.mrf.mxu0
    %4619 = vmatprep.mubr.f32.mxu0 0.0
    %v4620 = vand.u32 %v92, 4294901760
    %4621 = vmatmul.mubr.f32.gmra.mxu0 %v4620
    %v4622 = vpop.f32.mrf.mxu0
    %v4623 = vadd.f32 %v4518, %v4622
    %v4624 = vpop.f32.mrf.mxu0
    %4625 = vmatprep.mubr.f32.mxu0 0.0
    %v4626 = vand.u32 %v95, 4294901760
    %4627 = vmatmul.mubr.f32.gmra.mxu0 %v4626
    %v4628 = vpop.f32.mrf.mxu0
    %v4629 = vadd.f32 %v4524, %v4628
    %v4630 = vpop.f32.mrf.mxu0
    %4631 = vdwg.mxu0
    %v4632 = vadd.f32 %v3818, %v4611
    %v4633 = vadd.f32 %v3824, %v4617
    %v4634 = vadd.f32 %v3830, %v4623
    %v4635 = vadd.f32 %v3836, %v4629
    %v4636 = vmax.f32 %v4632, 0.0
    %v4637 = vmax.f32 %v4633, 0.0
    %v4638 = vmax.f32 %v4634, 0.0
    %v4639 = vmax.f32 %v4635, 0.0
    %4640 = vst [vmem:[#allocation10] sm:$0xff] %v4636
    %4641 = vst [vmem:[#allocation10 + $0x8] sm:$0xff] %v4637
    %4642 = vst [vmem:[#allocation10 + $0x10] sm:$0xff] %v4638
    %4643 = vst [vmem:[#allocation10 + $0x18] sm:$0xff] %v4639
    // Predicated region
    $region46: #{tpu_custom_call.1} parent=1 // pred_check
      _
    $region47: #{tpu_custom_call.1} parent=1 // pred_check_branch
      %4645 = sbr.rel (0) target = $region49
    $region48: #{tpu_custom_call.1} parent=1 // pred_region
      %s4647 = ssub.s32 512, 512
      %4648 = vsyncadd [#allocation4], %s4647
      %s4649 = sshll.u32 [#allocation10], 4
      %s4650 = int_to_ptr.vmem [resolvable:$true] %s4649
      %4655 = dma.vmem_to_hbm [thread:$0]  %s4650, 512, %s7, [#allocation4], 128, 128, 8
    $region49: #{tpu_custom_call.1} parent=1 // pred_fallthru
      _
    // Predicated region
    $region50: #{tpu_custom_call.1} parent=1 // pred_check
      _
    $region51: #{tpu_custom_call.1} parent=1 // pred_check_branch
      %4657 = sbr.rel (0) target = $region53
    $region52: #{tpu_custom_call.1} parent=1 // pred_region
      %4658 = dma.done [#allocation4], 512
    $region53: #{tpu_custom_call.1} parent=1 // pred_fallthru
      _
    %4659 = vsyncpa [#allocation3], 1
    %4660 = vsyncpa [#allocation6], 1
    %4661 = vsyncpa [#allocation9], 1
    %4662 = vsyncpa [#allocation4], 1

</llo_original>
